<compile_context>
chip_gen: v5e
topology: v5e:2x2
jax: 0.10.0
libtpu: 0.0.40
codegen_flags: <defaults>
</compile_context>

<pallas_src>
import functools

import jax
import jax.numpy as jnp
from jax.experimental import pallas as pl
from jax.experimental.pallas import tpu as pltpu


def _round_up(n, m):
    return ((n + m - 1) // m) * m


# ---------------------------------------------------------------------------
# Pallas kernel: full forward pass for one batch tile
# ---------------------------------------------------------------------------
def _attack_kernel(
    x1_ref, l_ref,
    # features branch: Linear(128p,1024) ReLU Linear(1024,512) ReLU Linear(512,64) ReLU
    wf1_ref, bf1_ref, wf2_ref, bf2_ref, wf3_ref, bf3_ref,
    # labels branch: Linear(128p,128) ReLU Linear(128,64) ReLU
    wl1_ref, bl1_ref, wl2_ref, bl2_ref,
    # combine trunk: Linear(128,512) ... Linear(64,1) + Sigmoid
    wc1_ref, bc1_ref, wc2_ref, bc2_ref, wc3_ref, bc3_ref,
    wc4_ref, bc4_ref, wc5_ref, bc5_ref,
    out_ref,
):
    def lin(x, w_ref, b_ref):
        # bf16 MXU matmul, f32 accumulation, f32 bias add.
        return (
            jnp.dot(x.astype(jnp.bfloat16), w_ref[...],
                    preferred_element_type=jnp.float32)
            + b_ref[...]
        )

    def lin_relu(x, w_ref, b_ref):
        return jnp.maximum(lin(x, w_ref, b_ref), 0.0)

    # features branch
    h = lin_relu(x1_ref[...], wf1_ref, bf1_ref)
    h = lin_relu(h, wf2_ref, bf2_ref)
    out_x1 = lin_relu(h, wf3_ref, bf3_ref)          # [TB, 64] f32

    # labels branch
    g = lin_relu(l_ref[...], wl1_ref, bl1_ref)
    out_l = lin_relu(g, wl2_ref, bl2_ref)           # [TB, 64] f32

    # combine trunk:
    # cat((out_x1, out_l), 1) @ Wc1 == out_x1 @ Wc1[:64] + out_l @ Wc1[64:]
    # (static sublane-aligned slices of the single resident wc1 block)
    c = jnp.maximum(
        jnp.dot(out_x1.astype(jnp.bfloat16), wc1_ref[0:64, :],
                preferred_element_type=jnp.float32)
        + jnp.dot(out_l.astype(jnp.bfloat16), wc1_ref[64:128, :],
                  preferred_element_type=jnp.float32)
        + bc1_ref[...],
        0.0,
    )
    c = lin_relu(c, wc2_ref, bc2_ref)
    c = lin_relu(c, wc3_ref, bc3_ref)
    c = lin_relu(c, wc4_ref, bc4_ref)               # [TB, 64] f32

    # Final 64->1 layer on the VPU/XLU (elementwise mul + lane reduce) instead
    # of an N=1 MXU dot, fused with the sigmoid epilogue.
    logit = jnp.sum(c * wc5_ref[...], axis=-1, keepdims=True) + bc5_ref[...]
    out_ref[...] = jax.nn.sigmoid(logit).astype(out_ref.dtype)


# ---------------------------------------------------------------------------
# Parameter construction (mirrors nn.init.normal_(std=0.01), biases = 0).
# Weights are stored as [in, out] (PyTorch W.T), so each layer is y = x @ W + b.
# ---------------------------------------------------------------------------
def init_params(num_classes, key):
    layer_dims = {
        "wf1": (100, 1024), "wf2": (1024, 512), "wf3": (512, 64),
        "wl1": (num_classes, 128), "wl2": (128, 64),
        "wc1": (128, 512), "wc2": (512, 256), "wc3": (256, 128),
        "wc4": (128, 64), "wc5": (64, 1),
    }
    params = {}
    keys = jax.random.split(key, len(layer_dims))
    for k, (name, shape) in zip(keys, layer_dims.items()):
        params[name] = 0.01 * jax.random.normal(k, shape, dtype=jnp.float32)
        params["b" + name[1:]] = jnp.zeros((1, shape[1]), dtype=jnp.float32)
    return params


def prepare_params(params, num_classes):
    """One-time prep: pad ragged input dims, cast weights to bf16, transpose wc5."""
    fpad = _round_up(100, 128)           # 128
    cpad = _round_up(num_classes, 128)   # 128 for num_classes <= 128
    prep = {}
    prep["wf1"] = jnp.pad(params["wf1"], ((0, fpad - 100), (0, 0))).astype(jnp.bfloat16)
    prep["wl1"] = jnp.pad(params["wl1"], ((0, cpad - num_classes), (0, 0))).astype(jnp.bfloat16)
    for name in ("wf2", "wf3", "wl2", "wc1", "wc2", "wc3", "wc4"):
        prep[name] = params[name].astype(jnp.bfloat16)
    # Final layer weight kept f32 and transposed to a (1, 64) row for the VPU path.
    prep["wc5"] = params["wc5"].T.astype(jnp.float32)
    for name, v in params.items():
        if name.startswith("b"):
            prep[name] = v.astype(jnp.float32)
    return prep


# ---------------------------------------------------------------------------
# Wrapper calling pallas_call with a batch grid
# ---------------------------------------------------------------------------
@functools.partial(jax.jit, static_argnames=("block_batch",))
def inference_attack_forward(x1, l, prep, *, block_batch=256):
    batch = x1.shape[0]
    fpad = prep["wf1"].shape[0]
    cpad = prep["wl1"].shape[0]

    # Zero-pad ragged feature dims to lane multiples; cast activations to bf16 once.
    x1p = jnp.pad(x1, ((0, 0), (0, fpad - x1.shape[1]))).astype(jnp.bfloat16)
    lp = jnp.pad(l, ((0, 0), (0, cpad - l.shape[1]))).astype(jnp.bfloat16)

    tb = min(block_batch, batch)
    grid = (pl.cdiv(batch, tb),)

    def act_spec(feat):
        return pl.BlockSpec((tb, feat), lambda i: (i, 0))

    def resident_spec(arr):
        # Whole array, constant block index -> fetched once, resident in VMEM.
        return pl.BlockSpec(arr.shape, lambda i: (0, 0))

    weight_ops = (
        prep["wf1"], prep["bf1"], prep["wf2"], prep["bf2"],
        prep["wf3"], prep["bf3"],
        prep["wl1"], prep["bl1"], prep["wl2"], prep["bl2"],
        prep["wc1"], prep["bc1"], prep["wc2"], prep["bc2"],
        prep["wc3"], prep["bc3"], prep["wc4"], prep["bc4"],
        prep["wc5"], prep["bc5"],
    )

    in_specs = [act_spec(fpad), act_spec(cpad)] + [resident_spec(w) for w in weight_ops]
    out_specs = pl.BlockSpec((tb, 1), lambda i: (i, 0))
    # TODO(synk): for very large serving batches, a lane-dense (1, B) output slab
    # would replace the masked (TB, 1) stores; negligible at these sizes.

    return pl.pallas_call(
        _attack_kernel,
        out_shape=jax.ShapeDtypeStruct((batch, 1), jnp.float32),
        grid=grid,
        in_specs=in_specs,
        out_specs=out_specs,
        compiler_params=pltpu.CompilerParams(
            dimension_semantics=("parallel",),   # v7x: shard batch tiles across TCs
            vmem_limit_bytes=32 << 20,           # ~2 MB weights + tiles; ample headroom
        ),
    )(x1p, lp, *weight_ops)


# ---------------------------------------------------------------------------
# Pure-JAX references for sanity checks
# ---------------------------------------------------------------------------
def reference_forward_f32(x1, l, params):
    def lr(x, w, b):
        return jnp.maximum(x @ w + b, 0.0)

    h = lr(lr(lr(x1, params["wf1"], params["bf1"]), params["wf2"], params["bf2"]),
           params["wf3"], params["bf3"])
    g = lr(lr(l, params["wl1"], params["bl1"]), params["wl2"], params["bl2"])
    c = jnp.concatenate([h, g], axis=1)
    c = lr(c, params["wc1"], params["bc1"])
    c = lr(c, params["wc2"], params["bc2"])
    c = lr(c, params["wc3"], params["bc3"])
    c = lr(c, params["wc4"], params["bc4"])
    return jax.nn.sigmoid(c @ params["wc5"] + params["bc5"])


def reference_forward_bf16(x1, l, prep):
    """Same math as the kernel (bf16 inputs to each dot, f32 accumulation)."""
    fpad = prep["wf1"].shape[0]
    cpad = prep["wl1"].shape[0]
    x1p = jnp.pad(x1, ((0, 0), (0, fpad - x1.shape[1]))).astype(jnp.bfloat16)
    lp = jnp.pad(l, ((0, 0), (0, cpad - l.shape[1]))).astype(jnp.bfloat16)

    def lr(x, w, b):
        y = jnp.dot(x.astype(jnp.bfloat16), w, preferred_element_type=jnp.float32) + b
        return jnp.maximum(y, 0.0)

    h = lr(lr(lr(x1p, prep["wf1"], prep["bf1"]), prep["wf2"], prep["bf2"]),
           prep["wf3"], prep["bf3"])
    g = lr(lr(lp, prep["wl1"], prep["bl1"]), prep["wl2"], prep["bl2"])
    c = jnp.maximum(
        jnp.dot(h.astype(jnp.bfloat16), prep["wc1"][:64],
                preferred_element_type=jnp.float32)
        + jnp.dot(g.astype(jnp.bfloat16), prep["wc1"][64:],
                  preferred_element_type=jnp.float32)
        + prep["bc1"],
        0.0,
    )
    c = lr(c, prep["wc2"], prep["bc2"])
    c = lr(c, prep["wc3"], prep["bc3"])
    c = lr(c, prep["wc4"], prep["bc4"])
    logit = jnp.sum(c * prep["wc5"], axis=-1, keepdims=True) + prep["bc5"]
    return jax.nn.sigmoid(logit)


if __name__ == "__main__":
    num_classes = 10
    batch = 8

    key = jax.random.PRNGKey(0)
    k_params, k_x, k_l = jax.random.split(key, 3)

    params = init_params(num_classes, k_params)
    prep = prepare_params(params, num_classes)

    # x1: model-confidence-like features of width 100; l: one-hot labels.
    x1 = jax.random.normal(k_x, (batch, 100), dtype=jnp.float32)
    l = jax.nn.one_hot(
        jax.random.randint(k_l, (batch,), 0, num_classes), num_classes
    ).astype(jnp.float32)

    out = inference_attack_forward(x1, l, prep)
    out = jax.block_until_ready(out)

    assert out.shape == (batch, 1), out.shape
    ref_bf16 = reference_forward_bf16(x1, l, prep)
    ref_f32 = reference_forward_f32(x1, l, params)
    assert jnp.allclose(out, ref_bf16, atol=1e-4, rtol=1e-4), (out, ref_bf16)
    assert jnp.allclose(out, ref_f32, atol=1e-2), (out, ref_f32)

    print("KERNEL_OK")
</pallas_src>

<mosaic_0001>
module attributes {stable_mosaic.version = 11 : i64} {
  func.func @_attack_kernel(%arg0: i32, %arg1: memref<8x128xbf16, #tpu.memory_space<vmem>>, %arg2: memref<8x128xbf16, #tpu.memory_space<vmem>>, %arg3: memref<128x1024xbf16, #tpu.memory_space<vmem>>, %arg4: memref<1x1024xf32, #tpu.memory_space<vmem>>, %arg5: memref<1024x512xbf16, #tpu.memory_space<vmem>>, %arg6: memref<1x512xf32, #tpu.memory_space<vmem>>, %arg7: memref<512x64xbf16, #tpu.memory_space<vmem>>, %arg8: memref<1x64xf32, #tpu.memory_space<vmem>>, %arg9: memref<128x128xbf16, #tpu.memory_space<vmem>>, %arg10: memref<1x128xf32, #tpu.memory_space<vmem>>, %arg11: memref<128x64xbf16, #tpu.memory_space<vmem>>, %arg12: memref<1x64xf32, #tpu.memory_space<vmem>>, %arg13: memref<128x512xbf16, #tpu.memory_space<vmem>>, %arg14: memref<1x512xf32, #tpu.memory_space<vmem>>, %arg15: memref<512x256xbf16, #tpu.memory_space<vmem>>, %arg16: memref<1x256xf32, #tpu.memory_space<vmem>>, %arg17: memref<256x128xbf16, #tpu.memory_space<vmem>>, %arg18: memref<1x128xf32, #tpu.memory_space<vmem>>, %arg19: memref<128x64xbf16, #tpu.memory_space<vmem>>, %arg20: memref<1x64xf32, #tpu.memory_space<vmem>>, %arg21: memref<1x64xf32, #tpu.memory_space<vmem>>, %arg22: memref<1x1xf32, #tpu.memory_space<vmem>>, %arg23: memref<8x1xf32, #tpu.memory_space<vmem>>) attributes {dimension_semantics = [#tpu.dimension_semantics<parallel>], iteration_bounds = array<i64: 1>, scalar_prefetch = 0 : i64, scratch_operands = 0 : i64, tpu.core_type = #tpu.core_type<tc>, window_params = [{transform_indices = @transform_0, window_bounds = array<i64: 8, 128>}, {transform_indices = @transform_1, window_bounds = array<i64: 8, 128>}, {pipeline_mode = #tpu.pipeline_mode<synchronous>, transform_indices = @transform_2, window_bounds = array<i64: 128, 1024>}, {pipeline_mode = #tpu.pipeline_mode<synchronous>, transform_indices = @transform_3, window_bounds = array<i64: 1, 1024>}, {pipeline_mode = #tpu.pipeline_mode<synchronous>, transform_indices = @transform_4, window_bounds = array<i64: 1024, 512>}, {pipeline_mode = #tpu.pipeline_mode<synchronous>, transform_indices = @transform_5, window_bounds = array<i64: 1, 512>}, {pipeline_mode = #tpu.pipeline_mode<synchronous>, transform_indices = @transform_6, window_bounds = array<i64: 512, 64>}, {pipeline_mode = #tpu.pipeline_mode<synchronous>, transform_indices = @transform_7, window_bounds = array<i64: 1, 64>}, {pipeline_mode = #tpu.pipeline_mode<synchronous>, transform_indices = @transform_8, window_bounds = array<i64: 128, 128>}, {pipeline_mode = #tpu.pipeline_mode<synchronous>, transform_indices = @transform_9, window_bounds = array<i64: 1, 128>}, {pipeline_mode = #tpu.pipeline_mode<synchronous>, transform_indices = @transform_10, window_bounds = array<i64: 128, 64>}, {pipeline_mode = #tpu.pipeline_mode<synchronous>, transform_indices = @transform_11, window_bounds = array<i64: 1, 64>}, {pipeline_mode = #tpu.pipeline_mode<synchronous>, transform_indices = @transform_12, window_bounds = array<i64: 128, 512>}, {pipeline_mode = #tpu.pipeline_mode<synchronous>, transform_indices = @transform_13, window_bounds = array<i64: 1, 512>}, {pipeline_mode = #tpu.pipeline_mode<synchronous>, transform_indices = @transform_14, window_bounds = array<i64: 512, 256>}, {pipeline_mode = #tpu.pipeline_mode<synchronous>, transform_indices = @transform_15, window_bounds = array<i64: 1, 256>}, {pipeline_mode = #tpu.pipeline_mode<synchronous>, transform_indices = @transform_16, window_bounds = array<i64: 256, 128>}, {pipeline_mode = #tpu.pipeline_mode<synchronous>, transform_indices = @transform_17, window_bounds = array<i64: 1, 128>}, {pipeline_mode = #tpu.pipeline_mode<synchronous>, transform_indices = @transform_18, window_bounds = array<i64: 128, 64>}, {pipeline_mode = #tpu.pipeline_mode<synchronous>, transform_indices = @transform_19, window_bounds = array<i64: 1, 64>}, {pipeline_mode = #tpu.pipeline_mode<synchronous>, transform_indices = @transform_20, window_bounds = array<i64: 1, 64>}, {pipeline_mode = #tpu.pipeline_mode<synchronous>, transform_indices = @transform_21, window_bounds = array<i64: 1, 1>}, {transform_indices = @transform_22, window_bounds = array<i64: 8, 1>}]} {
    %c0 = arith.constant 0 : index
    %c0_0 = arith.constant 0 : index
    %0 = vector.load %arg1[%c0, %c0_0] : memref<8x128xbf16, #tpu.memory_space<vmem>>, vector<8x128xbf16>
    %c0_1 = arith.constant 0 : index
    %c0_2 = arith.constant 0 : index
    %1 = vector.load %arg3[%c0_1, %c0_2] : memref<128x1024xbf16, #tpu.memory_space<vmem>>, vector<128x1024xbf16>
    %cst = arith.constant dense<0.000000e+00> : vector<8x1024xf32>
    %2 = tpu.matmul %0, %1, %cst {dimension_numbers = #tpu.dot_dimension_numbers<[1], [0], [0], [1], [0, 0, 1, 1], [], []>} : vector<8x128xbf16>, vector<128x1024xbf16>, vector<8x1024xf32> -> vector<8x1024xf32>
    %c0_3 = arith.constant 0 : index
    %c0_4 = arith.constant 0 : index
    %3 = vector.load %arg4[%c0_3, %c0_4] : memref<1x1024xf32, #tpu.memory_space<vmem>>, vector<1x1024xf32>
    %4 = vector.broadcast %3 : vector<1x1024xf32> to vector<8x1024xf32>
    %5 = arith.addf %2, %4 : vector<8x1024xf32>
    %cst_5 = arith.constant 0.000000e+00 : f32
    %6 = vector.broadcast %cst_5 : f32 to vector<8x1024xf32>
    %7 = arith.maximumf %5, %6 : vector<8x1024xf32>
    %8 = arith.truncf %7 : vector<8x1024xf32> to vector<8x1024xbf16>
    %c0_6 = arith.constant 0 : index
    %c0_7 = arith.constant 0 : index
    %9 = vector.load %arg5[%c0_6, %c0_7] : memref<1024x512xbf16, #tpu.memory_space<vmem>>, vector<1024x512xbf16>
    %cst_8 = arith.constant dense<0.000000e+00> : vector<8x512xf32>
    %10 = tpu.matmul %8, %9, %cst_8 {dimension_numbers = #tpu.dot_dimension_numbers<[1], [0], [0], [1], [0, 0, 1, 1], [], []>} : vector<8x1024xbf16>, vector<1024x512xbf16>, vector<8x512xf32> -> vector<8x512xf32>
    %c0_9 = arith.constant 0 : index
    %c0_10 = arith.constant 0 : index
    %11 = vector.load %arg6[%c0_9, %c0_10] : memref<1x512xf32, #tpu.memory_space<vmem>>, vector<1x512xf32>
    %12 = vector.broadcast %11 : vector<1x512xf32> to vector<8x512xf32>
    %13 = arith.addf %10, %12 : vector<8x512xf32>
    %cst_11 = arith.constant 0.000000e+00 : f32
    %14 = vector.broadcast %cst_11 : f32 to vector<8x512xf32>
    %15 = arith.maximumf %13, %14 : vector<8x512xf32>
    %16 = arith.truncf %15 : vector<8x512xf32> to vector<8x512xbf16>
    %c0_12 = arith.constant 0 : index
    %c0_13 = arith.constant 0 : index
    %17 = vector.load %arg7[%c0_12, %c0_13] : memref<512x64xbf16, #tpu.memory_space<vmem>>, vector<512x64xbf16>
    %cst_14 = arith.constant dense<0.000000e+00> : vector<8x64xf32>
    %18 = tpu.matmul %16, %17, %cst_14 {dimension_numbers = #tpu.dot_dimension_numbers<[1], [0], [0], [1], [0, 0, 1, 1], [], []>} : vector<8x512xbf16>, vector<512x64xbf16>, vector<8x64xf32> -> vector<8x64xf32>
    %c0_15 = arith.constant 0 : index
    %c0_16 = arith.constant 0 : index
    %19 = vector.load %arg8[%c0_15, %c0_16] : memref<1x64xf32, #tpu.memory_space<vmem>>, vector<1x64xf32>
    %20 = vector.broadcast %19 : vector<1x64xf32> to vector<8x64xf32>
    %21 = arith.addf %18, %20 : vector<8x64xf32>
    %cst_17 = arith.constant 0.000000e+00 : f32
    %22 = vector.broadcast %cst_17 : f32 to vector<8x64xf32>
    %23 = arith.maximumf %21, %22 : vector<8x64xf32>
    %c0_18 = arith.constant 0 : index
    %c0_19 = arith.constant 0 : index
    %24 = vector.load %arg2[%c0_18, %c0_19] : memref<8x128xbf16, #tpu.memory_space<vmem>>, vector<8x128xbf16>
    %c0_20 = arith.constant 0 : index
    %c0_21 = arith.constant 0 : index
    %25 = vector.load %arg9[%c0_20, %c0_21] : memref<128x128xbf16, #tpu.memory_space<vmem>>, vector<128x128xbf16>
    %cst_22 = arith.constant dense<0.000000e+00> : vector<8x128xf32>
    %26 = tpu.matmul %24, %25, %cst_22 {dimension_numbers = #tpu.dot_dimension_numbers<[1], [0], [0], [1], [0, 0, 1, 1], [], []>} : vector<8x128xbf16>, vector<128x128xbf16>, vector<8x128xf32> -> vector<8x128xf32>
    %c0_23 = arith.constant 0 : index
    %c0_24 = arith.constant 0 : index
    %27 = vector.load %arg10[%c0_23, %c0_24] : memref<1x128xf32, #tpu.memory_space<vmem>>, vector<1x128xf32>
    %28 = vector.broadcast %27 : vector<1x128xf32> to vector<8x128xf32>
    %29 = arith.addf %26, %28 : vector<8x128xf32>
    %cst_25 = arith.constant 0.000000e+00 : f32
    %30 = vector.broadcast %cst_25 : f32 to vector<8x128xf32>
    %31 = arith.maximumf %29, %30 : vector<8x128xf32>
    %32 = arith.truncf %31 : vector<8x128xf32> to vector<8x128xbf16>
    %c0_26 = arith.constant 0 : index
    %c0_27 = arith.constant 0 : index
    %33 = vector.load %arg11[%c0_26, %c0_27] : memref<128x64xbf16, #tpu.memory_space<vmem>>, vector<128x64xbf16>
    %cst_28 = arith.constant dense<0.000000e+00> : vector<8x64xf32>
    %34 = tpu.matmul %32, %33, %cst_28 {dimension_numbers = #tpu.dot_dimension_numbers<[1], [0], [0], [1], [0, 0, 1, 1], [], []>} : vector<8x128xbf16>, vector<128x64xbf16>, vector<8x64xf32> -> vector<8x64xf32>
    %c0_29 = arith.constant 0 : index
    %c0_30 = arith.constant 0 : index
    %35 = vector.load %arg12[%c0_29, %c0_30] : memref<1x64xf32, #tpu.memory_space<vmem>>, vector<1x64xf32>
    %36 = vector.broadcast %35 : vector<1x64xf32> to vector<8x64xf32>
    %37 = arith.addf %34, %36 : vector<8x64xf32>
    %cst_31 = arith.constant 0.000000e+00 : f32
    %38 = vector.broadcast %cst_31 : f32 to vector<8x64xf32>
    %39 = arith.maximumf %37, %38 : vector<8x64xf32>
    %40 = arith.truncf %23 : vector<8x64xf32> to vector<8x64xbf16>
    %c0_32 = arith.constant 0 : index
    %c0_33 = arith.constant 0 : index
    %41 = vector.load %arg13[%c0_32, %c0_33] : memref<128x512xbf16, #tpu.memory_space<vmem>>, vector<64x512xbf16>
    %cst_34 = arith.constant dense<0.000000e+00> : vector<8x512xf32>
    %42 = tpu.matmul %40, %41, %cst_34 {dimension_numbers = #tpu.dot_dimension_numbers<[1], [0], [0], [1], [0, 0, 1, 1], [], []>} : vector<8x64xbf16>, vector<64x512xbf16>, vector<8x512xf32> -> vector<8x512xf32>
    %43 = arith.truncf %39 : vector<8x64xf32> to vector<8x64xbf16>
    %c64 = arith.constant 64 : index
    %c0_35 = arith.constant 0 : index
    %44 = vector.load %arg13[%c64, %c0_35] : memref<128x512xbf16, #tpu.memory_space<vmem>>, vector<64x512xbf16>
    %cst_36 = arith.constant dense<0.000000e+00> : vector<8x512xf32>
    %45 = tpu.matmul %43, %44, %cst_36 {dimension_numbers = #tpu.dot_dimension_numbers<[1], [0], [0], [1], [0, 0, 1, 1], [], []>} : vector<8x64xbf16>, vector<64x512xbf16>, vector<8x512xf32> -> vector<8x512xf32>
    %46 = arith.addf %42, %45 : vector<8x512xf32>
    %c0_37 = arith.constant 0 : index
    %c0_38 = arith.constant 0 : index
    %47 = vector.load %arg14[%c0_37, %c0_38] : memref<1x512xf32, #tpu.memory_space<vmem>>, vector<1x512xf32>
    %48 = vector.broadcast %47 : vector<1x512xf32> to vector<8x512xf32>
    %49 = arith.addf %46, %48 : vector<8x512xf32>
    %cst_39 = arith.constant 0.000000e+00 : f32
    %50 = vector.broadcast %cst_39 : f32 to vector<8x512xf32>
    %51 = arith.maximumf %49, %50 : vector<8x512xf32>
    %52 = arith.truncf %51 : vector<8x512xf32> to vector<8x512xbf16>
    %c0_40 = arith.constant 0 : index
    %c0_41 = arith.constant 0 : index
    %53 = vector.load %arg15[%c0_40, %c0_41] : memref<512x256xbf16, #tpu.memory_space<vmem>>, vector<512x256xbf16>
    %cst_42 = arith.constant dense<0.000000e+00> : vector<8x256xf32>
    %54 = tpu.matmul %52, %53, %cst_42 {dimension_numbers = #tpu.dot_dimension_numbers<[1], [0], [0], [1], [0, 0, 1, 1], [], []>} : vector<8x512xbf16>, vector<512x256xbf16>, vector<8x256xf32> -> vector<8x256xf32>
    %c0_43 = arith.constant 0 : index
    %c0_44 = arith.constant 0 : index
    %55 = vector.load %arg16[%c0_43, %c0_44] : memref<1x256xf32, #tpu.memory_space<vmem>>, vector<1x256xf32>
    %56 = vector.broadcast %55 : vector<1x256xf32> to vector<8x256xf32>
    %57 = arith.addf %54, %56 : vector<8x256xf32>
    %cst_45 = arith.constant 0.000000e+00 : f32
    %58 = vector.broadcast %cst_45 : f32 to vector<8x256xf32>
    %59 = arith.maximumf %57, %58 : vector<8x256xf32>
    %60 = arith.truncf %59 : vector<8x256xf32> to vector<8x256xbf16>
    %c0_46 = arith.constant 0 : index
    %c0_47 = arith.constant 0 : index
    %61 = vector.load %arg17[%c0_46, %c0_47] : memref<256x128xbf16, #tpu.memory_space<vmem>>, vector<256x128xbf16>
    %cst_48 = arith.constant dense<0.000000e+00> : vector<8x128xf32>
    %62 = tpu.matmul %60, %61, %cst_48 {dimension_numbers = #tpu.dot_dimension_numbers<[1], [0], [0], [1], [0, 0, 1, 1], [], []>} : vector<8x256xbf16>, vector<256x128xbf16>, vector<8x128xf32> -> vector<8x128xf32>
    %c0_49 = arith.constant 0 : index
    %c0_50 = arith.constant 0 : index
    %63 = vector.load %arg18[%c0_49, %c0_50] : memref<1x128xf32, #tpu.memory_space<vmem>>, vector<1x128xf32>
    %64 = vector.broadcast %63 : vector<1x128xf32> to vector<8x128xf32>
    %65 = arith.addf %62, %64 : vector<8x128xf32>
    %cst_51 = arith.constant 0.000000e+00 : f32
    %66 = vector.broadcast %cst_51 : f32 to vector<8x128xf32>
    %67 = arith.maximumf %65, %66 : vector<8x128xf32>
    %68 = arith.truncf %67 : vector<8x128xf32> to vector<8x128xbf16>
    %c0_52 = arith.constant 0 : index
    %c0_53 = arith.constant 0 : index
    %69 = vector.load %arg19[%c0_52, %c0_53] : memref<128x64xbf16, #tpu.memory_space<vmem>>, vector<128x64xbf16>
    %cst_54 = arith.constant dense<0.000000e+00> : vector<8x64xf32>
    %70 = tpu.matmul %68, %69, %cst_54 {dimension_numbers = #tpu.dot_dimension_numbers<[1], [0], [0], [1], [0, 0, 1, 1], [], []>} : vector<8x128xbf16>, vector<128x64xbf16>, vector<8x64xf32> -> vector<8x64xf32>
    %c0_55 = arith.constant 0 : index
    %c0_56 = arith.constant 0 : index
    %71 = vector.load %arg20[%c0_55, %c0_56] : memref<1x64xf32, #tpu.memory_space<vmem>>, vector<1x64xf32>
    %72 = vector.broadcast %71 : vector<1x64xf32> to vector<8x64xf32>
    %73 = arith.addf %70, %72 : vector<8x64xf32>
    %cst_57 = arith.constant 0.000000e+00 : f32
    %74 = vector.broadcast %cst_57 : f32 to vector<8x64xf32>
    %75 = arith.maximumf %73, %74 : vector<8x64xf32>
    %c0_58 = arith.constant 0 : index
    %c0_59 = arith.constant 0 : index
    %76 = vector.load %arg21[%c0_58, %c0_59] : memref<1x64xf32, #tpu.memory_space<vmem>>, vector<1x64xf32>
    %77 = vector.broadcast %76 : vector<1x64xf32> to vector<8x64xf32>
    %78 = arith.mulf %75, %77 : vector<8x64xf32>
    %cst_60 = arith.constant dense<0.000000e+00> : vector<8xf32>
    %79 = vector.multi_reduction <add>, %78, %cst_60 [1] : vector<8x64xf32> to vector<8xf32>
    %80 = vector.shape_cast %79 : vector<8xf32> to vector<8x1xf32>
    %c0_61 = arith.constant 0 : index
    %c0_62 = arith.constant 0 : index
    %81 = vector.load %arg22[%c0_61, %c0_62] : memref<1x1xf32, #tpu.memory_space<vmem>>, vector<1x1xf32>
    %82 = vector.broadcast %81 : vector<1x1xf32> to vector<8x1xf32>
    %83 = arith.addf %80, %82 : vector<8x1xf32>
    %84 = arith.negf %83 : vector<8x1xf32>
    %85 = math.exp %84 : vector<8x1xf32>
    %cst_63 = arith.constant 1.000000e+00 : f32
    %86 = vector.broadcast %cst_63 : f32 to vector<8x1xf32>
    %87 = arith.addf %86, %85 : vector<8x1xf32>
    %88 = arith.divf %86, %87 : vector<8x1xf32>
    %c0_64 = arith.constant 0 : index
    %c0_65 = arith.constant 0 : index
    %89 = vector.load %arg23[%c0_64, %c0_65] : memref<8x1xf32, #tpu.memory_space<vmem>>, vector<8x1xf32>
    tpu.vector_store %arg23[%c0_64, %c0_65], %88 {strides = array<i32>} : memref<8x1xf32, #tpu.memory_space<vmem>>, vector<8x1xf32>,
    return
  }
  func.func @transform_0(%arg0: i32) -> (i32, i32) {
    %c0_i32 = arith.constant 0 : i32
    %c0_i32_0 = arith.constant 0 : i32
    return %arg0, %c0_i32 : i32, i32
  }
  func.func @transform_1(%arg0: i32) -> (i32, i32) {
    %c0_i32 = arith.constant 0 : i32
    %c0_i32_0 = arith.constant 0 : i32
    return %arg0, %c0_i32 : i32, i32
  }
  func.func @transform_2(%arg0: i32) -> (i32, i32) {
    %c0_i32 = arith.constant 0 : i32
    %c0_i32_0 = arith.constant 0 : i32
    %c0_i32_1 = arith.constant 0 : i32
    return %c0_i32, %c0_i32_0 : i32, i32
  }
  func.func @transform_3(%arg0: i32) -> (i32, i32) {
    %c0_i32 = arith.constant 0 : i32
    %c0_i32_0 = arith.constant 0 : i32
    %c0_i32_1 = arith.constant 0 : i32
    return %c0_i32, %c0_i32_0 : i32, i32
  }
  func.func @transform_4(%arg0: i32) -> (i32, i32) {
    %c0_i32 = arith.constant 0 : i32
    %c0_i32_0 = arith.constant 0 : i32
    %c0_i32_1 = arith.constant 0 : i32
    return %c0_i32, %c0_i32_0 : i32, i32
  }
  func.func @transform_5(%arg0: i32) -> (i32, i32) {
    %c0_i32 = arith.constant 0 : i32
    %c0_i32_0 = arith.constant 0 : i32
    %c0_i32_1 = arith.constant 0 : i32
    return %c0_i32, %c0_i32_0 : i32, i32
  }
  func.func @transform_6(%arg0: i32) -> (i32, i32) {
    %c0_i32 = arith.constant 0 : i32
    %c0_i32_0 = arith.constant 0 : i32
    %c0_i32_1 = arith.constant 0 : i32
    return %c0_i32, %c0_i32_0 : i32, i32
  }
  func.func @transform_7(%arg0: i32) -> (i32, i32) {
    %c0_i32 = arith.constant 0 : i32
    %c0_i32_0 = arith.constant 0 : i32
    %c0_i32_1 = arith.constant 0 : i32
    return %c0_i32, %c0_i32_0 : i32, i32
  }
  func.func @transform_8(%arg0: i32) -> (i32, i32) {
    %c0_i32 = arith.constant 0 : i32
    %c0_i32_0 = arith.constant 0 : i32
    %c0_i32_1 = arith.constant 0 : i32
    return %c0_i32, %c0_i32_0 : i32, i32
  }
  func.func @transform_9(%arg0: i32) -> (i32, i32) {
    %c0_i32 = arith.constant 0 : i32
    %c0_i32_0 = arith.constant 0 : i32
    %c0_i32_1 = arith.constant 0 : i32
    return %c0_i32, %c0_i32_0 : i32, i32
  }
  func.func @transform_10(%arg0: i32) -> (i32, i32) {
    %c0_i32 = arith.constant 0 : i32
    %c0_i32_0 = arith.constant 0 : i32
    %c0_i32_1 = arith.constant 0 : i32
    return %c0_i32, %c0_i32_0 : i32, i32
  }
  func.func @transform_11(%arg0: i32) -> (i32, i32) {
    %c0_i32 = arith.constant 0 : i32
    %c0_i32_0 = arith.constant 0 : i32
    %c0_i32_1 = arith.constant 0 : i32
    return %c0_i32, %c0_i32_0 : i32, i32
  }
  func.func @transform_12(%arg0: i32) -> (i32, i32) {
    %c0_i32 = arith.constant 0 : i32
    %c0_i32_0 = arith.constant 0 : i32
    %c0_i32_1 = arith.constant 0 : i32
    return %c0_i32, %c0_i32_0 : i32, i32
  }
  func.func @transform_13(%arg0: i32) -> (i32, i32) {
    %c0_i32 = arith.constant 0 : i32
    %c0_i32_0 = arith.constant 0 : i32
    %c0_i32_1 = arith.constant 0 : i32
    return %c0_i32, %c0_i32_0 : i32, i32
  }
  func.func @transform_14(%arg0: i32) -> (i32, i32) {
    %c0_i32 = arith.constant 0 : i32
    %c0_i32_0 = arith.constant 0 : i32
    %c0_i32_1 = arith.constant 0 : i32
    return %c0_i32, %c0_i32_0 : i32, i32
  }
  func.func @transform_15(%arg0: i32) -> (i32, i32) {
    %c0_i32 = arith.constant 0 : i32
    %c0_i32_0 = arith.constant 0 : i32
    %c0_i32_1 = arith.constant 0 : i32
    return %c0_i32, %c0_i32_0 : i32, i32
  }
  func.func @transform_16(%arg0: i32) -> (i32, i32) {
    %c0_i32 = arith.constant 0 : i32
    %c0_i32_0 = arith.constant 0 : i32
    %c0_i32_1 = arith.constant 0 : i32
    return %c0_i32, %c0_i32_0 : i32, i32
  }
  func.func @transform_17(%arg0: i32) -> (i32, i32) {
    %c0_i32 = arith.constant 0 : i32
    %c0_i32_0 = arith.constant 0 : i32
    %c0_i32_1 = arith.constant 0 : i32
    return %c0_i32, %c0_i32_0 : i32, i32
  }
  func.func @transform_18(%arg0: i32) -> (i32, i32) {
    %c0_i32 = arith.constant 0 : i32
    %c0_i32_0 = arith.constant 0 : i32
    %c0_i32_1 = arith.constant 0 : i32
    return %c0_i32, %c0_i32_0 : i32, i32
  }
  func.func @transform_19(%arg0: i32) -> (i32, i32) {
    %c0_i32 = arith.constant 0 : i32
    %c0_i32_0 = arith.constant 0 : i32
    %c0_i32_1 = arith.constant 0 : i32
    return %c0_i32, %c0_i32_0 : i32, i32
  }
  func.func @transform_20(%arg0: i32) -> (i32, i32) {
    %c0_i32 = arith.constant 0 : i32
    %c0_i32_0 = arith.constant 0 : i32
    %c0_i32_1 = arith.constant 0 : i32
    return %c0_i32, %c0_i32_0 : i32, i32
  }
  func.func @transform_21(%arg0: i32) -> (i32, i32) {
    %c0_i32 = arith.constant 0 : i32
    %c0_i32_0 = arith.constant 0 : i32
    %c0_i32_1 = arith.constant 0 : i32
    return %c0_i32, %c0_i32_0 : i32, i32
  }
  func.func @transform_22(%arg0: i32) -> (i32, i32) {
    %c0_i32 = arith.constant 0 : i32
    %c0_i32_0 = arith.constant 0 : i32
    return %arg0, %c0_i32 : i32, i32
  }
}

</mosaic_0001>

<llo_original>
// kernel: inference_attack_forward.1
$region0: #{inference_attack_forward.1}
  #allocation0 [shape = 'u32[]', space=smem, size = 0x4, offset = 0x4, fixed_abs, tag = 'smem constant byte address 0x4 - core index']
  #allocation1 [shape = 'u32[72,128]{1,0:T(1,128)}', space=vmem, size = 0x9000, scoped, tag = 'internal scratch']
  #allocation2 [shape = 'f32[1,1]{1,0:T(1,128)S(1)}', space=vmem, size = 0x200, scoped, tag = 'scoped memory for inference_attack_forward.1']
  %s0 = inlined_call_operand.vmem [shape: bf16[8,128], index: 0, kind: input, shape index: {}]
  %s1 = inlined_call_operand.vmem [shape: bf16[8,128], index: 1, kind: input, shape index: {}]
  %s2 = inlined_call_operand.hbm [shape: bf16[128,1024], index: 2, kind: input, shape index: {}]
  %s3 = inlined_call_operand.vmem [shape: f32[1,1024], index: 3, kind: input, shape index: {}]
  %s4 = inlined_call_operand.hbm [shape: bf16[1024,512], index: 4, kind: input, shape index: {}]
  %s5 = inlined_call_operand.vmem [shape: f32[1,512], index: 5, kind: input, shape index: {}]
  %s6 = inlined_call_operand.vmem [shape: bf16[512,64], index: 6, kind: input, shape index: {}]
  %s7 = inlined_call_operand.vmem [shape: f32[1,64], index: 7, kind: input, shape index: {}]
  %s8 = inlined_call_operand.vmem [shape: bf16[128,128], index: 8, kind: input, shape index: {}]
  %s9 = inlined_call_operand.vmem [shape: f32[1,128], index: 9, kind: input, shape index: {}]
  %s10 = inlined_call_operand.vmem [shape: bf16[128,64], index: 10, kind: input, shape index: {}]
  %s11 = inlined_call_operand.vmem [shape: f32[1,64], index: 11, kind: input, shape index: {}]
  %s12 = inlined_call_operand.vmem [shape: bf16[128,512], index: 12, kind: input, shape index: {}]
  %s13 = inlined_call_operand.vmem [shape: f32[1,512], index: 13, kind: input, shape index: {}]
  %s14 = inlined_call_operand.hbm [shape: bf16[512,256], index: 14, kind: input, shape index: {}]
  %s15 = inlined_call_operand.vmem [shape: f32[1,256], index: 15, kind: input, shape index: {}]
  %s16 = inlined_call_operand.vmem [shape: bf16[256,128], index: 16, kind: input, shape index: {}]
  %s17 = inlined_call_operand.vmem [shape: f32[1,128], index: 17, kind: input, shape index: {}]
  %s18 = inlined_call_operand.vmem [shape: bf16[128,64], index: 18, kind: input, shape index: {}]
  %s19 = inlined_call_operand.vmem [shape: f32[1,64], index: 19, kind: input, shape index: {}]
  %s20 = inlined_call_operand.vmem [shape: f32[1,64], index: 20, kind: input, shape index: {}]
  %s21 = inlined_call_operand.<no memory space> [shape: f32[1,1], index: 21, kind: input, shape index: {}]
  %s22 = inlined_call_operand.vmem [shape: f32[8,1], index: 22, kind: output, shape index: {}]
  %s23 = sld [smem:[#allocation0]]
  $region110: #{inference_attack_forward.1} parent=0
    _
  %s25 = ssub.s32 1, %s23
  %s26 = scalar_select 0, %s25, %s23
  %v27 = vstv %s21
  %28 = vst [vmem:[#allocation2] sm:$0x1] %v27
  $region1: #{inference_attack_forward.1} parent=0
    #allocation3 [shape = 'u8[262144]{0}', space=vmem, size = 0x40000, scoped, tag = 'input window, operand 2, single buffered']
    #allocation4 [shape = 's32[1]{0}', space=sflag, size = 0x4, scoped, tag = 'scoped memory for inference_attack_forward.1']
    #allocation5 [shape = 'u8[1048576]{0}', space=vmem, size = 0x100000, scoped, tag = 'input window, operand 4, single buffered']
    #allocation6 [shape = 's32[1]{0}', space=sflag, size = 0x4, scoped, tag = 'scoped memory for inference_attack_forward.1']
    #allocation7 [shape = 'u8[262144]{0}', space=vmem, size = 0x40000, scoped, tag = 'input window, operand 14, single buffered']
    %29 = vsyncpa [#allocation4], 0
    %30 = vsyncpa [#allocation6], 0
    // Predicated region
    $region2: #{inference_attack_forward.1} parent=1 // pred_check
      _
    $region3: #{inference_attack_forward.1} parent=1 // pred_check_branch
      %32 = sbr.rel (0) target = $region5
    $region4: #{inference_attack_forward.1} parent=1 // pred_region
      _
    $region5: #{inference_attack_forward.1} parent=1 // pred_fallthru
      _
    // Predicated region
    $region6: #{inference_attack_forward.1} parent=1 // pred_check
      _
    $region7: #{inference_attack_forward.1} parent=1 // pred_check_branch
      %34 = sbr.rel (0) target = $region9
    $region8: #{inference_attack_forward.1} parent=1 // pred_region
      _
    $region9: #{inference_attack_forward.1} parent=1 // pred_fallthru
      _
    // Predicated region
    $region10: #{inference_attack_forward.1} parent=1 // pred_check
      _
    $region11: #{inference_attack_forward.1} parent=1 // pred_check_branch
      %36 = sbr.rel (0) target = $region13
    $region12: #{inference_attack_forward.1} parent=1 // pred_region
      %38 = vsyncadd [#allocation4], 0
      %s39 = sshll.u32 %s2, 4
      %s40 = int_to_ptr.hbm [resolvable:$true] %s39
      %s41 = sshll.u32 [#allocation3], 4
      %s42 = int_to_ptr.vmem [resolvable:$true] %s41
      %47 = dma.hbm_to_vmem [thread:$0]  %s40, 8192, %s42, [#allocation4], 512, 512, 32
    $region13: #{inference_attack_forward.1} parent=1 // pred_fallthru
      _
    // Predicated region
    $region14: #{inference_attack_forward.1} parent=1 // pred_check
      _
    $region15: #{inference_attack_forward.1} parent=1 // pred_check_branch
      %49 = sbr.rel (0) target = $region17
    $region16: #{inference_attack_forward.1} parent=1 // pred_region
      _
    $region17: #{inference_attack_forward.1} parent=1 // pred_fallthru
      _
    // Predicated region
    $region18: #{inference_attack_forward.1} parent=1 // pred_check
      _
    $region19: #{inference_attack_forward.1} parent=1 // pred_check_branch
      %51 = sbr.rel (0) target = $region21
    $region20: #{inference_attack_forward.1} parent=1 // pred_region
      %53 = vsyncadd [#allocation6], 0
      %s54 = sshll.u32 %s4, 4
      %s55 = int_to_ptr.hbm [resolvable:$true] %s54
      %s56 = sshll.u32 [#allocation5], 4
      %s57 = int_to_ptr.vmem [resolvable:$true] %s56
      %62 = dma.hbm_to_vmem [thread:$0]  %s55, 32768, %s57, [#allocation6], 256, 256, 16
    $region21: #{inference_attack_forward.1} parent=1 // pred_fallthru
      _
    // Predicated region
    $region22: #{inference_attack_forward.1} parent=1 // pred_check
      _
    $region23: #{inference_attack_forward.1} parent=1 // pred_check_branch
      %64 = sbr.rel (0) target = $region25
    $region24: #{inference_attack_forward.1} parent=1 // pred_region
      _
    $region25: #{inference_attack_forward.1} parent=1 // pred_fallthru
      _
    // Predicated region
    $region26: #{inference_attack_forward.1} parent=1 // pred_check
      _
    $region27: #{inference_attack_forward.1} parent=1 // pred_check_branch
      %66 = sbr.rel (0) target = $region29
    $region28: #{inference_attack_forward.1} parent=1 // pred_region
      _
    $region29: #{inference_attack_forward.1} parent=1 // pred_fallthru
      _
    // Predicated region
    $region30: #{inference_attack_forward.1} parent=1 // pred_check
      _
    $region31: #{inference_attack_forward.1} parent=1 // pred_check_branch
      %68 = sbr.rel (0) target = $region33
    $region32: #{inference_attack_forward.1} parent=1 // pred_region
      _
    $region33: #{inference_attack_forward.1} parent=1 // pred_fallthru
      _
    // Predicated region
    $region34: #{inference_attack_forward.1} parent=1 // pred_check
      _
    $region35: #{inference_attack_forward.1} parent=1 // pred_check_branch
      %70 = sbr.rel (0) target = $region37
    $region36: #{inference_attack_forward.1} parent=1 // pred_region
      _
    $region37: #{inference_attack_forward.1} parent=1 // pred_fallthru
      _
    // Predicated region
    $region38: #{inference_attack_forward.1} parent=1 // pred_check
      _
    $region39: #{inference_attack_forward.1} parent=1 // pred_check_branch
      %72 = sbr.rel (0) target = $region41
    $region40: #{inference_attack_forward.1} parent=1 // pred_region
      _
    $region41: #{inference_attack_forward.1} parent=1 // pred_fallthru
      _
    // Predicated region
    $region42: #{inference_attack_forward.1} parent=1 // pred_check
      _
    $region43: #{inference_attack_forward.1} parent=1 // pred_check_branch
      %74 = sbr.rel (0) target = $region45
    $region44: #{inference_attack_forward.1} parent=1 // pred_region
      _
    $region45: #{inference_attack_forward.1} parent=1 // pred_fallthru
      _
    // Predicated region
    $region46: #{inference_attack_forward.1} parent=1 // pred_check
      _
    $region47: #{inference_attack_forward.1} parent=1 // pred_check_branch
      %76 = sbr.rel (0) target = $region49
    $region48: #{inference_attack_forward.1} parent=1 // pred_region
      _
    $region49: #{inference_attack_forward.1} parent=1 // pred_fallthru
      _
    // Predicated region
    $region50: #{inference_attack_forward.1} parent=1 // pred_check
      _
    $region51: #{inference_attack_forward.1} parent=1 // pred_check_branch
      %78 = sbr.rel (0) target = $region53
    $region52: #{inference_attack_forward.1} parent=1 // pred_region
      _
    $region53: #{inference_attack_forward.1} parent=1 // pred_fallthru
      _
    // Predicated region
    $region54: #{inference_attack_forward.1} parent=1 // pred_check
      _
    $region55: #{inference_attack_forward.1} parent=1 // pred_check_branch
      %80 = sbr.rel (0) target = $region57
    $region56: #{inference_attack_forward.1} parent=1 // pred_region
      _
    $region57: #{inference_attack_forward.1} parent=1 // pred_fallthru
      _
    // Predicated region
    $region58: #{inference_attack_forward.1} parent=1 // pred_check
      _
    $region59: #{inference_attack_forward.1} parent=1 // pred_check_branch
      %82 = sbr.rel (0) target = $region61
    $region60: #{inference_attack_forward.1} parent=1 // pred_region
      %84 = vsyncadd [#allocation6], 0
      %s85 = sshll.u32 %s14, 4
      %s86 = int_to_ptr.hbm [resolvable:$true] %s85
      %s87 = sshll.u32 [#allocation7], 4
      %s88 = int_to_ptr.vmem [resolvable:$true] %s87
      %93 = dma.hbm_to_vmem [thread:$0]  %s86, 8192, %s88, [#allocation6], 128, 128, 8
    $region61: #{inference_attack_forward.1} parent=1 // pred_fallthru
      _
    // Predicated region
    $region62: #{inference_attack_forward.1} parent=1 // pred_check
      _
    $region63: #{inference_attack_forward.1} parent=1 // pred_check_branch
      %95 = sbr.rel (0) target = $region65
    $region64: #{inference_attack_forward.1} parent=1 // pred_region
      _
    $region65: #{inference_attack_forward.1} parent=1 // pred_fallthru
      _
    // Predicated region
    $region66: #{inference_attack_forward.1} parent=1 // pred_check
      _
    $region67: #{inference_attack_forward.1} parent=1 // pred_check_branch
      %97 = sbr.rel (0) target = $region69
    $region68: #{inference_attack_forward.1} parent=1 // pred_region
      _
    $region69: #{inference_attack_forward.1} parent=1 // pred_fallthru
      _
    // Predicated region
    $region70: #{inference_attack_forward.1} parent=1 // pred_check
      _
    $region71: #{inference_attack_forward.1} parent=1 // pred_check_branch
      %99 = sbr.rel (0) target = $region73
    $region72: #{inference_attack_forward.1} parent=1 // pred_region
      _
    $region73: #{inference_attack_forward.1} parent=1 // pred_fallthru
      _
    // Predicated region
    $region74: #{inference_attack_forward.1} parent=1 // pred_check
      _
    $region75: #{inference_attack_forward.1} parent=1 // pred_check_branch
      %101 = sbr.rel (0) target = $region77
    $region76: #{inference_attack_forward.1} parent=1 // pred_region
      _
    $region77: #{inference_attack_forward.1} parent=1 // pred_fallthru
      _
    // Predicated region
    $region78: #{inference_attack_forward.1} parent=1 // pred_check
      _
    $region79: #{inference_attack_forward.1} parent=1 // pred_check_branch
      %103 = sbr.rel (0) target = $region81
    $region80: #{inference_attack_forward.1} parent=1 // pred_region
      _
    $region81: #{inference_attack_forward.1} parent=1 // pred_fallthru
      _
    // Predicated region
    $region82: #{inference_attack_forward.1} parent=1 // pred_check
      _
    $region83: #{inference_attack_forward.1} parent=1 // pred_check_branch
      %105 = sbr.rel (0) target = $region85
    $region84: #{inference_attack_forward.1} parent=1 // pred_region
      _
    $region85: #{inference_attack_forward.1} parent=1 // pred_fallthru
      _
    // Predicated region
    $region86: #{inference_attack_forward.1} parent=1 // pred_check
      _
    $region87: #{inference_attack_forward.1} parent=1 // pred_check_branch
      %107 = sbr.rel (0) target = $region89
    $region88: #{inference_attack_forward.1} parent=1 // pred_region
      _
    $region89: #{inference_attack_forward.1} parent=1 // pred_fallthru
      _
    // Predicated region
    $region90: #{inference_attack_forward.1} parent=1 // pred_check
      _
    $region91: #{inference_attack_forward.1} parent=1 // pred_check_branch
      %109 = sbr.rel (0) target = $region93
    $region92: #{inference_attack_forward.1} parent=1 // pred_region
      %111 = dma.done [#allocation4], 8192
    $region93: #{inference_attack_forward.1} parent=1 // pred_fallthru
      _
    // Predicated region
    $region94: #{inference_attack_forward.1} parent=1 // pred_check
      _
    $region95: #{inference_attack_forward.1} parent=1 // pred_check_branch
      %113 = sbr.rel (0) target = $region97
    $region96: #{inference_attack_forward.1} parent=1 // pred_region
      %115 = dma.done [#allocation6], 32768
    $region97: #{inference_attack_forward.1} parent=1 // pred_fallthru
      _
    // Predicated region
    $region98: #{inference_attack_forward.1} parent=1 // pred_check
      _
    $region99: #{inference_attack_forward.1} parent=1 // pred_check_branch
      %117 = sbr.rel (0) target = $region101
    $region100: #{inference_attack_forward.1} parent=1 // pred_region
      %119 = dma.done [#allocation6], 8192
    $region101: #{inference_attack_forward.1} parent=1 // pred_fallthru
      _
    %v121 = vld [vmem:[%s0] sm:$0xf]
    %v122 = vld [vmem:[#allocation3] sm:$0xff]
    %v123 = vld [vmem:[#allocation3 + $0x8] sm:$0xff]
    %v124 = vld [vmem:[#allocation3 + $0x10] sm:$0xff]
    %v125 = vld [vmem:[#allocation3 + $0x18] sm:$0xff]
    %v126 = vld [vmem:[#allocation3 + $0x20] sm:$0xff]
    %v127 = vld [vmem:[#allocation3 + $0x28] sm:$0xff]
    %v128 = vld [vmem:[#allocation3 + $0x30] sm:$0xff]
    %v129 = vld [vmem:[#allocation3 + $0x38] sm:$0xff]
    %v130 = vld [vmem:[#allocation3 + $0x40] sm:$0xff]
    %v131 = vld [vmem:[#allocation3 + $0x48] sm:$0xff]
    %v132 = vld [vmem:[#allocation3 + $0x50] sm:$0xff]
    %v133 = vld [vmem:[#allocation3 + $0x58] sm:$0xff]
    %v134 = vld [vmem:[#allocation3 + $0x60] sm:$0xff]
    %v135 = vld [vmem:[#allocation3 + $0x68] sm:$0xff]
    %v136 = vld [vmem:[#allocation3 + $0x70] sm:$0xff]
    %v137 = vld [vmem:[#allocation3 + $0x78] sm:$0xff]
    %v138 = vld [vmem:[#allocation3 + $0x80] sm:$0xff]
    %v139 = vld [vmem:[#allocation3 + $0x88] sm:$0xff]
    %v140 = vld [vmem:[#allocation3 + $0x90] sm:$0xff]
    %v141 = vld [vmem:[#allocation3 + $0x98] sm:$0xff]
    %v142 = vld [vmem:[#allocation3 + $0xa0] sm:$0xff]
    %v143 = vld [vmem:[#allocation3 + $0xa8] sm:$0xff]
    %v144 = vld [vmem:[#allocation3 + $0xb0] sm:$0xff]
    %v145 = vld [vmem:[#allocation3 + $0xb8] sm:$0xff]
    %v146 = vld [vmem:[#allocation3 + $0xc0] sm:$0xff]
    %v147 = vld [vmem:[#allocation3 + $0xc8] sm:$0xff]
    %v148 = vld [vmem:[#allocation3 + $0xd0] sm:$0xff]
    %v149 = vld [vmem:[#allocation3 + $0xd8] sm:$0xff]
    %v150 = vld [vmem:[#allocation3 + $0xe0] sm:$0xff]
    %v151 = vld [vmem:[#allocation3 + $0xe8] sm:$0xff]
    %v152 = vld [vmem:[#allocation3 + $0xf0] sm:$0xff]
    %v153 = vld [vmem:[#allocation3 + $0xf8] sm:$0xff]
    %v154 = vld [vmem:[#allocation3 + $0x100] sm:$0xff]
    %v155 = vld [vmem:[#allocation3 + $0x108] sm:$0xff]
    %v156 = vld [vmem:[#allocation3 + $0x110] sm:$0xff]
    %v157 = vld [vmem:[#allocation3 + $0x118] sm:$0xff]
    %v158 = vld [vmem:[#allocation3 + $0x120] sm:$0xff]
    %v159 = vld [vmem:[#allocation3 + $0x128] sm:$0xff]
    %v160 = vld [vmem:[#allocation3 + $0x130] sm:$0xff]
    %v161 = vld [vmem:[#allocation3 + $0x138] sm:$0xff]
    %v162 = vld [vmem:[#allocation3 + $0x140] sm:$0xff]
    %v163 = vld [vmem:[#allocation3 + $0x148] sm:$0xff]
    %v164 = vld [vmem:[#allocation3 + $0x150] sm:$0xff]
    %v165 = vld [vmem:[#allocation3 + $0x158] sm:$0xff]
    %v166 = vld [vmem:[#allocation3 + $0x160] sm:$0xff]
    %v167 = vld [vmem:[#allocation3 + $0x168] sm:$0xff]
    %v168 = vld [vmem:[#allocation3 + $0x170] sm:$0xff]
    %v169 = vld [vmem:[#allocation3 + $0x178] sm:$0xff]
    %v170 = vld [vmem:[#allocation3 + $0x180] sm:$0xff]
    %v171 = vld [vmem:[#allocation3 + $0x188] sm:$0xff]
    %v172 = vld [vmem:[#allocation3 + $0x190] sm:$0xff]
    %v173 = vld [vmem:[#allocation3 + $0x198] sm:$0xff]
    %v174 = vld [vmem:[#allocation3 + $0x1a0] sm:$0xff]
    %v175 = vld [vmem:[#allocation3 + $0x1a8] sm:$0xff]
    %v176 = vld [vmem:[#allocation3 + $0x1b0] sm:$0xff]
    %v177 = vld [vmem:[#allocation3 + $0x1b8] sm:$0xff]
    %v178 = vld [vmem:[#allocation3 + $0x1c0] sm:$0xff]
    %v179 = vld [vmem:[#allocation3 + $0x1c8] sm:$0xff]
    %v180 = vld [vmem:[#allocation3 + $0x1d0] sm:$0xff]
    %v181 = vld [vmem:[#allocation3 + $0x1d8] sm:$0xff]
    %v182 = vld [vmem:[#allocation3 + $0x1e0] sm:$0xff]
    %v183 = vld [vmem:[#allocation3 + $0x1e8] sm:$0xff]
    %v184 = vld [vmem:[#allocation3 + $0x1f0] sm:$0xff]
    %v185 = vld [vmem:[#allocation3 + $0x1f8] sm:$0xff]
    %v186 = vld [vmem:[%s3] sm:$0xff]
    %v188 = vperm.slane %v186, 0
    %v189 = vperm.slane %v186, 1
    %v190 = vperm.slane %v186, 2
    %v191 = vperm.slane %v186, 3
    %v192 = vperm.slane %v186, 4
    %v193 = vperm.slane %v186, 5
    %v194 = vperm.slane %v186, 6
    %v195 = vperm.slane %v186, 7
    %v268 = vunpack.c.l.b16 %v122
    %v269 = vunpack.c.h.b16 %v122
    %v270 = vunpack.c.l.b16 %v123
    %v271 = vunpack.c.h.b16 %v123
    %v272 = vunpack.c.l.b16 %v124
    %v273 = vunpack.c.h.b16 %v124
    %v274 = vunpack.c.l.b16 %v125
    %v275 = vunpack.c.h.b16 %v125
    %v276 = vunpack.c.l.b16 %v126
    %v277 = vunpack.c.h.b16 %v126
    %v278 = vunpack.c.l.b16 %v127
    %v279 = vunpack.c.h.b16 %v127
    %v280 = vunpack.c.l.b16 %v128
    %v281 = vunpack.c.h.b16 %v128
    %v282 = vunpack.c.l.b16 %v129
    %v283 = vunpack.c.h.b16 %v129
    %v284 = vunpack.c.l.b16 %v130
    %v285 = vunpack.c.h.b16 %v130
    %v286 = vunpack.c.l.b16 %v131
    %v287 = vunpack.c.h.b16 %v131
    %v288 = vunpack.c.l.b16 %v132
    %v289 = vunpack.c.h.b16 %v132
    %v290 = vunpack.c.l.b16 %v133
    %v291 = vunpack.c.h.b16 %v133
    %v292 = vunpack.c.l.b16 %v134
    %v293 = vunpack.c.h.b16 %v134
    %v294 = vunpack.c.l.b16 %v135
    %v295 = vunpack.c.h.b16 %v135
    %v296 = vunpack.c.l.b16 %v136
    %v297 = vunpack.c.h.b16 %v136
    %v298 = vunpack.c.l.b16 %v137
    %v299 = vunpack.c.h.b16 %v137
    %v300 = vunpack.c.l.b16 %v138
    %v301 = vunpack.c.h.b16 %v138
    %v302 = vunpack.c.l.b16 %v139
    %v303 = vunpack.c.h.b16 %v139
    %v304 = vunpack.c.l.b16 %v140
    %v305 = vunpack.c.h.b16 %v140
    %v306 = vunpack.c.l.b16 %v141
    %v307 = vunpack.c.h.b16 %v141
    %v308 = vunpack.c.l.b16 %v142
    %v309 = vunpack.c.h.b16 %v142
    %v310 = vunpack.c.l.b16 %v143
    %v311 = vunpack.c.h.b16 %v143
    %v312 = vunpack.c.l.b16 %v144
    %v313 = vunpack.c.h.b16 %v144
    %v314 = vunpack.c.l.b16 %v145
    %v315 = vunpack.c.h.b16 %v145
    %v316 = vunpack.c.l.b16 %v146
    %v317 = vunpack.c.h.b16 %v146
    %v318 = vunpack.c.l.b16 %v147
    %v319 = vunpack.c.h.b16 %v147
    %v320 = vunpack.c.l.b16 %v148
    %v321 = vunpack.c.h.b16 %v148
    %v322 = vunpack.c.l.b16 %v149
    %v323 = vunpack.c.h.b16 %v149
    %v324 = vunpack.c.l.b16 %v150
    %v325 = vunpack.c.h.b16 %v150
    %v326 = vunpack.c.l.b16 %v151
    %v327 = vunpack.c.h.b16 %v151
    %v328 = vunpack.c.l.b16 %v152
    %v329 = vunpack.c.h.b16 %v152
    %v330 = vunpack.c.l.b16 %v153
    %v331 = vunpack.c.h.b16 %v153
    %v332 = vunpack.c.l.b16 %v154
    %v333 = vunpack.c.h.b16 %v154
    %v334 = vunpack.c.l.b16 %v155
    %v335 = vunpack.c.h.b16 %v155
    %v336 = vunpack.c.l.b16 %v156
    %v337 = vunpack.c.h.b16 %v156
    %v338 = vunpack.c.l.b16 %v157
    %v339 = vunpack.c.h.b16 %v157
    %v340 = vunpack.c.l.b16 %v158
    %v341 = vunpack.c.h.b16 %v158
    %v342 = vunpack.c.l.b16 %v159
    %v343 = vunpack.c.h.b16 %v159
    %v344 = vunpack.c.l.b16 %v160
    %v345 = vunpack.c.h.b16 %v160
    %v346 = vunpack.c.l.b16 %v161
    %v347 = vunpack.c.h.b16 %v161
    %v348 = vunpack.c.l.b16 %v162
    %v349 = vunpack.c.h.b16 %v162
    %v350 = vunpack.c.l.b16 %v163
    %v351 = vunpack.c.h.b16 %v163
    %v352 = vunpack.c.l.b16 %v164
    %v353 = vunpack.c.h.b16 %v164
    %v354 = vunpack.c.l.b16 %v165
    %v355 = vunpack.c.h.b16 %v165
    %v356 = vunpack.c.l.b16 %v166
    %v357 = vunpack.c.h.b16 %v166
    %v358 = vunpack.c.l.b16 %v167
    %v359 = vunpack.c.h.b16 %v167
    %v360 = vunpack.c.l.b16 %v168
    %v361 = vunpack.c.h.b16 %v168
    %v362 = vunpack.c.l.b16 %v169
    %v363 = vunpack.c.h.b16 %v169
    %v364 = vunpack.c.l.b16 %v170
    %v365 = vunpack.c.h.b16 %v170
    %v366 = vunpack.c.l.b16 %v171
    %v367 = vunpack.c.h.b16 %v171
    %v368 = vunpack.c.l.b16 %v172
    %v369 = vunpack.c.h.b16 %v172
    %v370 = vunpack.c.l.b16 %v173
    %v371 = vunpack.c.h.b16 %v173
    %v372 = vunpack.c.l.b16 %v174
    %v373 = vunpack.c.h.b16 %v174
    %v374 = vunpack.c.l.b16 %v175
    %v375 = vunpack.c.h.b16 %v175
    %v376 = vunpack.c.l.b16 %v176
    %v377 = vunpack.c.h.b16 %v176
    %v378 = vunpack.c.l.b16 %v177
    %v379 = vunpack.c.h.b16 %v177
    %v380 = vunpack.c.l.b16 %v178
    %v381 = vunpack.c.h.b16 %v178
    %v382 = vunpack.c.l.b16 %v179
    %v383 = vunpack.c.h.b16 %v179
    %v384 = vunpack.c.l.b16 %v180
    %v385 = vunpack.c.h.b16 %v180
    %v386 = vunpack.c.l.b16 %v181
    %v387 = vunpack.c.h.b16 %v181
    %v388 = vunpack.c.l.b16 %v182
    %v389 = vunpack.c.h.b16 %v182
    %v390 = vunpack.c.l.b16 %v183
    %v391 = vunpack.c.h.b16 %v183
    %v392 = vunpack.c.l.b16 %v184
    %v393 = vunpack.c.h.b16 %v184
    %v394 = vunpack.c.l.b16 %v185
    %v395 = vunpack.c.h.b16 %v185
    %v396 = vpack.c.b16 %v276, %v268
    %v397 = vpack.c.b16 %v277, %v269
    %v398 = vpack.c.b16 %v278, %v270
    %v399 = vpack.c.b16 %v279, %v271
    %v400 = vpack.c.b16 %v280, %v272
    %v401 = vpack.c.b16 %v281, %v273
    %v402 = vpack.c.b16 %v282, %v274
    %v403 = vpack.c.b16 %v283, %v275
    %v404 = vpack.c.b16 %v292, %v284
    %v405 = vpack.c.b16 %v293, %v285
    %v406 = vpack.c.b16 %v294, %v286
    %v407 = vpack.c.b16 %v295, %v287
    %v408 = vpack.c.b16 %v296, %v288
    %v409 = vpack.c.b16 %v297, %v289
    %v410 = vpack.c.b16 %v298, %v290
    %v411 = vpack.c.b16 %v299, %v291
    %v412 = vpack.c.b16 %v308, %v300
    %v413 = vpack.c.b16 %v309, %v301
    %v414 = vpack.c.b16 %v310, %v302
    %v415 = vpack.c.b16 %v311, %v303
    %v416 = vpack.c.b16 %v312, %v304
    %v417 = vpack.c.b16 %v313, %v305
    %v418 = vpack.c.b16 %v314, %v306
    %v419 = vpack.c.b16 %v315, %v307
    %v420 = vpack.c.b16 %v324, %v316
    %v421 = vpack.c.b16 %v325, %v317
    %v422 = vpack.c.b16 %v326, %v318
    %v423 = vpack.c.b16 %v327, %v319
    %v424 = vpack.c.b16 %v328, %v320
    %v425 = vpack.c.b16 %v329, %v321
    %v426 = vpack.c.b16 %v330, %v322
    %v427 = vpack.c.b16 %v331, %v323
    %v428 = vpack.c.b16 %v340, %v332
    %v429 = vpack.c.b16 %v341, %v333
    %v430 = vpack.c.b16 %v342, %v334
    %v431 = vpack.c.b16 %v343, %v335
    %v432 = vpack.c.b16 %v344, %v336
    %v433 = vpack.c.b16 %v345, %v337
    %v434 = vpack.c.b16 %v346, %v338
    %v435 = vpack.c.b16 %v347, %v339
    %v436 = vpack.c.b16 %v356, %v348
    %v437 = vpack.c.b16 %v357, %v349
    %v438 = vpack.c.b16 %v358, %v350
    %v439 = vpack.c.b16 %v359, %v351
    %v440 = vpack.c.b16 %v360, %v352
    %v441 = vpack.c.b16 %v361, %v353
    %v442 = vpack.c.b16 %v362, %v354
    %v443 = vpack.c.b16 %v363, %v355
    %v444 = vpack.c.b16 %v372, %v364
    %v445 = vpack.c.b16 %v373, %v365
    %v446 = vpack.c.b16 %v374, %v366
    %v447 = vpack.c.b16 %v375, %v367
    %v448 = vpack.c.b16 %v376, %v368
    %v449 = vpack.c.b16 %v377, %v369
    %v450 = vpack.c.b16 %v378, %v370
    %v451 = vpack.c.b16 %v379, %v371
    %v452 = vpack.c.b16 %v388, %v380
    %v453 = vpack.c.b16 %v389, %v381
    %v454 = vpack.c.b16 %v390, %v382
    %v455 = vpack.c.b16 %v391, %v383
    %v456 = vpack.c.b16 %v392, %v384
    %v457 = vpack.c.b16 %v393, %v385
    %v458 = vpack.c.b16 %v394, %v386
    %v459 = vpack.c.b16 %v395, %v387
    %524 = vmatpush.bf16.msra.mxu0 %v452
    %525 = vmatpush.bf16.msra.mxu0 %v444
    %526 = vmatpush.bf16.msra.mxu0 %v436
    %527 = vmatpush.bf16.msra.mxu0 %v428
    %528 = vmatpush.bf16.msra.mxu0 %v420
    %529 = vmatpush.bf16.msra.mxu0 %v412
    %530 = vmatpush.bf16.msra.mxu0 %v404
    %531 = vmatpush.bf16.msra.mxu0 %v396
    %532 = vmatmul.bf16.gmra.mxu0 %v121
    %v533 = vpop.f32.mrf.mxu0
    %v534 = vadd.f32 %v188, %v533
    %v535 = vpop.f32.mrf.mxu0
    %536 = vdwg.mxu0
    %537 = vmatpush.bf16.msra.mxu0 %v453
    %538 = vmatpush.bf16.msra.mxu0 %v445
    %539 = vmatpush.bf16.msra.mxu0 %v437
    %540 = vmatpush.bf16.msra.mxu0 %v429
    %541 = vmatpush.bf16.msra.mxu0 %v421
    %542 = vmatpush.bf16.msra.mxu0 %v413
    %543 = vmatpush.bf16.msra.mxu0 %v405
    %544 = vmatpush.bf16.msra.mxu0 %v397
    %545 = vmatmul.bf16.gmra.mxu0 %v121
    %v546 = vpop.f32.mrf.mxu0
    %v547 = vadd.f32 %v189, %v546
    %v548 = vpop.f32.mrf.mxu0
    %549 = vdwg.mxu0
    %550 = vmatpush.bf16.msra.mxu0 %v454
    %551 = vmatpush.bf16.msra.mxu0 %v446
    %552 = vmatpush.bf16.msra.mxu0 %v438
    %553 = vmatpush.bf16.msra.mxu0 %v430
    %554 = vmatpush.bf16.msra.mxu0 %v422
    %555 = vmatpush.bf16.msra.mxu0 %v414
    %556 = vmatpush.bf16.msra.mxu0 %v406
    %557 = vmatpush.bf16.msra.mxu0 %v398
    %558 = vmatmul.bf16.gmra.mxu0 %v121
    %v559 = vpop.f32.mrf.mxu0
    %v560 = vadd.f32 %v190, %v559
    %v561 = vpop.f32.mrf.mxu0
    %562 = vdwg.mxu0
    %563 = vmatpush.bf16.msra.mxu0 %v455
    %564 = vmatpush.bf16.msra.mxu0 %v447
    %565 = vmatpush.bf16.msra.mxu0 %v439
    %566 = vmatpush.bf16.msra.mxu0 %v431
    %567 = vmatpush.bf16.msra.mxu0 %v423
    %568 = vmatpush.bf16.msra.mxu0 %v415
    %569 = vmatpush.bf16.msra.mxu0 %v407
    %570 = vmatpush.bf16.msra.mxu0 %v399
    %571 = vmatmul.bf16.gmra.mxu0 %v121
    %v572 = vpop.f32.mrf.mxu0
    %v573 = vadd.f32 %v191, %v572
    %v574 = vpop.f32.mrf.mxu0
    %575 = vdwg.mxu0
    %576 = vmatpush.bf16.msra.mxu0 %v456
    %577 = vmatpush.bf16.msra.mxu0 %v448
    %578 = vmatpush.bf16.msra.mxu0 %v440
    %579 = vmatpush.bf16.msra.mxu0 %v432
    %580 = vmatpush.bf16.msra.mxu0 %v424
    %581 = vmatpush.bf16.msra.mxu0 %v416
    %582 = vmatpush.bf16.msra.mxu0 %v408
    %583 = vmatpush.bf16.msra.mxu0 %v400
    %584 = vmatmul.bf16.gmra.mxu0 %v121
    %v585 = vpop.f32.mrf.mxu0
    %v586 = vadd.f32 %v192, %v585
    %v587 = vpop.f32.mrf.mxu0
    %588 = vdwg.mxu0
    %589 = vmatpush.bf16.msra.mxu0 %v457
    %590 = vmatpush.bf16.msra.mxu0 %v449
    %591 = vmatpush.bf16.msra.mxu0 %v441
    %592 = vmatpush.bf16.msra.mxu0 %v433
    %593 = vmatpush.bf16.msra.mxu0 %v425
    %594 = vmatpush.bf16.msra.mxu0 %v417
    %595 = vmatpush.bf16.msra.mxu0 %v409
    %596 = vmatpush.bf16.msra.mxu0 %v401
    %597 = vmatmul.bf16.gmra.mxu0 %v121
    %v598 = vpop.f32.mrf.mxu0
    %v599 = vadd.f32 %v193, %v598
    %v600 = vpop.f32.mrf.mxu0
    %601 = vdwg.mxu0
    %602 = vmatpush.bf16.msra.mxu0 %v458
    %603 = vmatpush.bf16.msra.mxu0 %v450
    %604 = vmatpush.bf16.msra.mxu0 %v442
    %605 = vmatpush.bf16.msra.mxu0 %v434
    %606 = vmatpush.bf16.msra.mxu0 %v426
    %607 = vmatpush.bf16.msra.mxu0 %v418
    %608 = vmatpush.bf16.msra.mxu0 %v410
    %609 = vmatpush.bf16.msra.mxu0 %v402
    %610 = vmatmul.bf16.gmra.mxu0 %v121
    %v611 = vpop.f32.mrf.mxu0
    %v612 = vadd.f32 %v194, %v611
    %v613 = vpop.f32.mrf.mxu0
    %614 = vdwg.mxu0
    %615 = vmatpush.bf16.msra.mxu0 %v459
    %616 = vmatpush.bf16.msra.mxu0 %v451
    %617 = vmatpush.bf16.msra.mxu0 %v443
    %618 = vmatpush.bf16.msra.mxu0 %v435
    %619 = vmatpush.bf16.msra.mxu0 %v427
    %620 = vmatpush.bf16.msra.mxu0 %v419
    %621 = vmatpush.bf16.msra.mxu0 %v411
    %622 = vmatpush.bf16.msra.mxu0 %v403
    %623 = vmatmul.bf16.gmra.mxu0 %v121
    %v624 = vpop.f32.mrf.mxu0
    %v625 = vadd.f32 %v195, %v624
    %v626 = vpop.f32.mrf.mxu0
    %627 = vdwg.mxu0
    %v628 = vmax.f32 %v534, 0.0
    %v629 = vmax.f32 %v547, 0.0
    %v630 = vmax.f32 %v560, 0.0
    %v631 = vmax.f32 %v573, 0.0
    %v632 = vmax.f32 %v586, 0.0
    %v633 = vmax.f32 %v599, 0.0
    %v634 = vmax.f32 %v612, 0.0
    %v635 = vmax.f32 %v625, 0.0
    %v636 = vpack.c.bf16 %v628, %v628
    %v637 = vpack.c.bf16 %v629, %v629
    %v638 = vpack.c.bf16 %v630, %v630
    %v639 = vpack.c.bf16 %v631, %v631
    %v640 = vpack.c.bf16 %v632, %v632
    %v641 = vpack.c.bf16 %v633, %v633
    %v642 = vpack.c.bf16 %v634, %v634
    %v643 = vpack.c.bf16 %v635, %v635
    %v644 = vld [vmem:[#allocation5] sm:$0xff]
    %v645 = vld [vmem:[#allocation5 + $0x8] sm:$0xff]
    %v646 = vld [vmem:[#allocation5 + $0x10] sm:$0xff]
    %v647 = vld [vmem:[#allocation5 + $0x18] sm:$0xff]
    %v648 = vld [vmem:[#allocation5 + $0x20] sm:$0xff]
    %v649 = vld [vmem:[#allocation5 + $0x28] sm:$0xff]
    %v650 = vld [vmem:[#allocation5 + $0x30] sm:$0xff]
    %v651 = vld [vmem:[#allocation5 + $0x38] sm:$0xff]
    %v652 = vld [vmem:[#allocation5 + $0x40] sm:$0xff]
    %v653 = vld [vmem:[#allocation5 + $0x48] sm:$0xff]
    %v654 = vld [vmem:[#allocation5 + $0x50] sm:$0xff]
    %v655 = vld [vmem:[#allocation5 + $0x58] sm:$0xff]
    %v656 = vld [vmem:[#allocation5 + $0x60] sm:$0xff]
    %v657 = vld [vmem:[#allocation5 + $0x68] sm:$0xff]
    %v658 = vld [vmem:[#allocation5 + $0x70] sm:$0xff]
    %v659 = vld [vmem:[#allocation5 + $0x78] sm:$0xff]
    %v660 = vld [vmem:[#allocation5 + $0x80] sm:$0xff]
    %v661 = vld [vmem:[#allocation5 + $0x88] sm:$0xff]
    %v662 = vld [vmem:[#allocation5 + $0x90] sm:$0xff]
    %v663 = vld [vmem:[#allocation5 + $0x98] sm:$0xff]
    %v664 = vld [vmem:[#allocation5 + $0xa0] sm:$0xff]
    %v665 = vld [vmem:[#allocation5 + $0xa8] sm:$0xff]
    %v666 = vld [vmem:[#allocation5 + $0xb0] sm:$0xff]
    %v667 = vld [vmem:[#allocation5 + $0xb8] sm:$0xff]
    %v668 = vld [vmem:[#allocation5 + $0xc0] sm:$0xff]
    %v669 = vld [vmem:[#allocation5 + $0xc8] sm:$0xff]
    %v670 = vld [vmem:[#allocation5 + $0xd0] sm:$0xff]
    %v671 = vld [vmem:[#allocation5 + $0xd8] sm:$0xff]
    %v672 = vld [vmem:[#allocation5 + $0xe0] sm:$0xff]
    %v673 = vld [vmem:[#allocation5 + $0xe8] sm:$0xff]
    %v674 = vld [vmem:[#allocation5 + $0xf0] sm:$0xff]
    %v675 = vld [vmem:[#allocation5 + $0xf8] sm:$0xff]
    %v676 = vld [vmem:[#allocation5 + $0x100] sm:$0xff]
    %v677 = vld [vmem:[#allocation5 + $0x108] sm:$0xff]
    %v678 = vld [vmem:[#allocation5 + $0x110] sm:$0xff]
    %v679 = vld [vmem:[#allocation5 + $0x118] sm:$0xff]
    %v680 = vld [vmem:[#allocation5 + $0x120] sm:$0xff]
    %v681 = vld [vmem:[#allocation5 + $0x128] sm:$0xff]
    %v682 = vld [vmem:[#allocation5 + $0x130] sm:$0xff]
    %v683 = vld [vmem:[#allocation5 + $0x138] sm:$0xff]
    %v684 = vld [vmem:[#allocation5 + $0x140] sm:$0xff]
    %v685 = vld [vmem:[#allocation5 + $0x148] sm:$0xff]
    %v686 = vld [vmem:[#allocation5 + $0x150] sm:$0xff]
    %v687 = vld [vmem:[#allocation5 + $0x158] sm:$0xff]
    %v688 = vld [vmem:[#allocation5 + $0x160] sm:$0xff]
    %v689 = vld [vmem:[#allocation5 + $0x168] sm:$0xff]
    %v690 = vld [vmem:[#allocation5 + $0x170] sm:$0xff]
    %v691 = vld [vmem:[#allocation5 + $0x178] sm:$0xff]
    %v692 = vld [vmem:[#allocation5 + $0x180] sm:$0xff]
    %v693 = vld [vmem:[#allocation5 + $0x188] sm:$0xff]
    %v694 = vld [vmem:[#allocation5 + $0x190] sm:$0xff]
    %v695 = vld [vmem:[#allocation5 + $0x198] sm:$0xff]
    %v696 = vld [vmem:[#allocation5 + $0x1a0] sm:$0xff]
    %v697 = vld [vmem:[#allocation5 + $0x1a8] sm:$0xff]
    %v698 = vld [vmem:[#allocation5 + $0x1b0] sm:$0xff]
    %v699 = vld [vmem:[#allocation5 + $0x1b8] sm:$0xff]
    %v700 = vld [vmem:[#allocation5 + $0x1c0] sm:$0xff]
    %v701 = vld [vmem:[#allocation5 + $0x1c8] sm:$0xff]
    %v702 = vld [vmem:[#allocation5 + $0x1d0] sm:$0xff]
    %v703 = vld [vmem:[#allocation5 + $0x1d8] sm:$0xff]
    %v704 = vld [vmem:[#allocation5 + $0x1e0] sm:$0xff]
    %v705 = vld [vmem:[#allocation5 + $0x1e8] sm:$0xff]
    %v706 = vld [vmem:[#allocation5 + $0x1f0] sm:$0xff]
    %v707 = vld [vmem:[#allocation5 + $0x1f8] sm:$0xff]
    %v708 = vld [vmem:[#allocation5 + $0x200] sm:$0xff]
    %v709 = vld [vmem:[#allocation5 + $0x208] sm:$0xff]
    %v710 = vld [vmem:[#allocation5 + $0x210] sm:$0xff]
    %v711 = vld [vmem:[#allocation5 + $0x218] sm:$0xff]
    %v712 = vld [vmem:[#allocation5 + $0x220] sm:$0xff]
    %v713 = vld [vmem:[#allocation5 + $0x228] sm:$0xff]
    %v714 = vld [vmem:[#allocation5 + $0x230] sm:$0xff]
    %v715 = vld [vmem:[#allocation5 + $0x238] sm:$0xff]
    %v716 = vld [vmem:[#allocation5 + $0x240] sm:$0xff]
    %v717 = vld [vmem:[#allocation5 + $0x248] sm:$0xff]
    %v718 = vld [vmem:[#allocation5 + $0x250] sm:$0xff]
    %v719 = vld [vmem:[#allocation5 + $0x258] sm:$0xff]
    %v720 = vld [vmem:[#allocation5 + $0x260] sm:$0xff]
    %v721 = vld [vmem:[#allocation5 + $0x268] sm:$0xff]
    %v722 = vld [vmem:[#allocation5 + $0x270] sm:$0xff]
    %v723 = vld [vmem:[#allocation5 + $0x278] sm:$0xff]
    %v724 = vld [vmem:[#allocation5 + $0x280] sm:$0xff]
    %v725 = vld [vmem:[#allocation5 + $0x288] sm:$0xff]
    %v726 = vld [vmem:[#allocation5 + $0x290] sm:$0xff]
    %v727 = vld [vmem:[#allocation5 + $0x298] sm:$0xff]
    %v728 = vld [vmem:[#allocation5 + $0x2a0] sm:$0xff]
    %v729 = vld [vmem:[#allocation5 + $0x2a8] sm:$0xff]
    %v730 = vld [vmem:[#allocation5 + $0x2b0] sm:$0xff]
    %v731 = vld [vmem:[#allocation5 + $0x2b8] sm:$0xff]
    %v732 = vld [vmem:[#allocation5 + $0x2c0] sm:$0xff]
    %v733 = vld [vmem:[#allocation5 + $0x2c8] sm:$0xff]
    %v734 = vld [vmem:[#allocation5 + $0x2d0] sm:$0xff]
    %v735 = vld [vmem:[#allocation5 + $0x2d8] sm:$0xff]
    %v736 = vld [vmem:[#allocation5 + $0x2e0] sm:$0xff]
    %v737 = vld [vmem:[#allocation5 + $0x2e8] sm:$0xff]
    %v738 = vld [vmem:[#allocation5 + $0x2f0] sm:$0xff]
    %v739 = vld [vmem:[#allocation5 + $0x2f8] sm:$0xff]
    %v740 = vld [vmem:[#allocation5 + $0x300] sm:$0xff]
    %v741 = vld [vmem:[#allocation5 + $0x308] sm:$0xff]
    %v742 = vld [vmem:[#allocation5 + $0x310] sm:$0xff]
    %v743 = vld [vmem:[#allocation5 + $0x318] sm:$0xff]
    %v744 = vld [vmem:[#allocation5 + $0x320] sm:$0xff]
    %v745 = vld [vmem:[#allocation5 + $0x328] sm:$0xff]
    %v746 = vld [vmem:[#allocation5 + $0x330] sm:$0xff]
    %v747 = vld [vmem:[#allocation5 + $0x338] sm:$0xff]
    %v748 = vld [vmem:[#allocation5 + $0x340] sm:$0xff]
    %v749 = vld [vmem:[#allocation5 + $0x348] sm:$0xff]
    %v750 = vld [vmem:[#allocation5 + $0x350] sm:$0xff]
    %v751 = vld [vmem:[#allocation5 + $0x358] sm:$0xff]
    %v752 = vld [vmem:[#allocation5 + $0x360] sm:$0xff]
    %v753 = vld [vmem:[#allocation5 + $0x368] sm:$0xff]
    %v754 = vld [vmem:[#allocation5 + $0x370] sm:$0xff]
    %v755 = vld [vmem:[#allocation5 + $0x378] sm:$0xff]
    %v756 = vld [vmem:[#allocation5 + $0x380] sm:$0xff]
    %v757 = vld [vmem:[#allocation5 + $0x388] sm:$0xff]
    %v758 = vld [vmem:[#allocation5 + $0x390] sm:$0xff]
    %v759 = vld [vmem:[#allocation5 + $0x398] sm:$0xff]
    %v760 = vld [vmem:[#allocation5 + $0x3a0] sm:$0xff]
    %v761 = vld [vmem:[#allocation5 + $0x3a8] sm:$0xff]
    %v762 = vld [vmem:[#allocation5 + $0x3b0] sm:$0xff]
    %v763 = vld [vmem:[#allocation5 + $0x3b8] sm:$0xff]
    %v764 = vld [vmem:[#allocation5 + $0x3c0] sm:$0xff]
    %v765 = vld [vmem:[#allocation5 + $0x3c8] sm:$0xff]
    %v766 = vld [vmem:[#allocation5 + $0x3d0] sm:$0xff]
    %v767 = vld [vmem:[#allocation5 + $0x3d8] sm:$0xff]
    %v768 = vld [vmem:[#allocation5 + $0x3e0] sm:$0xff]
    %v769 = vld [vmem:[#allocation5 + $0x3e8] sm:$0xff]
    %v770 = vld [vmem:[#allocation5 + $0x3f0] sm:$0xff]
    %v771 = vld [vmem:[#allocation5 + $0x3f8] sm:$0xff]
    %v772 = vld [vmem:[#allocation5 + $0x400] sm:$0xff]
    %v773 = vld [vmem:[#allocation5 + $0x408] sm:$0xff]
    %v774 = vld [vmem:[#allocation5 + $0x410] sm:$0xff]
    %v775 = vld [vmem:[#allocation5 + $0x418] sm:$0xff]
    %v776 = vld [vmem:[#allocation5 + $0x420] sm:$0xff]
    %v777 = vld [vmem:[#allocation5 + $0x428] sm:$0xff]
    %v778 = vld [vmem:[#allocation5 + $0x430] sm:$0xff]
    %v779 = vld [vmem:[#allocation5 + $0x438] sm:$0xff]
    %v780 = vld [vmem:[#allocation5 + $0x440] sm:$0xff]
    %v781 = vld [vmem:[#allocation5 + $0x448] sm:$0xff]
    %v782 = vld [vmem:[#allocation5 + $0x450] sm:$0xff]
    %v783 = vld [vmem:[#allocation5 + $0x458] sm:$0xff]
    %v784 = vld [vmem:[#allocation5 + $0x460] sm:$0xff]
    %v785 = vld [vmem:[#allocation5 + $0x468] sm:$0xff]
    %v786 = vld [vmem:[#allocation5 + $0x470] sm:$0xff]
    %v787 = vld [vmem:[#allocation5 + $0x478] sm:$0xff]
    %v788 = vld [vmem:[#allocation5 + $0x480] sm:$0xff]
    %v789 = vld [vmem:[#allocation5 + $0x488] sm:$0xff]
    %v790 = vld [vmem:[#allocation5 + $0x490] sm:$0xff]
    %v791 = vld [vmem:[#allocation5 + $0x498] sm:$0xff]
    %v792 = vld [vmem:[#allocation5 + $0x4a0] sm:$0xff]
    %v793 = vld [vmem:[#allocation5 + $0x4a8] sm:$0xff]
    %v794 = vld [vmem:[#allocation5 + $0x4b0] sm:$0xff]
    %v795 = vld [vmem:[#allocation5 + $0x4b8] sm:$0xff]
    %v796 = vld [vmem:[#allocation5 + $0x4c0] sm:$0xff]
    %v797 = vld [vmem:[#allocation5 + $0x4c8] sm:$0xff]
    %v798 = vld [vmem:[#allocation5 + $0x4d0] sm:$0xff]
    %v799 = vld [vmem:[#allocation5 + $0x4d8] sm:$0xff]
    %v800 = vld [vmem:[#allocation5 + $0x4e0] sm:$0xff]
    %v801 = vld [vmem:[#allocation5 + $0x4e8] sm:$0xff]
    %v802 = vld [vmem:[#allocation5 + $0x4f0] sm:$0xff]
    %v803 = vld [vmem:[#allocation5 + $0x4f8] sm:$0xff]
    %v804 = vld [vmem:[#allocation5 + $0x500] sm:$0xff]
    %v805 = vld [vmem:[#allocation5 + $0x508] sm:$0xff]
    %v806 = vld [vmem:[#allocation5 + $0x510] sm:$0xff]
    %v807 = vld [vmem:[#allocation5 + $0x518] sm:$0xff]
    %v808 = vld [vmem:[#allocation5 + $0x520] sm:$0xff]
    %v809 = vld [vmem:[#allocation5 + $0x528] sm:$0xff]
    %v810 = vld [vmem:[#allocation5 + $0x530] sm:$0xff]
    %v811 = vld [vmem:[#allocation5 + $0x538] sm:$0xff]
    %v812 = vld [vmem:[#allocation5 + $0x540] sm:$0xff]
    %v813 = vld [vmem:[#allocation5 + $0x548] sm:$0xff]
    %v814 = vld [vmem:[#allocation5 + $0x550] sm:$0xff]
    %v815 = vld [vmem:[#allocation5 + $0x558] sm:$0xff]
    %v816 = vld [vmem:[#allocation5 + $0x560] sm:$0xff]
    %v817 = vld [vmem:[#allocation5 + $0x568] sm:$0xff]
    %v818 = vld [vmem:[#allocation5 + $0x570] sm:$0xff]
    %v819 = vld [vmem:[#allocation5 + $0x578] sm:$0xff]
    %v820 = vld [vmem:[#allocation5 + $0x580] sm:$0xff]
    %v821 = vld [vmem:[#allocation5 + $0x588] sm:$0xff]
    %v822 = vld [vmem:[#allocation5 + $0x590] sm:$0xff]
    %v823 = vld [vmem:[#allocation5 + $0x598] sm:$0xff]
    %v824 = vld [vmem:[#allocation5 + $0x5a0] sm:$0xff]
    %v825 = vld [vmem:[#allocation5 + $0x5a8] sm:$0xff]
    %v826 = vld [vmem:[#allocation5 + $0x5b0] sm:$0xff]
    %v827 = vld [vmem:[#allocation5 + $0x5b8] sm:$0xff]
    %v828 = vld [vmem:[#allocation5 + $0x5c0] sm:$0xff]
    %v829 = vld [vmem:[#allocation5 + $0x5c8] sm:$0xff]
    %v830 = vld [vmem:[#allocation5 + $0x5d0] sm:$0xff]
    %v831 = vld [vmem:[#allocation5 + $0x5d8] sm:$0xff]
    %v832 = vld [vmem:[#allocation5 + $0x5e0] sm:$0xff]
    %v833 = vld [vmem:[#allocation5 + $0x5e8] sm:$0xff]
    %v834 = vld [vmem:[#allocation5 + $0x5f0] sm:$0xff]
    %v835 = vld [vmem:[#allocation5 + $0x5f8] sm:$0xff]
    %v836 = vld [vmem:[#allocation5 + $0x600] sm:$0xff]
    %v837 = vld [vmem:[#allocation5 + $0x608] sm:$0xff]
    %v838 = vld [vmem:[#allocation5 + $0x610] sm:$0xff]
    %v839 = vld [vmem:[#allocation5 + $0x618] sm:$0xff]
    %v840 = vld [vmem:[#allocation5 + $0x620] sm:$0xff]
    %v841 = vld [vmem:[#allocation5 + $0x628] sm:$0xff]
    %v842 = vld [vmem:[#allocation5 + $0x630] sm:$0xff]
    %v843 = vld [vmem:[#allocation5 + $0x638] sm:$0xff]
    %v844 = vld [vmem:[#allocation5 + $0x640] sm:$0xff]
    %v845 = vld [vmem:[#allocation5 + $0x648] sm:$0xff]
    %v846 = vld [vmem:[#allocation5 + $0x650] sm:$0xff]
    %v847 = vld [vmem:[#allocation5 + $0x658] sm:$0xff]
    %v848 = vld [vmem:[#allocation5 + $0x660] sm:$0xff]
    %v849 = vld [vmem:[#allocation5 + $0x668] sm:$0xff]
    %v850 = vld [vmem:[#allocation5 + $0x670] sm:$0xff]
    %v851 = vld [vmem:[#allocation5 + $0x678] sm:$0xff]
    %v852 = vld [vmem:[#allocation5 + $0x680] sm:$0xff]
    %v853 = vld [vmem:[#allocation5 + $0x688] sm:$0xff]
    %v854 = vld [vmem:[#allocation5 + $0x690] sm:$0xff]
    %v855 = vld [vmem:[#allocation5 + $0x698] sm:$0xff]
    %v856 = vld [vmem:[#allocation5 + $0x6a0] sm:$0xff]
    %v857 = vld [vmem:[#allocation5 + $0x6a8] sm:$0xff]
    %v858 = vld [vmem:[#allocation5 + $0x6b0] sm:$0xff]
    %v859 = vld [vmem:[#allocation5 + $0x6b8] sm:$0xff]
    %v860 = vld [vmem:[#allocation5 + $0x6c0] sm:$0xff]
    %v861 = vld [vmem:[#allocation5 + $0x6c8] sm:$0xff]
    %v862 = vld [vmem:[#allocation5 + $0x6d0] sm:$0xff]
    %v863 = vld [vmem:[#allocation5 + $0x6d8] sm:$0xff]
    %v864 = vld [vmem:[#allocation5 + $0x6e0] sm:$0xff]
    %v865 = vld [vmem:[#allocation5 + $0x6e8] sm:$0xff]
    %v866 = vld [vmem:[#allocation5 + $0x6f0] sm:$0xff]
    %v867 = vld [vmem:[#allocation5 + $0x6f8] sm:$0xff]
    %v868 = vld [vmem:[#allocation5 + $0x700] sm:$0xff]
    %v869 = vld [vmem:[#allocation5 + $0x708] sm:$0xff]
    %v870 = vld [vmem:[#allocation5 + $0x710] sm:$0xff]
    %v871 = vld [vmem:[#allocation5 + $0x718] sm:$0xff]
    %v872 = vld [vmem:[#allocation5 + $0x720] sm:$0xff]
    %v873 = vld [vmem:[#allocation5 + $0x728] sm:$0xff]
    %v874 = vld [vmem:[#allocation5 + $0x730] sm:$0xff]
    %v875 = vld [vmem:[#allocation5 + $0x738] sm:$0xff]
    %v876 = vld [vmem:[#allocation5 + $0x740] sm:$0xff]
    %v877 = vld [vmem:[#allocation5 + $0x748] sm:$0xff]
    %v878 = vld [vmem:[#allocation5 + $0x750] sm:$0xff]
    %v879 = vld [vmem:[#allocation5 + $0x758] sm:$0xff]
    %v880 = vld [vmem:[#allocation5 + $0x760] sm:$0xff]
    %v881 = vld [vmem:[#allocation5 + $0x768] sm:$0xff]
    %v882 = vld [vmem:[#allocation5 + $0x770] sm:$0xff]
    %v883 = vld [vmem:[#allocation5 + $0x778] sm:$0xff]
    %v884 = vld [vmem:[#allocation5 + $0x780] sm:$0xff]
    %v885 = vld [vmem:[#allocation5 + $0x788] sm:$0xff]
    %v886 = vld [vmem:[#allocation5 + $0x790] sm:$0xff]
    %v887 = vld [vmem:[#allocation5 + $0x798] sm:$0xff]
    %v888 = vld [vmem:[#allocation5 + $0x7a0] sm:$0xff]
    %v889 = vld [vmem:[#allocation5 + $0x7a8] sm:$0xff]
    %v890 = vld [vmem:[#allocation5 + $0x7b0] sm:$0xff]
    %v891 = vld [vmem:[#allocation5 + $0x7b8] sm:$0xff]
    %v892 = vld [vmem:[#allocation5 + $0x7c0] sm:$0xff]
    %v893 = vld [vmem:[#allocation5 + $0x7c8] sm:$0xff]
    %v894 = vld [vmem:[#allocation5 + $0x7d0] sm:$0xff]
    %v895 = vld [vmem:[#allocation5 + $0x7d8] sm:$0xff]
    %v896 = vld [vmem:[#allocation5 + $0x7e0] sm:$0xff]
    %v897 = vld [vmem:[#allocation5 + $0x7e8] sm:$0xff]
    %v898 = vld [vmem:[#allocation5 + $0x7f0] sm:$0xff]
    %v899 = vld [vmem:[#allocation5 + $0x7f8] sm:$0xff]
    %v900 = vld [vmem:[%s5] sm:$0xf]
    %v902 = vperm.slane %v900, 0
    %v903 = vperm.slane %v900, 1
    %v904 = vperm.slane %v900, 2
    %v905 = vperm.slane %v900, 3
    %v1166 = vunpack.c.l.b16 %v644
    %v1167 = vunpack.c.h.b16 %v644
    %v1168 = vunpack.c.l.b16 %v645
    %v1169 = vunpack.c.h.b16 %v645
    %v1170 = vunpack.c.l.b16 %v646
    %v1171 = vunpack.c.h.b16 %v646
    %v1172 = vunpack.c.l.b16 %v647
    %v1173 = vunpack.c.h.b16 %v647
    %v1174 = vunpack.c.l.b16 %v648
    %v1175 = vunpack.c.h.b16 %v648
    %v1176 = vunpack.c.l.b16 %v649
    %v1177 = vunpack.c.h.b16 %v649
    %v1178 = vunpack.c.l.b16 %v650
    %v1179 = vunpack.c.h.b16 %v650
    %v1180 = vunpack.c.l.b16 %v651
    %v1181 = vunpack.c.h.b16 %v651
    %v1182 = vunpack.c.l.b16 %v652
    %v1183 = vunpack.c.h.b16 %v652
    %v1184 = vunpack.c.l.b16 %v653
    %v1185 = vunpack.c.h.b16 %v653
    %v1186 = vunpack.c.l.b16 %v654
    %v1187 = vunpack.c.h.b16 %v654
    %v1188 = vunpack.c.l.b16 %v655
    %v1189 = vunpack.c.h.b16 %v655
    %v1190 = vunpack.c.l.b16 %v656
    %v1191 = vunpack.c.h.b16 %v656
    %v1192 = vunpack.c.l.b16 %v657
    %v1193 = vunpack.c.h.b16 %v657
    %v1194 = vunpack.c.l.b16 %v658
    %v1195 = vunpack.c.h.b16 %v658
    %v1196 = vunpack.c.l.b16 %v659
    %v1197 = vunpack.c.h.b16 %v659
    %v1198 = vunpack.c.l.b16 %v660
    %v1199 = vunpack.c.h.b16 %v660
    %v1200 = vunpack.c.l.b16 %v661
    %v1201 = vunpack.c.h.b16 %v661
    %v1202 = vunpack.c.l.b16 %v662
    %v1203 = vunpack.c.h.b16 %v662
    %v1204 = vunpack.c.l.b16 %v663
    %v1205 = vunpack.c.h.b16 %v663
    %v1206 = vunpack.c.l.b16 %v664
    %v1207 = vunpack.c.h.b16 %v664
    %v1208 = vunpack.c.l.b16 %v665
    %v1209 = vunpack.c.h.b16 %v665
    %v1210 = vunpack.c.l.b16 %v666
    %v1211 = vunpack.c.h.b16 %v666
    %v1212 = vunpack.c.l.b16 %v667
    %v1213 = vunpack.c.h.b16 %v667
    %v1214 = vunpack.c.l.b16 %v668
    %v1215 = vunpack.c.h.b16 %v668
    %v1216 = vunpack.c.l.b16 %v669
    %v1217 = vunpack.c.h.b16 %v669
    %v1218 = vunpack.c.l.b16 %v670
    %v1219 = vunpack.c.h.b16 %v670
    %v1220 = vunpack.c.l.b16 %v671
    %v1221 = vunpack.c.h.b16 %v671
    %v1222 = vunpack.c.l.b16 %v672
    %v1223 = vunpack.c.h.b16 %v672
    %v1224 = vunpack.c.l.b16 %v673
    %v1225 = vunpack.c.h.b16 %v673
    %v1226 = vunpack.c.l.b16 %v674
    %v1227 = vunpack.c.h.b16 %v674
    %v1228 = vunpack.c.l.b16 %v675
    %v1229 = vunpack.c.h.b16 %v675
    %v1230 = vunpack.c.l.b16 %v676
    %v1231 = vunpack.c.h.b16 %v676
    %v1232 = vunpack.c.l.b16 %v677
    %v1233 = vunpack.c.h.b16 %v677
    %v1234 = vunpack.c.l.b16 %v678
    %v1235 = vunpack.c.h.b16 %v678
    %v1236 = vunpack.c.l.b16 %v679
    %v1237 = vunpack.c.h.b16 %v679
    %v1238 = vunpack.c.l.b16 %v680
    %v1239 = vunpack.c.h.b16 %v680
    %v1240 = vunpack.c.l.b16 %v681
    %v1241 = vunpack.c.h.b16 %v681
    %v1242 = vunpack.c.l.b16 %v682
    %v1243 = vunpack.c.h.b16 %v682
    %v1244 = vunpack.c.l.b16 %v683
    %v1245 = vunpack.c.h.b16 %v683
    %v1246 = vunpack.c.l.b16 %v684
    %v1247 = vunpack.c.h.b16 %v684
    %v1248 = vunpack.c.l.b16 %v685
    %v1249 = vunpack.c.h.b16 %v685
    %v1250 = vunpack.c.l.b16 %v686
    %v1251 = vunpack.c.h.b16 %v686
    %v1252 = vunpack.c.l.b16 %v687
    %v1253 = vunpack.c.h.b16 %v687
    %v1254 = vunpack.c.l.b16 %v688
    %v1255 = vunpack.c.h.b16 %v688
    %v1256 = vunpack.c.l.b16 %v689
    %v1257 = vunpack.c.h.b16 %v689
    %v1258 = vunpack.c.l.b16 %v690
    %v1259 = vunpack.c.h.b16 %v690
    %v1260 = vunpack.c.l.b16 %v691
    %v1261 = vunpack.c.h.b16 %v691
    %v1262 = vunpack.c.l.b16 %v692
    %v1263 = vunpack.c.h.b16 %v692
    %v1264 = vunpack.c.l.b16 %v693
    %v1265 = vunpack.c.h.b16 %v693
    %v1266 = vunpack.c.l.b16 %v694
    %v1267 = vunpack.c.h.b16 %v694
    %v1268 = vunpack.c.l.b16 %v695
    %v1269 = vunpack.c.h.b16 %v695
    %v1270 = vunpack.c.l.b16 %v696
    %v1271 = vunpack.c.h.b16 %v696
    %v1272 = vunpack.c.l.b16 %v697
    %v1273 = vunpack.c.h.b16 %v697
    %v1274 = vunpack.c.l.b16 %v698
    %v1275 = vunpack.c.h.b16 %v698
    %v1276 = vunpack.c.l.b16 %v699
    %v1277 = vunpack.c.h.b16 %v699
    %v1278 = vunpack.c.l.b16 %v700
    %v1279 = vunpack.c.h.b16 %v700
    %v1280 = vunpack.c.l.b16 %v701
    %v1281 = vunpack.c.h.b16 %v701
    %v1282 = vunpack.c.l.b16 %v702
    %v1283 = vunpack.c.h.b16 %v702
    %v1284 = vunpack.c.l.b16 %v703
    %v1285 = vunpack.c.h.b16 %v703
    %v1286 = vunpack.c.l.b16 %v704
    %v1287 = vunpack.c.h.b16 %v704
    %v1288 = vunpack.c.l.b16 %v705
    %v1289 = vunpack.c.h.b16 %v705
    %v1290 = vunpack.c.l.b16 %v706
    %v1291 = vunpack.c.h.b16 %v706
    %v1292 = vunpack.c.l.b16 %v707
    %v1293 = vunpack.c.h.b16 %v707
    %v1294 = vunpack.c.l.b16 %v708
    %v1295 = vunpack.c.h.b16 %v708
    %v1296 = vunpack.c.l.b16 %v709
    %v1297 = vunpack.c.h.b16 %v709
    %v1298 = vunpack.c.l.b16 %v710
    %v1299 = vunpack.c.h.b16 %v710
    %v1300 = vunpack.c.l.b16 %v711
    %v1301 = vunpack.c.h.b16 %v711
    %v1302 = vunpack.c.l.b16 %v712
    %v1303 = vunpack.c.h.b16 %v712
    %v1304 = vunpack.c.l.b16 %v713
    %v1305 = vunpack.c.h.b16 %v713
    %v1306 = vunpack.c.l.b16 %v714
    %v1307 = vunpack.c.h.b16 %v714
    %v1308 = vunpack.c.l.b16 %v715
    %v1309 = vunpack.c.h.b16 %v715
    %v1310 = vunpack.c.l.b16 %v716
    %v1311 = vunpack.c.h.b16 %v716
    %v1312 = vunpack.c.l.b16 %v717
    %v1313 = vunpack.c.h.b16 %v717
    %v1314 = vunpack.c.l.b16 %v718
    %v1315 = vunpack.c.h.b16 %v718
    %v1316 = vunpack.c.l.b16 %v719
    %v1317 = vunpack.c.h.b16 %v719
    %v1318 = vunpack.c.l.b16 %v720
    %v1319 = vunpack.c.h.b16 %v720
    %v1320 = vunpack.c.l.b16 %v721
    %v1321 = vunpack.c.h.b16 %v721
    %v1322 = vunpack.c.l.b16 %v722
    %v1323 = vunpack.c.h.b16 %v722
    %v1324 = vunpack.c.l.b16 %v723
    %v1325 = vunpack.c.h.b16 %v723
    %v1326 = vunpack.c.l.b16 %v724
    %v1327 = vunpack.c.h.b16 %v724
    %v1328 = vunpack.c.l.b16 %v725
    %v1329 = vunpack.c.h.b16 %v725
    %v1330 = vunpack.c.l.b16 %v726
    %v1331 = vunpack.c.h.b16 %v726
    %v1332 = vunpack.c.l.b16 %v727
    %v1333 = vunpack.c.h.b16 %v727
    %v1334 = vunpack.c.l.b16 %v728
    %v1335 = vunpack.c.h.b16 %v728
    %v1336 = vunpack.c.l.b16 %v729
    %v1337 = vunpack.c.h.b16 %v729
    %v1338 = vunpack.c.l.b16 %v730
    %v1339 = vunpack.c.h.b16 %v730
    %v1340 = vunpack.c.l.b16 %v731
    %v1341 = vunpack.c.h.b16 %v731
    %v1342 = vunpack.c.l.b16 %v732
    %v1343 = vunpack.c.h.b16 %v732
    %v1344 = vunpack.c.l.b16 %v733
    %v1345 = vunpack.c.h.b16 %v733
    %v1346 = vunpack.c.l.b16 %v734
    %v1347 = vunpack.c.h.b16 %v734
    %v1348 = vunpack.c.l.b16 %v735
    %v1349 = vunpack.c.h.b16 %v735
    %v1350 = vunpack.c.l.b16 %v736
    %v1351 = vunpack.c.h.b16 %v736
    %v1352 = vunpack.c.l.b16 %v737
    %v1353 = vunpack.c.h.b16 %v737
    %v1354 = vunpack.c.l.b16 %v738
    %v1355 = vunpack.c.h.b16 %v738
    %v1356 = vunpack.c.l.b16 %v739
    %v1357 = vunpack.c.h.b16 %v739
    %v1358 = vunpack.c.l.b16 %v740
    %v1359 = vunpack.c.h.b16 %v740
    %v1360 = vunpack.c.l.b16 %v741
    %v1361 = vunpack.c.h.b16 %v741
    %v1362 = vunpack.c.l.b16 %v742
    %v1363 = vunpack.c.h.b16 %v742
    %v1364 = vunpack.c.l.b16 %v743
    %v1365 = vunpack.c.h.b16 %v743
    %v1366 = vunpack.c.l.b16 %v744
    %v1367 = vunpack.c.h.b16 %v744
    %v1368 = vunpack.c.l.b16 %v745
    %v1369 = vunpack.c.h.b16 %v745
    %v1370 = vunpack.c.l.b16 %v746
    %v1371 = vunpack.c.h.b16 %v746
    %v1372 = vunpack.c.l.b16 %v747
    %v1373 = vunpack.c.h.b16 %v747
    %v1374 = vunpack.c.l.b16 %v748
    %v1375 = vunpack.c.h.b16 %v748
    %v1376 = vunpack.c.l.b16 %v749
    %v1377 = vunpack.c.h.b16 %v749
    %v1378 = vunpack.c.l.b16 %v750
    %v1379 = vunpack.c.h.b16 %v750
    %v1380 = vunpack.c.l.b16 %v751
    %v1381 = vunpack.c.h.b16 %v751
    %v1382 = vunpack.c.l.b16 %v752
    %v1383 = vunpack.c.h.b16 %v752
    %v1384 = vunpack.c.l.b16 %v753
    %v1385 = vunpack.c.h.b16 %v753
    %v1386 = vunpack.c.l.b16 %v754
    %v1387 = vunpack.c.h.b16 %v754
    %v1388 = vunpack.c.l.b16 %v755
    %v1389 = vunpack.c.h.b16 %v755
    %v1390 = vunpack.c.l.b16 %v756
    %v1391 = vunpack.c.h.b16 %v756
    %v1392 = vunpack.c.l.b16 %v757
    %v1393 = vunpack.c.h.b16 %v757
    %v1394 = vunpack.c.l.b16 %v758
    %v1395 = vunpack.c.h.b16 %v758
    %v1396 = vunpack.c.l.b16 %v759
    %v1397 = vunpack.c.h.b16 %v759
    %v1398 = vunpack.c.l.b16 %v760
    %v1399 = vunpack.c.h.b16 %v760
    %v1400 = vunpack.c.l.b16 %v761
    %v1401 = vunpack.c.h.b16 %v761
    %v1402 = vunpack.c.l.b16 %v762
    %v1403 = vunpack.c.h.b16 %v762
    %v1404 = vunpack.c.l.b16 %v763
    %v1405 = vunpack.c.h.b16 %v763
    %v1406 = vunpack.c.l.b16 %v764
    %v1407 = vunpack.c.h.b16 %v764
    %v1408 = vunpack.c.l.b16 %v765
    %v1409 = vunpack.c.h.b16 %v765
    %v1410 = vunpack.c.l.b16 %v766
    %v1411 = vunpack.c.h.b16 %v766
    %v1412 = vunpack.c.l.b16 %v767
    %v1413 = vunpack.c.h.b16 %v767
    %v1414 = vunpack.c.l.b16 %v768
    %v1415 = vunpack.c.h.b16 %v768
    %v1416 = vunpack.c.l.b16 %v769
    %v1417 = vunpack.c.h.b16 %v769
    %v1418 = vunpack.c.l.b16 %v770
    %v1419 = vunpack.c.h.b16 %v770
    %v1420 = vunpack.c.l.b16 %v771
    %v1421 = vunpack.c.h.b16 %v771
    %v1422 = vunpack.c.l.b16 %v772
    %v1423 = vunpack.c.h.b16 %v772
    %v1424 = vunpack.c.l.b16 %v773
    %v1425 = vunpack.c.h.b16 %v773
    %v1426 = vunpack.c.l.b16 %v774
    %v1427 = vunpack.c.h.b16 %v774
    %v1428 = vunpack.c.l.b16 %v775
    %v1429 = vunpack.c.h.b16 %v775
    %v1430 = vunpack.c.l.b16 %v776
    %v1431 = vunpack.c.h.b16 %v776
    %v1432 = vunpack.c.l.b16 %v777
    %v1433 = vunpack.c.h.b16 %v777
    %v1434 = vunpack.c.l.b16 %v778
    %v1435 = vunpack.c.h.b16 %v778
    %v1436 = vunpack.c.l.b16 %v779
    %v1437 = vunpack.c.h.b16 %v779
    %v1438 = vunpack.c.l.b16 %v780
    %v1439 = vunpack.c.h.b16 %v780
    %v1440 = vunpack.c.l.b16 %v781
    %v1441 = vunpack.c.h.b16 %v781
    %v1442 = vunpack.c.l.b16 %v782
    %v1443 = vunpack.c.h.b16 %v782
    %v1444 = vunpack.c.l.b16 %v783
    %v1445 = vunpack.c.h.b16 %v783
    %v1446 = vunpack.c.l.b16 %v784
    %v1447 = vunpack.c.h.b16 %v784
    %v1448 = vunpack.c.l.b16 %v785
    %v1449 = vunpack.c.h.b16 %v785
    %v1450 = vunpack.c.l.b16 %v786
    %v1451 = vunpack.c.h.b16 %v786
    %v1452 = vunpack.c.l.b16 %v787
    %v1453 = vunpack.c.h.b16 %v787
    %v1454 = vunpack.c.l.b16 %v788
    %v1455 = vunpack.c.h.b16 %v788
    %v1456 = vunpack.c.l.b16 %v789
    %v1457 = vunpack.c.h.b16 %v789
    %v1458 = vunpack.c.l.b16 %v790
    %v1459 = vunpack.c.h.b16 %v790
    %v1460 = vunpack.c.l.b16 %v791
    %v1461 = vunpack.c.h.b16 %v791
    %v1462 = vunpack.c.l.b16 %v792
    %v1463 = vunpack.c.h.b16 %v792
    %v1464 = vunpack.c.l.b16 %v793
    %v1465 = vunpack.c.h.b16 %v793
    %v1466 = vunpack.c.l.b16 %v794
    %v1467 = vunpack.c.h.b16 %v794
    %v1468 = vunpack.c.l.b16 %v795
    %v1469 = vunpack.c.h.b16 %v795
    %v1470 = vunpack.c.l.b16 %v796
    %v1471 = vunpack.c.h.b16 %v796
    %v1472 = vunpack.c.l.b16 %v797
    %v1473 = vunpack.c.h.b16 %v797
    %v1474 = vunpack.c.l.b16 %v798
    %v1475 = vunpack.c.h.b16 %v798
    %v1476 = vunpack.c.l.b16 %v799
    %v1477 = vunpack.c.h.b16 %v799
    %v1478 = vunpack.c.l.b16 %v800
    %v1479 = vunpack.c.h.b16 %v800
    %v1480 = vunpack.c.l.b16 %v801
    %v1481 = vunpack.c.h.b16 %v801
    %v1482 = vunpack.c.l.b16 %v802
    %v1483 = vunpack.c.h.b16 %v802
    %v1484 = vunpack.c.l.b16 %v803
    %v1485 = vunpack.c.h.b16 %v803
    %v1486 = vunpack.c.l.b16 %v804
    %v1487 = vunpack.c.h.b16 %v804
    %v1488 = vunpack.c.l.b16 %v805
    %v1489 = vunpack.c.h.b16 %v805
    %v1490 = vunpack.c.l.b16 %v806
    %v1491 = vunpack.c.h.b16 %v806
    %v1492 = vunpack.c.l.b16 %v807
    %v1493 = vunpack.c.h.b16 %v807
    %v1494 = vunpack.c.l.b16 %v808
    %v1495 = vunpack.c.h.b16 %v808
    %v1496 = vunpack.c.l.b16 %v809
    %v1497 = vunpack.c.h.b16 %v809
    %v1498 = vunpack.c.l.b16 %v810
    %v1499 = vunpack.c.h.b16 %v810
    %v1500 = vunpack.c.l.b16 %v811
    %v1501 = vunpack.c.h.b16 %v811
    %v1502 = vunpack.c.l.b16 %v812
    %v1503 = vunpack.c.h.b16 %v812
    %v1504 = vunpack.c.l.b16 %v813
    %v1505 = vunpack.c.h.b16 %v813
    %v1506 = vunpack.c.l.b16 %v814
    %v1507 = vunpack.c.h.b16 %v814
    %v1508 = vunpack.c.l.b16 %v815
    %v1509 = vunpack.c.h.b16 %v815
    %v1510 = vunpack.c.l.b16 %v816
    %v1511 = vunpack.c.h.b16 %v816
    %v1512 = vunpack.c.l.b16 %v817
    %v1513 = vunpack.c.h.b16 %v817
    %v1514 = vunpack.c.l.b16 %v818
    %v1515 = vunpack.c.h.b16 %v818
    %v1516 = vunpack.c.l.b16 %v819
    %v1517 = vunpack.c.h.b16 %v819
    %v1518 = vunpack.c.l.b16 %v820
    %v1519 = vunpack.c.h.b16 %v820
    %v1520 = vunpack.c.l.b16 %v821
    %v1521 = vunpack.c.h.b16 %v821
    %v1522 = vunpack.c.l.b16 %v822
    %v1523 = vunpack.c.h.b16 %v822
    %v1524 = vunpack.c.l.b16 %v823
    %v1525 = vunpack.c.h.b16 %v823
    %v1526 = vunpack.c.l.b16 %v824
    %v1527 = vunpack.c.h.b16 %v824
    %v1528 = vunpack.c.l.b16 %v825
    %v1529 = vunpack.c.h.b16 %v825
    %v1530 = vunpack.c.l.b16 %v826
    %v1531 = vunpack.c.h.b16 %v826
    %v1532 = vunpack.c.l.b16 %v827
    %v1533 = vunpack.c.h.b16 %v827
    %v1534 = vunpack.c.l.b16 %v828
    %v1535 = vunpack.c.h.b16 %v828
    %v1536 = vunpack.c.l.b16 %v829
    %v1537 = vunpack.c.h.b16 %v829
    %v1538 = vunpack.c.l.b16 %v830
    %v1539 = vunpack.c.h.b16 %v830
    %v1540 = vunpack.c.l.b16 %v831
    %v1541 = vunpack.c.h.b16 %v831
    %v1542 = vunpack.c.l.b16 %v832
    %v1543 = vunpack.c.h.b16 %v832
    %v1544 = vunpack.c.l.b16 %v833
    %v1545 = vunpack.c.h.b16 %v833
    %v1546 = vunpack.c.l.b16 %v834
    %v1547 = vunpack.c.h.b16 %v834
    %v1548 = vunpack.c.l.b16 %v835
    %v1549 = vunpack.c.h.b16 %v835
    %v1550 = vunpack.c.l.b16 %v836
    %v1551 = vunpack.c.h.b16 %v836
    %v1552 = vunpack.c.l.b16 %v837
    %v1553 = vunpack.c.h.b16 %v837
    %v1554 = vunpack.c.l.b16 %v838
    %v1555 = vunpack.c.h.b16 %v838
    %v1556 = vunpack.c.l.b16 %v839
    %v1557 = vunpack.c.h.b16 %v839
    %v1558 = vunpack.c.l.b16 %v840
    %v1559 = vunpack.c.h.b16 %v840
    %v1560 = vunpack.c.l.b16 %v841
    %v1561 = vunpack.c.h.b16 %v841
    %v1562 = vunpack.c.l.b16 %v842
    %v1563 = vunpack.c.h.b16 %v842
    %v1564 = vunpack.c.l.b16 %v843
    %v1565 = vunpack.c.h.b16 %v843
    %v1566 = vunpack.c.l.b16 %v844
    %v1567 = vunpack.c.h.b16 %v844
    %v1568 = vunpack.c.l.b16 %v845
    %v1569 = vunpack.c.h.b16 %v845
    %v1570 = vunpack.c.l.b16 %v846
    %v1571 = vunpack.c.h.b16 %v846
    %v1572 = vunpack.c.l.b16 %v847
    %v1573 = vunpack.c.h.b16 %v847
    %v1574 = vunpack.c.l.b16 %v848
    %v1575 = vunpack.c.h.b16 %v848
    %v1576 = vunpack.c.l.b16 %v849
    %v1577 = vunpack.c.h.b16 %v849
    %v1578 = vunpack.c.l.b16 %v850
    %v1579 = vunpack.c.h.b16 %v850
    %v1580 = vunpack.c.l.b16 %v851
    %v1581 = vunpack.c.h.b16 %v851
    %v1582 = vunpack.c.l.b16 %v852
    %v1583 = vunpack.c.h.b16 %v852
    %v1584 = vunpack.c.l.b16 %v853
    %v1585 = vunpack.c.h.b16 %v853
    %v1586 = vunpack.c.l.b16 %v854
    %v1587 = vunpack.c.h.b16 %v854
    %v1588 = vunpack.c.l.b16 %v855
    %v1589 = vunpack.c.h.b16 %v855
    %v1590 = vunpack.c.l.b16 %v856
    %v1591 = vunpack.c.h.b16 %v856
    %v1592 = vunpack.c.l.b16 %v857
    %v1593 = vunpack.c.h.b16 %v857
    %v1594 = vunpack.c.l.b16 %v858
    %v1595 = vunpack.c.h.b16 %v858
    %v1596 = vunpack.c.l.b16 %v859
    %v1597 = vunpack.c.h.b16 %v859
    %v1598 = vunpack.c.l.b16 %v860
    %v1599 = vunpack.c.h.b16 %v860
    %v1600 = vunpack.c.l.b16 %v861
    %v1601 = vunpack.c.h.b16 %v861
    %v1602 = vunpack.c.l.b16 %v862
    %v1603 = vunpack.c.h.b16 %v862
    %v1604 = vunpack.c.l.b16 %v863
    %v1605 = vunpack.c.h.b16 %v863
    %v1606 = vunpack.c.l.b16 %v864
    %v1607 = vunpack.c.h.b16 %v864
    %v1608 = vunpack.c.l.b16 %v865
    %v1609 = vunpack.c.h.b16 %v865
    %v1610 = vunpack.c.l.b16 %v866
    %v1611 = vunpack.c.h.b16 %v866
    %v1612 = vunpack.c.l.b16 %v867
    %v1613 = vunpack.c.h.b16 %v867
    %v1614 = vunpack.c.l.b16 %v868
    %v1615 = vunpack.c.h.b16 %v868
    %v1616 = vunpack.c.l.b16 %v869
    %v1617 = vunpack.c.h.b16 %v869
    %v1618 = vunpack.c.l.b16 %v870
    %v1619 = vunpack.c.h.b16 %v870
    %v1620 = vunpack.c.l.b16 %v871
    %v1621 = vunpack.c.h.b16 %v871
    %v1622 = vunpack.c.l.b16 %v872
    %v1623 = vunpack.c.h.b16 %v872
    %v1624 = vunpack.c.l.b16 %v873
    %v1625 = vunpack.c.h.b16 %v873
    %v1626 = vunpack.c.l.b16 %v874
    %v1627 = vunpack.c.h.b16 %v874
    %v1628 = vunpack.c.l.b16 %v875
    %v1629 = vunpack.c.h.b16 %v875
    %v1630 = vunpack.c.l.b16 %v876
    %v1631 = vunpack.c.h.b16 %v876
    %v1632 = vunpack.c.l.b16 %v877
    %v1633 = vunpack.c.h.b16 %v877
    %v1634 = vunpack.c.l.b16 %v878
    %v1635 = vunpack.c.h.b16 %v878
    %v1636 = vunpack.c.l.b16 %v879
    %v1637 = vunpack.c.h.b16 %v879
    %v1638 = vunpack.c.l.b16 %v880
    %v1639 = vunpack.c.h.b16 %v880
    %v1640 = vunpack.c.l.b16 %v881
    %v1641 = vunpack.c.h.b16 %v881
    %v1642 = vunpack.c.l.b16 %v882
    %v1643 = vunpack.c.h.b16 %v882
    %v1644 = vunpack.c.l.b16 %v883
    %v1645 = vunpack.c.h.b16 %v883
    %v1646 = vunpack.c.l.b16 %v884
    %v1647 = vunpack.c.h.b16 %v884
    %v1648 = vunpack.c.l.b16 %v885
    %v1649 = vunpack.c.h.b16 %v885
    %v1650 = vunpack.c.l.b16 %v886
    %v1651 = vunpack.c.h.b16 %v886
    %v1652 = vunpack.c.l.b16 %v887
    %v1653 = vunpack.c.h.b16 %v887
    %v1654 = vunpack.c.l.b16 %v888
    %v1655 = vunpack.c.h.b16 %v888
    %v1656 = vunpack.c.l.b16 %v889
    %v1657 = vunpack.c.h.b16 %v889
    %v1658 = vunpack.c.l.b16 %v890
    %v1659 = vunpack.c.h.b16 %v890
    %v1660 = vunpack.c.l.b16 %v891
    %v1661 = vunpack.c.h.b16 %v891
    %v1662 = vunpack.c.l.b16 %v892
    %v1663 = vunpack.c.h.b16 %v892
    %v1664 = vunpack.c.l.b16 %v893
    %v1665 = vunpack.c.h.b16 %v893
    %v1666 = vunpack.c.l.b16 %v894
    %v1667 = vunpack.c.h.b16 %v894
    %v1668 = vunpack.c.l.b16 %v895
    %v1669 = vunpack.c.h.b16 %v895
    %v1670 = vunpack.c.l.b16 %v896
    %v1671 = vunpack.c.h.b16 %v896
    %v1672 = vunpack.c.l.b16 %v897
    %v1673 = vunpack.c.h.b16 %v897
    %v1674 = vunpack.c.l.b16 %v898
    %v1675 = vunpack.c.h.b16 %v898
    %v1676 = vunpack.c.l.b16 %v899
    %v1677 = vunpack.c.h.b16 %v899
    %v1678 = vpack.c.b16 %v1170, %v1166
    %v1679 = vpack.c.b16 %v1171, %v1167
    %v1680 = vpack.c.b16 %v1172, %v1168
    %v1681 = vpack.c.b16 %v1173, %v1169
    %v1682 = vpack.c.b16 %v1178, %v1174
    %v1683 = vpack.c.b16 %v1179, %v1175
    %v1684 = vpack.c.b16 %v1180, %v1176
    %v1685 = vpack.c.b16 %v1181, %v1177
    %v1686 = vpack.c.b16 %v1186, %v1182
    %v1687 = vpack.c.b16 %v1187, %v1183
    %v1688 = vpack.c.b16 %v1188, %v1184
    %v1689 = vpack.c.b16 %v1189, %v1185
    %v1690 = vpack.c.b16 %v1194, %v1190
    %v1691 = vpack.c.b16 %v1195, %v1191
    %v1692 = vpack.c.b16 %v1196, %v1192
    %v1693 = vpack.c.b16 %v1197, %v1193
    %v1694 = vpack.c.b16 %v1202, %v1198
    %v1695 = vpack.c.b16 %v1203, %v1199
    %v1696 = vpack.c.b16 %v1204, %v1200
    %v1697 = vpack.c.b16 %v1205, %v1201
    %v1698 = vpack.c.b16 %v1210, %v1206
    %v1699 = vpack.c.b16 %v1211, %v1207
    %v1700 = vpack.c.b16 %v1212, %v1208
    %v1701 = vpack.c.b16 %v1213, %v1209
    %v1702 = vpack.c.b16 %v1218, %v1214
    %v1703 = vpack.c.b16 %v1219, %v1215
    %v1704 = vpack.c.b16 %v1220, %v1216
    %v1705 = vpack.c.b16 %v1221, %v1217
    %v1706 = vpack.c.b16 %v1226, %v1222
    %v1707 = vpack.c.b16 %v1227, %v1223
    %v1708 = vpack.c.b16 %v1228, %v1224
    %v1709 = vpack.c.b16 %v1229, %v1225
    %v1710 = vpack.c.b16 %v1234, %v1230
    %v1711 = vpack.c.b16 %v1235, %v1231
    %v1712 = vpack.c.b16 %v1236, %v1232
    %v1713 = vpack.c.b16 %v1237, %v1233
    %v1714 = vpack.c.b16 %v1242, %v1238
    %v1715 = vpack.c.b16 %v1243, %v1239
    %v1716 = vpack.c.b16 %v1244, %v1240
    %v1717 = vpack.c.b16 %v1245, %v1241
    %v1718 = vpack.c.b16 %v1250, %v1246
    %v1719 = vpack.c.b16 %v1251, %v1247
    %v1720 = vpack.c.b16 %v1252, %v1248
    %v1721 = vpack.c.b16 %v1253, %v1249
    %v1722 = vpack.c.b16 %v1258, %v1254
    %v1723 = vpack.c.b16 %v1259, %v1255
    %v1724 = vpack.c.b16 %v1260, %v1256
    %v1725 = vpack.c.b16 %v1261, %v1257
    %v1726 = vpack.c.b16 %v1266, %v1262
    %v1727 = vpack.c.b16 %v1267, %v1263
    %v1728 = vpack.c.b16 %v1268, %v1264
    %v1729 = vpack.c.b16 %v1269, %v1265
    %v1730 = vpack.c.b16 %v1274, %v1270
    %v1731 = vpack.c.b16 %v1275, %v1271
    %v1732 = vpack.c.b16 %v1276, %v1272
    %v1733 = vpack.c.b16 %v1277, %v1273
    %v1734 = vpack.c.b16 %v1282, %v1278
    %v1735 = vpack.c.b16 %v1283, %v1279
    %v1736 = vpack.c.b16 %v1284, %v1280
    %v1737 = vpack.c.b16 %v1285, %v1281
    %v1738 = vpack.c.b16 %v1290, %v1286
    %v1739 = vpack.c.b16 %v1291, %v1287
    %v1740 = vpack.c.b16 %v1292, %v1288
    %v1741 = vpack.c.b16 %v1293, %v1289
    %v1742 = vpack.c.b16 %v1298, %v1294
    %v1743 = vpack.c.b16 %v1299, %v1295
    %v1744 = vpack.c.b16 %v1300, %v1296
    %v1745 = vpack.c.b16 %v1301, %v1297
    %v1746 = vpack.c.b16 %v1306, %v1302
    %v1747 = vpack.c.b16 %v1307, %v1303
    %v1748 = vpack.c.b16 %v1308, %v1304
    %v1749 = vpack.c.b16 %v1309, %v1305
    %v1750 = vpack.c.b16 %v1314, %v1310
    %v1751 = vpack.c.b16 %v1315, %v1311
    %v1752 = vpack.c.b16 %v1316, %v1312
    %v1753 = vpack.c.b16 %v1317, %v1313
    %v1754 = vpack.c.b16 %v1322, %v1318
    %v1755 = vpack.c.b16 %v1323, %v1319
    %v1756 = vpack.c.b16 %v1324, %v1320
    %v1757 = vpack.c.b16 %v1325, %v1321
    %v1758 = vpack.c.b16 %v1330, %v1326
    %v1759 = vpack.c.b16 %v1331, %v1327
    %v1760 = vpack.c.b16 %v1332, %v1328
    %v1761 = vpack.c.b16 %v1333, %v1329
    %v1762 = vpack.c.b16 %v1338, %v1334
    %v1763 = vpack.c.b16 %v1339, %v1335
    %v1764 = vpack.c.b16 %v1340, %v1336
    %v1765 = vpack.c.b16 %v1341, %v1337
    %v1766 = vpack.c.b16 %v1346, %v1342
    %v1767 = vpack.c.b16 %v1347, %v1343
    %v1768 = vpack.c.b16 %v1348, %v1344
    %v1769 = vpack.c.b16 %v1349, %v1345
    %v1770 = vpack.c.b16 %v1354, %v1350
    %v1771 = vpack.c.b16 %v1355, %v1351
    %v1772 = vpack.c.b16 %v1356, %v1352
    %v1773 = vpack.c.b16 %v1357, %v1353
    %v1774 = vpack.c.b16 %v1362, %v1358
    %v1775 = vpack.c.b16 %v1363, %v1359
    %v1776 = vpack.c.b16 %v1364, %v1360
    %v1777 = vpack.c.b16 %v1365, %v1361
    %v1778 = vpack.c.b16 %v1370, %v1366
    %v1779 = vpack.c.b16 %v1371, %v1367
    %v1780 = vpack.c.b16 %v1372, %v1368
    %v1781 = vpack.c.b16 %v1373, %v1369
    %v1782 = vpack.c.b16 %v1378, %v1374
    %v1783 = vpack.c.b16 %v1379, %v1375
    %v1784 = vpack.c.b16 %v1380, %v1376
    %v1785 = vpack.c.b16 %v1381, %v1377
    %v1786 = vpack.c.b16 %v1386, %v1382
    %v1787 = vpack.c.b16 %v1387, %v1383
    %v1788 = vpack.c.b16 %v1388, %v1384
    %v1789 = vpack.c.b16 %v1389, %v1385
    %v1790 = vpack.c.b16 %v1394, %v1390
    %v1791 = vpack.c.b16 %v1395, %v1391
    %v1792 = vpack.c.b16 %v1396, %v1392
    %v1793 = vpack.c.b16 %v1397, %v1393
    %v1794 = vpack.c.b16 %v1402, %v1398
    %v1795 = vpack.c.b16 %v1403, %v1399
    %v1796 = vpack.c.b16 %v1404, %v1400
    %v1797 = vpack.c.b16 %v1405, %v1401
    %v1798 = vpack.c.b16 %v1410, %v1406
    %v1799 = vpack.c.b16 %v1411, %v1407
    %v1800 = vpack.c.b16 %v1412, %v1408
    %v1801 = vpack.c.b16 %v1413, %v1409
    %v1802 = vpack.c.b16 %v1418, %v1414
    %v1803 = vpack.c.b16 %v1419, %v1415
    %v1804 = vpack.c.b16 %v1420, %v1416
    %v1805 = vpack.c.b16 %v1421, %v1417
    %v1806 = vpack.c.b16 %v1426, %v1422
    %v1807 = vpack.c.b16 %v1427, %v1423
    %v1808 = vpack.c.b16 %v1428, %v1424
    %v1809 = vpack.c.b16 %v1429, %v1425
    %v1810 = vpack.c.b16 %v1434, %v1430
    %v1811 = vpack.c.b16 %v1435, %v1431
    %v1812 = vpack.c.b16 %v1436, %v1432
    %v1813 = vpack.c.b16 %v1437, %v1433
    %v1814 = vpack.c.b16 %v1442, %v1438
    %v1815 = vpack.c.b16 %v1443, %v1439
    %v1816 = vpack.c.b16 %v1444, %v1440
    %v1817 = vpack.c.b16 %v1445, %v1441
    %v1818 = vpack.c.b16 %v1450, %v1446
    %v1819 = vpack.c.b16 %v1451, %v1447
    %v1820 = vpack.c.b16 %v1452, %v1448
    %v1821 = vpack.c.b16 %v1453, %v1449
    %v1822 = vpack.c.b16 %v1458, %v1454
    %v1823 = vpack.c.b16 %v1459, %v1455
    %v1824 = vpack.c.b16 %v1460, %v1456
    %v1825 = vpack.c.b16 %v1461, %v1457
    %v1826 = vpack.c.b16 %v1466, %v1462
    %v1827 = vpack.c.b16 %v1467, %v1463
    %v1828 = vpack.c.b16 %v1468, %v1464
    %v1829 = vpack.c.b16 %v1469, %v1465
    %v1830 = vpack.c.b16 %v1474, %v1470
    %v1831 = vpack.c.b16 %v1475, %v1471
    %v1832 = vpack.c.b16 %v1476, %v1472
    %v1833 = vpack.c.b16 %v1477, %v1473
    %v1834 = vpack.c.b16 %v1482, %v1478
    %v1835 = vpack.c.b16 %v1483, %v1479
    %v1836 = vpack.c.b16 %v1484, %v1480
    %v1837 = vpack.c.b16 %v1485, %v1481
    %v1838 = vpack.c.b16 %v1490, %v1486
    %v1839 = vpack.c.b16 %v1491, %v1487
    %v1840 = vpack.c.b16 %v1492, %v1488
    %v1841 = vpack.c.b16 %v1493, %v1489
    %v1842 = vpack.c.b16 %v1498, %v1494
    %v1843 = vpack.c.b16 %v1499, %v1495
    %v1844 = vpack.c.b16 %v1500, %v1496
    %v1845 = vpack.c.b16 %v1501, %v1497
    %v1846 = vpack.c.b16 %v1506, %v1502
    %v1847 = vpack.c.b16 %v1507, %v1503
    %v1848 = vpack.c.b16 %v1508, %v1504
    %v1849 = vpack.c.b16 %v1509, %v1505
    %v1850 = vpack.c.b16 %v1514, %v1510
    %v1851 = vpack.c.b16 %v1515, %v1511
    %v1852 = vpack.c.b16 %v1516, %v1512
    %v1853 = vpack.c.b16 %v1517, %v1513
    %v1854 = vpack.c.b16 %v1522, %v1518
    %v1855 = vpack.c.b16 %v1523, %v1519
    %v1856 = vpack.c.b16 %v1524, %v1520
    %v1857 = vpack.c.b16 %v1525, %v1521
    %v1858 = vpack.c.b16 %v1530, %v1526
    %v1859 = vpack.c.b16 %v1531, %v1527
    %v1860 = vpack.c.b16 %v1532, %v1528
    %v1861 = vpack.c.b16 %v1533, %v1529
    %v1862 = vpack.c.b16 %v1538, %v1534
    %v1863 = vpack.c.b16 %v1539, %v1535
    %v1864 = vpack.c.b16 %v1540, %v1536
    %v1865 = vpack.c.b16 %v1541, %v1537
    %v1866 = vpack.c.b16 %v1546, %v1542
    %v1867 = vpack.c.b16 %v1547, %v1543
    %v1868 = vpack.c.b16 %v1548, %v1544
    %v1869 = vpack.c.b16 %v1549, %v1545
    %v1870 = vpack.c.b16 %v1554, %v1550
    %v1871 = vpack.c.b16 %v1555, %v1551
    %v1872 = vpack.c.b16 %v1556, %v1552
    %v1873 = vpack.c.b16 %v1557, %v1553
    %v1874 = vpack.c.b16 %v1562, %v1558
    %v1875 = vpack.c.b16 %v1563, %v1559
    %v1876 = vpack.c.b16 %v1564, %v1560
    %v1877 = vpack.c.b16 %v1565, %v1561
    %v1878 = vpack.c.b16 %v1570, %v1566
    %v1879 = vpack.c.b16 %v1571, %v1567
    %v1880 = vpack.c.b16 %v1572, %v1568
    %v1881 = vpack.c.b16 %v1573, %v1569
    %v1882 = vpack.c.b16 %v1578, %v1574
    %v1883 = vpack.c.b16 %v1579, %v1575
    %v1884 = vpack.c.b16 %v1580, %v1576
    %v1885 = vpack.c.b16 %v1581, %v1577
    %v1886 = vpack.c.b16 %v1586, %v1582
    %v1887 = vpack.c.b16 %v1587, %v1583
    %v1888 = vpack.c.b16 %v1588, %v1584
    %v1889 = vpack.c.b16 %v1589, %v1585
    %v1890 = vpack.c.b16 %v1594, %v1590
    %v1891 = vpack.c.b16 %v1595, %v1591
    %v1892 = vpack.c.b16 %v1596, %v1592
    %v1893 = vpack.c.b16 %v1597, %v1593
    %v1894 = vpack.c.b16 %v1602, %v1598
    %v1895 = vpack.c.b16 %v1603, %v1599
    %v1896 = vpack.c.b16 %v1604, %v1600
    %v1897 = vpack.c.b16 %v1605, %v1601
    %v1898 = vpack.c.b16 %v1610, %v1606
    %v1899 = vpack.c.b16 %v1611, %v1607
    %v1900 = vpack.c.b16 %v1612, %v1608
    %v1901 = vpack.c.b16 %v1613, %v1609
    %v1902 = vpack.c.b16 %v1618, %v1614
    %v1903 = vpack.c.b16 %v1619, %v1615
    %v1904 = vpack.c.b16 %v1620, %v1616
    %v1905 = vpack.c.b16 %v1621, %v1617
    %v1906 = vpack.c.b16 %v1626, %v1622
    %v1907 = vpack.c.b16 %v1627, %v1623
    %v1908 = vpack.c.b16 %v1628, %v1624
    %v1909 = vpack.c.b16 %v1629, %v1625
    %v1910 = vpack.c.b16 %v1634, %v1630
    %v1911 = vpack.c.b16 %v1635, %v1631
    %v1912 = vpack.c.b16 %v1636, %v1632
    %v1913 = vpack.c.b16 %v1637, %v1633
    %v1914 = vpack.c.b16 %v1642, %v1638
    %v1915 = vpack.c.b16 %v1643, %v1639
    %v1916 = vpack.c.b16 %v1644, %v1640
    %v1917 = vpack.c.b16 %v1645, %v1641
    %v1918 = vpack.c.b16 %v1650, %v1646
    %v1919 = vpack.c.b16 %v1651, %v1647
    %v1920 = vpack.c.b16 %v1652, %v1648
    %v1921 = vpack.c.b16 %v1653, %v1649
    %v1922 = vpack.c.b16 %v1658, %v1654
    %v1923 = vpack.c.b16 %v1659, %v1655
    %v1924 = vpack.c.b16 %v1660, %v1656
    %v1925 = vpack.c.b16 %v1661, %v1657
    %v1926 = vpack.c.b16 %v1666, %v1662
    %v1927 = vpack.c.b16 %v1667, %v1663
    %v1928 = vpack.c.b16 %v1668, %v1664
    %v1929 = vpack.c.b16 %v1669, %v1665
    %v1930 = vpack.c.b16 %v1674, %v1670
    %v1931 = vpack.c.b16 %v1675, %v1671
    %v1932 = vpack.c.b16 %v1676, %v1672
    %v1933 = vpack.c.b16 %v1677, %v1673
    %2190 = vmatpush.bf16.msra.mxu0 %v1706
    %2191 = vmatpush.bf16.msra.mxu0 %v1702
    %2192 = vmatpush.bf16.msra.mxu0 %v1698
    %2193 = vmatpush.bf16.msra.mxu0 %v1694
    %2194 = vmatpush.bf16.msra.mxu0 %v1690
    %2195 = vmatpush.bf16.msra.mxu0 %v1686
    %2196 = vmatpush.bf16.msra.mxu0 %v1682
    %2197 = vmatpush.bf16.msra.mxu0 %v1678
    %2198 = vmatmul.bf16.gmra.mxu0 %v636
    %v2199 = vpop.f32.mrf.mxu0
    %v2200 = vadd.f32 %v902, %v2199
    %v2201 = vpop.f32.mrf.mxu0
    %2202 = vdwg.mxu0
    %2203 = vmatpush.bf16.msra.mxu0 %v1738
    %2204 = vmatpush.bf16.msra.mxu0 %v1734
    %2205 = vmatpush.bf16.msra.mxu0 %v1730
    %2206 = vmatpush.bf16.msra.mxu0 %v1726
    %2207 = vmatpush.bf16.msra.mxu0 %v1722
    %2208 = vmatpush.bf16.msra.mxu0 %v1718
    %2209 = vmatpush.bf16.msra.mxu0 %v1714
    %2210 = vmatpush.bf16.msra.mxu0 %v1710
    %2211 = vmatmul.bf16.gmra.mxu0 %v637
    %v2212 = vpop.f32.mrf.mxu0
    %v2213 = vadd.f32 %v2200, %v2212
    %v2214 = vpop.f32.mrf.mxu0
    %2215 = vdwg.mxu0
    %2216 = vmatpush.bf16.msra.mxu0 %v1770
    %2217 = vmatpush.bf16.msra.mxu0 %v1766
    %2218 = vmatpush.bf16.msra.mxu0 %v1762
    %2219 = vmatpush.bf16.msra.mxu0 %v1758
    %2220 = vmatpush.bf16.msra.mxu0 %v1754
    %2221 = vmatpush.bf16.msra.mxu0 %v1750
    %2222 = vmatpush.bf16.msra.mxu0 %v1746
    %2223 = vmatpush.bf16.msra.mxu0 %v1742
    %2224 = vmatmul.bf16.gmra.mxu0 %v638
    %v2225 = vpop.f32.mrf.mxu0
    %v2226 = vadd.f32 %v2213, %v2225
    %v2227 = vpop.f32.mrf.mxu0
    %2228 = vdwg.mxu0
    %2229 = vmatpush.bf16.msra.mxu0 %v1802
    %2230 = vmatpush.bf16.msra.mxu0 %v1798
    %2231 = vmatpush.bf16.msra.mxu0 %v1794
    %2232 = vmatpush.bf16.msra.mxu0 %v1790
    %2233 = vmatpush.bf16.msra.mxu0 %v1786
    %2234 = vmatpush.bf16.msra.mxu0 %v1782
    %2235 = vmatpush.bf16.msra.mxu0 %v1778
    %2236 = vmatpush.bf16.msra.mxu0 %v1774
    %2237 = vmatmul.bf16.gmra.mxu0 %v639
    %v2238 = vpop.f32.mrf.mxu0
    %v2239 = vadd.f32 %v2226, %v2238
    %v2240 = vpop.f32.mrf.mxu0
    %2241 = vdwg.mxu0
    %2242 = vmatpush.bf16.msra.mxu0 %v1834
    %2243 = vmatpush.bf16.msra.mxu0 %v1830
    %2244 = vmatpush.bf16.msra.mxu0 %v1826
    %2245 = vmatpush.bf16.msra.mxu0 %v1822
    %2246 = vmatpush.bf16.msra.mxu0 %v1818
    %2247 = vmatpush.bf16.msra.mxu0 %v1814
    %2248 = vmatpush.bf16.msra.mxu0 %v1810
    %2249 = vmatpush.bf16.msra.mxu0 %v1806
    %2250 = vmatmul.bf16.gmra.mxu0 %v640
    %v2251 = vpop.f32.mrf.mxu0
    %v2252 = vadd.f32 %v2239, %v2251
    %v2253 = vpop.f32.mrf.mxu0
    %2254 = vdwg.mxu0
    %2255 = vmatpush.bf16.msra.mxu0 %v1866
    %2256 = vmatpush.bf16.msra.mxu0 %v1862
    %2257 = vmatpush.bf16.msra.mxu0 %v1858
    %2258 = vmatpush.bf16.msra.mxu0 %v1854
    %2259 = vmatpush.bf16.msra.mxu0 %v1850
    %2260 = vmatpush.bf16.msra.mxu0 %v1846
    %2261 = vmatpush.bf16.msra.mxu0 %v1842
    %2262 = vmatpush.bf16.msra.mxu0 %v1838
    %2263 = vmatmul.bf16.gmra.mxu0 %v641
    %v2264 = vpop.f32.mrf.mxu0
    %v2265 = vadd.f32 %v2252, %v2264
    %v2266 = vpop.f32.mrf.mxu0
    %2267 = vdwg.mxu0
    %2268 = vmatpush.bf16.msra.mxu0 %v1898
    %2269 = vmatpush.bf16.msra.mxu0 %v1894
    %2270 = vmatpush.bf16.msra.mxu0 %v1890
    %2271 = vmatpush.bf16.msra.mxu0 %v1886
    %2272 = vmatpush.bf16.msra.mxu0 %v1882
    %2273 = vmatpush.bf16.msra.mxu0 %v1878
    %2274 = vmatpush.bf16.msra.mxu0 %v1874
    %2275 = vmatpush.bf16.msra.mxu0 %v1870
    %2276 = vmatmul.bf16.gmra.mxu0 %v642
    %v2277 = vpop.f32.mrf.mxu0
    %v2278 = vadd.f32 %v2265, %v2277
    %v2279 = vpop.f32.mrf.mxu0
    %2280 = vdwg.mxu0
    %2281 = vmatpush.bf16.msra.mxu0 %v1930
    %2282 = vmatpush.bf16.msra.mxu0 %v1926
    %2283 = vmatpush.bf16.msra.mxu0 %v1922
    %2284 = vmatpush.bf16.msra.mxu0 %v1918
    %2285 = vmatpush.bf16.msra.mxu0 %v1914
    %2286 = vmatpush.bf16.msra.mxu0 %v1910
    %2287 = vmatpush.bf16.msra.mxu0 %v1906
    %2288 = vmatpush.bf16.msra.mxu0 %v1902
    %2289 = vmatmul.bf16.gmra.mxu0 %v643
    %v2290 = vpop.f32.mrf.mxu0
    %v2291 = vadd.f32 %v2278, %v2290
    %v2292 = vpop.f32.mrf.mxu0
    %2293 = vdwg.mxu0
    %2294 = vmatpush.bf16.msra.mxu0 %v1707
    %2295 = vmatpush.bf16.msra.mxu0 %v1703
    %2296 = vmatpush.bf16.msra.mxu0 %v1699
    %2297 = vmatpush.bf16.msra.mxu0 %v1695
    %2298 = vmatpush.bf16.msra.mxu0 %v1691
    %2299 = vmatpush.bf16.msra.mxu0 %v1687
    %2300 = vmatpush.bf16.msra.mxu0 %v1683
    %2301 = vmatpush.bf16.msra.mxu0 %v1679
    %2302 = vmatmul.bf16.gmra.mxu0 %v636
    %v2303 = vpop.f32.mrf.mxu0
    %v2304 = vadd.f32 %v903, %v2303
    %v2305 = vpop.f32.mrf.mxu0
    %2306 = vdwg.mxu0
    %2307 = vmatpush.bf16.msra.mxu0 %v1739
    %2308 = vmatpush.bf16.msra.mxu0 %v1735
    %2309 = vmatpush.bf16.msra.mxu0 %v1731
    %2310 = vmatpush.bf16.msra.mxu0 %v1727
    %2311 = vmatpush.bf16.msra.mxu0 %v1723
    %2312 = vmatpush.bf16.msra.mxu0 %v1719
    %2313 = vmatpush.bf16.msra.mxu0 %v1715
    %2314 = vmatpush.bf16.msra.mxu0 %v1711
    %2315 = vmatmul.bf16.gmra.mxu0 %v637
    %v2316 = vpop.f32.mrf.mxu0
    %v2317 = vadd.f32 %v2304, %v2316
    %v2318 = vpop.f32.mrf.mxu0
    %2319 = vdwg.mxu0
    %2320 = vmatpush.bf16.msra.mxu0 %v1771
    %2321 = vmatpush.bf16.msra.mxu0 %v1767
    %2322 = vmatpush.bf16.msra.mxu0 %v1763
    %2323 = vmatpush.bf16.msra.mxu0 %v1759
    %2324 = vmatpush.bf16.msra.mxu0 %v1755
    %2325 = vmatpush.bf16.msra.mxu0 %v1751
    %2326 = vmatpush.bf16.msra.mxu0 %v1747
    %2327 = vmatpush.bf16.msra.mxu0 %v1743
    %2328 = vmatmul.bf16.gmra.mxu0 %v638
    %v2329 = vpop.f32.mrf.mxu0
    %v2330 = vadd.f32 %v2317, %v2329
    %v2331 = vpop.f32.mrf.mxu0
    %2332 = vdwg.mxu0
    %2333 = vmatpush.bf16.msra.mxu0 %v1803
    %2334 = vmatpush.bf16.msra.mxu0 %v1799
    %2335 = vmatpush.bf16.msra.mxu0 %v1795
    %2336 = vmatpush.bf16.msra.mxu0 %v1791
    %2337 = vmatpush.bf16.msra.mxu0 %v1787
    %2338 = vmatpush.bf16.msra.mxu0 %v1783
    %2339 = vmatpush.bf16.msra.mxu0 %v1779
    %2340 = vmatpush.bf16.msra.mxu0 %v1775
    %2341 = vmatmul.bf16.gmra.mxu0 %v639
    %v2342 = vpop.f32.mrf.mxu0
    %v2343 = vadd.f32 %v2330, %v2342
    %v2344 = vpop.f32.mrf.mxu0
    %2345 = vdwg.mxu0
    %2346 = vmatpush.bf16.msra.mxu0 %v1835
    %2347 = vmatpush.bf16.msra.mxu0 %v1831
    %2348 = vmatpush.bf16.msra.mxu0 %v1827
    %2349 = vmatpush.bf16.msra.mxu0 %v1823
    %2350 = vmatpush.bf16.msra.mxu0 %v1819
    %2351 = vmatpush.bf16.msra.mxu0 %v1815
    %2352 = vmatpush.bf16.msra.mxu0 %v1811
    %2353 = vmatpush.bf16.msra.mxu0 %v1807
    %2354 = vmatmul.bf16.gmra.mxu0 %v640
    %v2355 = vpop.f32.mrf.mxu0
    %v2356 = vadd.f32 %v2343, %v2355
    %v2357 = vpop.f32.mrf.mxu0
    %2358 = vdwg.mxu0
    %2359 = vmatpush.bf16.msra.mxu0 %v1867
    %2360 = vmatpush.bf16.msra.mxu0 %v1863
    %2361 = vmatpush.bf16.msra.mxu0 %v1859
    %2362 = vmatpush.bf16.msra.mxu0 %v1855
    %2363 = vmatpush.bf16.msra.mxu0 %v1851
    %2364 = vmatpush.bf16.msra.mxu0 %v1847
    %2365 = vmatpush.bf16.msra.mxu0 %v1843
    %2366 = vmatpush.bf16.msra.mxu0 %v1839
    %2367 = vmatmul.bf16.gmra.mxu0 %v641
    %v2368 = vpop.f32.mrf.mxu0
    %v2369 = vadd.f32 %v2356, %v2368
    %v2370 = vpop.f32.mrf.mxu0
    %2371 = vdwg.mxu0
    %2372 = vmatpush.bf16.msra.mxu0 %v1899
    %2373 = vmatpush.bf16.msra.mxu0 %v1895
    %2374 = vmatpush.bf16.msra.mxu0 %v1891
    %2375 = vmatpush.bf16.msra.mxu0 %v1887
    %2376 = vmatpush.bf16.msra.mxu0 %v1883
    %2377 = vmatpush.bf16.msra.mxu0 %v1879
    %2378 = vmatpush.bf16.msra.mxu0 %v1875
    %2379 = vmatpush.bf16.msra.mxu0 %v1871
    %2380 = vmatmul.bf16.gmra.mxu0 %v642
    %v2381 = vpop.f32.mrf.mxu0
    %v2382 = vadd.f32 %v2369, %v2381
    %v2383 = vpop.f32.mrf.mxu0
    %2384 = vdwg.mxu0
    %2385 = vmatpush.bf16.msra.mxu0 %v1931
    %2386 = vmatpush.bf16.msra.mxu0 %v1927
    %2387 = vmatpush.bf16.msra.mxu0 %v1923
    %2388 = vmatpush.bf16.msra.mxu0 %v1919
    %2389 = vmatpush.bf16.msra.mxu0 %v1915
    %2390 = vmatpush.bf16.msra.mxu0 %v1911
    %2391 = vmatpush.bf16.msra.mxu0 %v1907
    %2392 = vmatpush.bf16.msra.mxu0 %v1903
    %2393 = vmatmul.bf16.gmra.mxu0 %v643
    %v2394 = vpop.f32.mrf.mxu0
    %v2395 = vadd.f32 %v2382, %v2394
    %v2396 = vpop.f32.mrf.mxu0
    %2397 = vdwg.mxu0
    %2398 = vmatpush.bf16.msra.mxu0 %v1708
    %2399 = vmatpush.bf16.msra.mxu0 %v1704
    %2400 = vmatpush.bf16.msra.mxu0 %v1700
    %2401 = vmatpush.bf16.msra.mxu0 %v1696
    %2402 = vmatpush.bf16.msra.mxu0 %v1692
    %2403 = vmatpush.bf16.msra.mxu0 %v1688
    %2404 = vmatpush.bf16.msra.mxu0 %v1684
    %2405 = vmatpush.bf16.msra.mxu0 %v1680
    %2406 = vmatmul.bf16.gmra.mxu0 %v636
    %v2407 = vpop.f32.mrf.mxu0
    %v2408 = vadd.f32 %v904, %v2407
    %v2409 = vpop.f32.mrf.mxu0
    %2410 = vdwg.mxu0
    %2411 = vmatpush.bf16.msra.mxu0 %v1740
    %2412 = vmatpush.bf16.msra.mxu0 %v1736
    %2413 = vmatpush.bf16.msra.mxu0 %v1732
    %2414 = vmatpush.bf16.msra.mxu0 %v1728
    %2415 = vmatpush.bf16.msra.mxu0 %v1724
    %2416 = vmatpush.bf16.msra.mxu0 %v1720
    %2417 = vmatpush.bf16.msra.mxu0 %v1716
    %2418 = vmatpush.bf16.msra.mxu0 %v1712
    %2419 = vmatmul.bf16.gmra.mxu0 %v637
    %v2420 = vpop.f32.mrf.mxu0
    %v2421 = vadd.f32 %v2408, %v2420
    %v2422 = vpop.f32.mrf.mxu0
    %2423 = vdwg.mxu0
    %2424 = vmatpush.bf16.msra.mxu0 %v1772
    %2425 = vmatpush.bf16.msra.mxu0 %v1768
    %2426 = vmatpush.bf16.msra.mxu0 %v1764
    %2427 = vmatpush.bf16.msra.mxu0 %v1760
    %2428 = vmatpush.bf16.msra.mxu0 %v1756
    %2429 = vmatpush.bf16.msra.mxu0 %v1752
    %2430 = vmatpush.bf16.msra.mxu0 %v1748
    %2431 = vmatpush.bf16.msra.mxu0 %v1744
    %2432 = vmatmul.bf16.gmra.mxu0 %v638
    %v2433 = vpop.f32.mrf.mxu0
    %v2434 = vadd.f32 %v2421, %v2433
    %v2435 = vpop.f32.mrf.mxu0
    %2436 = vdwg.mxu0
    %2437 = vmatpush.bf16.msra.mxu0 %v1804
    %2438 = vmatpush.bf16.msra.mxu0 %v1800
    %2439 = vmatpush.bf16.msra.mxu0 %v1796
    %2440 = vmatpush.bf16.msra.mxu0 %v1792
    %2441 = vmatpush.bf16.msra.mxu0 %v1788
    %2442 = vmatpush.bf16.msra.mxu0 %v1784
    %2443 = vmatpush.bf16.msra.mxu0 %v1780
    %2444 = vmatpush.bf16.msra.mxu0 %v1776
    %2445 = vmatmul.bf16.gmra.mxu0 %v639
    %v2446 = vpop.f32.mrf.mxu0
    %v2447 = vadd.f32 %v2434, %v2446
    %v2448 = vpop.f32.mrf.mxu0
    %2449 = vdwg.mxu0
    %2450 = vmatpush.bf16.msra.mxu0 %v1836
    %2451 = vmatpush.bf16.msra.mxu0 %v1832
    %2452 = vmatpush.bf16.msra.mxu0 %v1828
    %2453 = vmatpush.bf16.msra.mxu0 %v1824
    %2454 = vmatpush.bf16.msra.mxu0 %v1820
    %2455 = vmatpush.bf16.msra.mxu0 %v1816
    %2456 = vmatpush.bf16.msra.mxu0 %v1812
    %2457 = vmatpush.bf16.msra.mxu0 %v1808
    %2458 = vmatmul.bf16.gmra.mxu0 %v640
    %v2459 = vpop.f32.mrf.mxu0
    %v2460 = vadd.f32 %v2447, %v2459
    %v2461 = vpop.f32.mrf.mxu0
    %2462 = vdwg.mxu0
    %2463 = vmatpush.bf16.msra.mxu0 %v1868
    %2464 = vmatpush.bf16.msra.mxu0 %v1864
    %2465 = vmatpush.bf16.msra.mxu0 %v1860
    %2466 = vmatpush.bf16.msra.mxu0 %v1856
    %2467 = vmatpush.bf16.msra.mxu0 %v1852
    %2468 = vmatpush.bf16.msra.mxu0 %v1848
    %2469 = vmatpush.bf16.msra.mxu0 %v1844
    %2470 = vmatpush.bf16.msra.mxu0 %v1840
    %2471 = vmatmul.bf16.gmra.mxu0 %v641
    %v2472 = vpop.f32.mrf.mxu0
    %v2473 = vadd.f32 %v2460, %v2472
    %v2474 = vpop.f32.mrf.mxu0
    %2475 = vdwg.mxu0
    %2476 = vmatpush.bf16.msra.mxu0 %v1900
    %2477 = vmatpush.bf16.msra.mxu0 %v1896
    %2478 = vmatpush.bf16.msra.mxu0 %v1892
    %2479 = vmatpush.bf16.msra.mxu0 %v1888
    %2480 = vmatpush.bf16.msra.mxu0 %v1884
    %2481 = vmatpush.bf16.msra.mxu0 %v1880
    %2482 = vmatpush.bf16.msra.mxu0 %v1876
    %2483 = vmatpush.bf16.msra.mxu0 %v1872
    %2484 = vmatmul.bf16.gmra.mxu0 %v642
    %v2485 = vpop.f32.mrf.mxu0
    %v2486 = vadd.f32 %v2473, %v2485
    %v2487 = vpop.f32.mrf.mxu0
    %2488 = vdwg.mxu0
    %2489 = vmatpush.bf16.msra.mxu0 %v1932
    %2490 = vmatpush.bf16.msra.mxu0 %v1928
    %2491 = vmatpush.bf16.msra.mxu0 %v1924
    %2492 = vmatpush.bf16.msra.mxu0 %v1920
    %2493 = vmatpush.bf16.msra.mxu0 %v1916
    %2494 = vmatpush.bf16.msra.mxu0 %v1912
    %2495 = vmatpush.bf16.msra.mxu0 %v1908
    %2496 = vmatpush.bf16.msra.mxu0 %v1904
    %2497 = vmatmul.bf16.gmra.mxu0 %v643
    %v2498 = vpop.f32.mrf.mxu0
    %v2499 = vadd.f32 %v2486, %v2498
    %v2500 = vpop.f32.mrf.mxu0
    %2501 = vdwg.mxu0
    %2502 = vmatpush.bf16.msra.mxu0 %v1709
    %2503 = vmatpush.bf16.msra.mxu0 %v1705
    %2504 = vmatpush.bf16.msra.mxu0 %v1701
    %2505 = vmatpush.bf16.msra.mxu0 %v1697
    %2506 = vmatpush.bf16.msra.mxu0 %v1693
    %2507 = vmatpush.bf16.msra.mxu0 %v1689
    %2508 = vmatpush.bf16.msra.mxu0 %v1685
    %2509 = vmatpush.bf16.msra.mxu0 %v1681
    %2510 = vmatmul.bf16.gmra.mxu0 %v636
    %v2511 = vpop.f32.mrf.mxu0
    %v2512 = vadd.f32 %v905, %v2511
    %v2513 = vpop.f32.mrf.mxu0
    %2514 = vdwg.mxu0
    %2515 = vmatpush.bf16.msra.mxu0 %v1741
    %2516 = vmatpush.bf16.msra.mxu0 %v1737
    %2517 = vmatpush.bf16.msra.mxu0 %v1733
    %2518 = vmatpush.bf16.msra.mxu0 %v1729
    %2519 = vmatpush.bf16.msra.mxu0 %v1725
    %2520 = vmatpush.bf16.msra.mxu0 %v1721
    %2521 = vmatpush.bf16.msra.mxu0 %v1717
    %2522 = vmatpush.bf16.msra.mxu0 %v1713
    %2523 = vmatmul.bf16.gmra.mxu0 %v637
    %v2524 = vpop.f32.mrf.mxu0
    %v2525 = vadd.f32 %v2512, %v2524
    %v2526 = vpop.f32.mrf.mxu0
    %2527 = vdwg.mxu0
    %2528 = vmatpush.bf16.msra.mxu0 %v1773
    %2529 = vmatpush.bf16.msra.mxu0 %v1769
    %2530 = vmatpush.bf16.msra.mxu0 %v1765
    %2531 = vmatpush.bf16.msra.mxu0 %v1761
    %2532 = vmatpush.bf16.msra.mxu0 %v1757
    %2533 = vmatpush.bf16.msra.mxu0 %v1753
    %2534 = vmatpush.bf16.msra.mxu0 %v1749
    %2535 = vmatpush.bf16.msra.mxu0 %v1745
    %2536 = vmatmul.bf16.gmra.mxu0 %v638
    %v2537 = vpop.f32.mrf.mxu0
    %v2538 = vadd.f32 %v2525, %v2537
    %v2539 = vpop.f32.mrf.mxu0
    %2540 = vdwg.mxu0
    %2541 = vmatpush.bf16.msra.mxu0 %v1805
    %2542 = vmatpush.bf16.msra.mxu0 %v1801
    %2543 = vmatpush.bf16.msra.mxu0 %v1797
    %2544 = vmatpush.bf16.msra.mxu0 %v1793
    %2545 = vmatpush.bf16.msra.mxu0 %v1789
    %2546 = vmatpush.bf16.msra.mxu0 %v1785
    %2547 = vmatpush.bf16.msra.mxu0 %v1781
    %2548 = vmatpush.bf16.msra.mxu0 %v1777
    %2549 = vmatmul.bf16.gmra.mxu0 %v639
    %v2550 = vpop.f32.mrf.mxu0
    %v2551 = vadd.f32 %v2538, %v2550
    %v2552 = vpop.f32.mrf.mxu0
    %2553 = vdwg.mxu0
    %2554 = vmatpush.bf16.msra.mxu0 %v1837
    %2555 = vmatpush.bf16.msra.mxu0 %v1833
    %2556 = vmatpush.bf16.msra.mxu0 %v1829
    %2557 = vmatpush.bf16.msra.mxu0 %v1825
    %2558 = vmatpush.bf16.msra.mxu0 %v1821
    %2559 = vmatpush.bf16.msra.mxu0 %v1817
    %2560 = vmatpush.bf16.msra.mxu0 %v1813
    %2561 = vmatpush.bf16.msra.mxu0 %v1809
    %2562 = vmatmul.bf16.gmra.mxu0 %v640
    %v2563 = vpop.f32.mrf.mxu0
    %v2564 = vadd.f32 %v2551, %v2563
    %v2565 = vpop.f32.mrf.mxu0
    %2566 = vdwg.mxu0
    %2567 = vmatpush.bf16.msra.mxu0 %v1869
    %2568 = vmatpush.bf16.msra.mxu0 %v1865
    %2569 = vmatpush.bf16.msra.mxu0 %v1861
    %2570 = vmatpush.bf16.msra.mxu0 %v1857
    %2571 = vmatpush.bf16.msra.mxu0 %v1853
    %2572 = vmatpush.bf16.msra.mxu0 %v1849
    %2573 = vmatpush.bf16.msra.mxu0 %v1845
    %2574 = vmatpush.bf16.msra.mxu0 %v1841
    %2575 = vmatmul.bf16.gmra.mxu0 %v641
    %v2576 = vpop.f32.mrf.mxu0
    %v2577 = vadd.f32 %v2564, %v2576
    %v2578 = vpop.f32.mrf.mxu0
    %2579 = vdwg.mxu0
    %2580 = vmatpush.bf16.msra.mxu0 %v1901
    %2581 = vmatpush.bf16.msra.mxu0 %v1897
    %2582 = vmatpush.bf16.msra.mxu0 %v1893
    %2583 = vmatpush.bf16.msra.mxu0 %v1889
    %2584 = vmatpush.bf16.msra.mxu0 %v1885
    %2585 = vmatpush.bf16.msra.mxu0 %v1881
    %2586 = vmatpush.bf16.msra.mxu0 %v1877
    %2587 = vmatpush.bf16.msra.mxu0 %v1873
    %2588 = vmatmul.bf16.gmra.mxu0 %v642
    %v2589 = vpop.f32.mrf.mxu0
    %v2590 = vadd.f32 %v2577, %v2589
    %v2591 = vpop.f32.mrf.mxu0
    %2592 = vdwg.mxu0
    %2593 = vmatpush.bf16.msra.mxu0 %v1933
    %2594 = vmatpush.bf16.msra.mxu0 %v1929
    %2595 = vmatpush.bf16.msra.mxu0 %v1925
    %2596 = vmatpush.bf16.msra.mxu0 %v1921
    %2597 = vmatpush.bf16.msra.mxu0 %v1917
    %2598 = vmatpush.bf16.msra.mxu0 %v1913
    %2599 = vmatpush.bf16.msra.mxu0 %v1909
    %2600 = vmatpush.bf16.msra.mxu0 %v1905
    %2601 = vmatmul.bf16.gmra.mxu0 %v643
    %v2602 = vpop.f32.mrf.mxu0
    %v2603 = vadd.f32 %v2590, %v2602
    %v2604 = vpop.f32.mrf.mxu0
    %2605 = vdwg.mxu0
    %v2606 = vmax.f32 %v2291, 0.0
    %v2607 = vmax.f32 %v2395, 0.0
    %v2608 = vmax.f32 %v2499, 0.0
    %v2609 = vmax.f32 %v2603, 0.0
    %v2610 = vpack.c.bf16 %v2606, %v2606
    %v2611 = vpack.c.bf16 %v2607, %v2607
    %v2612 = vpack.c.bf16 %v2608, %v2608
    %v2613 = vpack.c.bf16 %v2609, %v2609
    %v2614 = vld [vmem:[%s6] sm:$0xf]
    %v2615 = vld [vmem:[%s6 + $0x4] sm:$0xf]
    %v2616 = vld [vmem:[%s6 + $0x8] sm:$0xf]
    %v2617 = vld [vmem:[%s6 + $0xc] sm:$0xf]
    %v2618 = vld [vmem:[%s6 + $0x10] sm:$0xf]
    %v2619 = vld [vmem:[%s6 + $0x14] sm:$0xf]
    %v2620 = vld [vmem:[%s6 + $0x18] sm:$0xf]
    %v2621 = vld [vmem:[%s6 + $0x1c] sm:$0xf]
    %v2622 = vld [vmem:[%s6 + $0x20] sm:$0xf]
    %v2623 = vld [vmem:[%s6 + $0x24] sm:$0xf]
    %v2624 = vld [vmem:[%s6 + $0x28] sm:$0xf]
    %v2625 = vld [vmem:[%s6 + $0x2c] sm:$0xf]
    %v2626 = vld [vmem:[%s6 + $0x30] sm:$0xf]
    %v2627 = vld [vmem:[%s6 + $0x34] sm:$0xf]
    %v2628 = vld [vmem:[%s6 + $0x38] sm:$0xf]
    %v2629 = vld [vmem:[%s6 + $0x3c] sm:$0xf]
    %v2630 = vld [vmem:[%s6 + $0x40] sm:$0xf]
    %v2631 = vld [vmem:[%s6 + $0x44] sm:$0xf]
    %v2632 = vld [vmem:[%s6 + $0x48] sm:$0xf]
    %v2633 = vld [vmem:[%s6 + $0x4c] sm:$0xf]
    %v2634 = vld [vmem:[%s6 + $0x50] sm:$0xf]
    %v2635 = vld [vmem:[%s6 + $0x54] sm:$0xf]
    %v2636 = vld [vmem:[%s6 + $0x58] sm:$0xf]
    %v2637 = vld [vmem:[%s6 + $0x5c] sm:$0xf]
    %v2638 = vld [vmem:[%s6 + $0x60] sm:$0xf]
    %v2639 = vld [vmem:[%s6 + $0x64] sm:$0xf]
    %v2640 = vld [vmem:[%s6 + $0x68] sm:$0xf]
    %v2641 = vld [vmem:[%s6 + $0x6c] sm:$0xf]
    %v2642 = vld [vmem:[%s6 + $0x70] sm:$0xf]
    %v2643 = vld [vmem:[%s6 + $0x74] sm:$0xf]
    %v2644 = vld [vmem:[%s6 + $0x78] sm:$0xf]
    %v2645 = vld [vmem:[%s6 + $0x7c] sm:$0xf]
    %v2646 = vld [vmem:[%s6 + $0x80] sm:$0xf]
    %v2647 = vld [vmem:[%s6 + $0x84] sm:$0xf]
    %v2648 = vld [vmem:[%s6 + $0x88] sm:$0xf]
    %v2649 = vld [vmem:[%s6 + $0x8c] sm:$0xf]
    %v2650 = vld [vmem:[%s6 + $0x90] sm:$0xf]
    %v2651 = vld [vmem:[%s6 + $0x94] sm:$0xf]
    %v2652 = vld [vmem:[%s6 + $0x98] sm:$0xf]
    %v2653 = vld [vmem:[%s6 + $0x9c] sm:$0xf]
    %v2654 = vld [vmem:[%s6 + $0xa0] sm:$0xf]
    %v2655 = vld [vmem:[%s6 + $0xa4] sm:$0xf]
    %v2656 = vld [vmem:[%s6 + $0xa8] sm:$0xf]
    %v2657 = vld [vmem:[%s6 + $0xac] sm:$0xf]
    %v2658 = vld [vmem:[%s6 + $0xb0] sm:$0xf]
    %v2659 = vld [vmem:[%s6 + $0xb4] sm:$0xf]
    %v2660 = vld [vmem:[%s6 + $0xb8] sm:$0xf]
    %v2661 = vld [vmem:[%s6 + $0xbc] sm:$0xf]
    %v2662 = vld [vmem:[%s6 + $0xc0] sm:$0xf]
    %v2663 = vld [vmem:[%s6 + $0xc4] sm:$0xf]
    %v2664 = vld [vmem:[%s6 + $0xc8] sm:$0xf]
    %v2665 = vld [vmem:[%s6 + $0xcc] sm:$0xf]
    %v2666 = vld [vmem:[%s6 + $0xd0] sm:$0xf]
    %v2667 = vld [vmem:[%s6 + $0xd4] sm:$0xf]
    %v2668 = vld [vmem:[%s6 + $0xd8] sm:$0xf]
    %v2669 = vld [vmem:[%s6 + $0xdc] sm:$0xf]
    %v2670 = vld [vmem:[%s6 + $0xe0] sm:$0xf]
    %v2671 = vld [vmem:[%s6 + $0xe4] sm:$0xf]
    %v2672 = vld [vmem:[%s6 + $0xe8] sm:$0xf]
    %v2673 = vld [vmem:[%s6 + $0xec] sm:$0xf]
    %v2674 = vld [vmem:[%s6 + $0xf0] sm:$0xf]
    %v2675 = vld [vmem:[%s6 + $0xf4] sm:$0xf]
    %v2676 = vld [vmem:[%s6 + $0xf8] sm:$0xf]
    %v2677 = vld [vmem:[%s6 + $0xfc] sm:$0xf]
    %v2678 = vld [vmem:[%s7] sm:$0x1]
    %v2680 = vperm.slane %v2678, 0
    %v2746 = vunpack.c.l.b16 %v2614
    %v2747 = vunpack.c.l.b16 %v2615
    %v2748 = vunpack.c.l.b16 %v2616
    %v2749 = vunpack.c.l.b16 %v2617
    %v2750 = vunpack.c.l.b16 %v2618
    %v2751 = vunpack.c.l.b16 %v2619
    %v2752 = vunpack.c.l.b16 %v2620
    %v2753 = vunpack.c.l.b16 %v2621
    %v2754 = vunpack.c.l.b16 %v2622
    %v2755 = vunpack.c.l.b16 %v2623
    %v2756 = vunpack.c.l.b16 %v2624
    %v2757 = vunpack.c.l.b16 %v2625
    %v2758 = vunpack.c.l.b16 %v2626
    %v2759 = vunpack.c.l.b16 %v2627
    %v2760 = vunpack.c.l.b16 %v2628
    %v2761 = vunpack.c.l.b16 %v2629
    %v2762 = vunpack.c.l.b16 %v2630
    %v2763 = vunpack.c.l.b16 %v2631
    %v2764 = vunpack.c.l.b16 %v2632
    %v2765 = vunpack.c.l.b16 %v2633
    %v2766 = vunpack.c.l.b16 %v2634
    %v2767 = vunpack.c.l.b16 %v2635
    %v2768 = vunpack.c.l.b16 %v2636
    %v2769 = vunpack.c.l.b16 %v2637
    %v2770 = vunpack.c.l.b16 %v2638
    %v2771 = vunpack.c.l.b16 %v2639
    %v2772 = vunpack.c.l.b16 %v2640
    %v2773 = vunpack.c.l.b16 %v2641
    %v2774 = vunpack.c.l.b16 %v2642
    %v2775 = vunpack.c.l.b16 %v2643
    %v2776 = vunpack.c.l.b16 %v2644
    %v2777 = vunpack.c.l.b16 %v2645
    %v2778 = vunpack.c.l.b16 %v2646
    %v2779 = vunpack.c.l.b16 %v2647
    %v2780 = vunpack.c.l.b16 %v2648
    %v2781 = vunpack.c.l.b16 %v2649
    %v2782 = vunpack.c.l.b16 %v2650
    %v2783 = vunpack.c.l.b16 %v2651
    %v2784 = vunpack.c.l.b16 %v2652
    %v2785 = vunpack.c.l.b16 %v2653
    %v2786 = vunpack.c.l.b16 %v2654
    %v2787 = vunpack.c.l.b16 %v2655
    %v2788 = vunpack.c.l.b16 %v2656
    %v2789 = vunpack.c.l.b16 %v2657
    %v2790 = vunpack.c.l.b16 %v2658
    %v2791 = vunpack.c.l.b16 %v2659
    %v2792 = vunpack.c.l.b16 %v2660
    %v2793 = vunpack.c.l.b16 %v2661
    %v2794 = vunpack.c.l.b16 %v2662
    %v2795 = vunpack.c.l.b16 %v2663
    %v2796 = vunpack.c.l.b16 %v2664
    %v2797 = vunpack.c.l.b16 %v2665
    %v2798 = vunpack.c.l.b16 %v2666
    %v2799 = vunpack.c.l.b16 %v2667
    %v2800 = vunpack.c.l.b16 %v2668
    %v2801 = vunpack.c.l.b16 %v2669
    %v2802 = vunpack.c.l.b16 %v2670
    %v2803 = vunpack.c.l.b16 %v2671
    %v2804 = vunpack.c.l.b16 %v2672
    %v2805 = vunpack.c.l.b16 %v2673
    %v2806 = vunpack.c.l.b16 %v2674
    %v2807 = vunpack.c.l.b16 %v2675
    %v2808 = vunpack.c.l.b16 %v2676
    %v2809 = vunpack.c.l.b16 %v2677
    %v2810 = vpack.c.b16 %v2747, %v2746
    %v2811 = vpack.c.b16 %v2749, %v2748
    %v2812 = vpack.c.b16 %v2751, %v2750
    %v2813 = vpack.c.b16 %v2753, %v2752
    %v2814 = vpack.c.b16 %v2755, %v2754
    %v2815 = vpack.c.b16 %v2757, %v2756
    %v2816 = vpack.c.b16 %v2759, %v2758
    %v2817 = vpack.c.b16 %v2761, %v2760
    %v2818 = vpack.c.b16 %v2763, %v2762
    %v2819 = vpack.c.b16 %v2765, %v2764
    %v2820 = vpack.c.b16 %v2767, %v2766
    %v2821 = vpack.c.b16 %v2769, %v2768
    %v2822 = vpack.c.b16 %v2771, %v2770
    %v2823 = vpack.c.b16 %v2773, %v2772
    %v2824 = vpack.c.b16 %v2775, %v2774
    %v2825 = vpack.c.b16 %v2777, %v2776
    %v2826 = vpack.c.b16 %v2779, %v2778
    %v2827 = vpack.c.b16 %v2781, %v2780
    %v2828 = vpack.c.b16 %v2783, %v2782
    %v2829 = vpack.c.b16 %v2785, %v2784
    %v2830 = vpack.c.b16 %v2787, %v2786
    %v2831 = vpack.c.b16 %v2789, %v2788
    %v2832 = vpack.c.b16 %v2791, %v2790
    %v2833 = vpack.c.b16 %v2793, %v2792
    %v2834 = vpack.c.b16 %v2795, %v2794
    %v2835 = vpack.c.b16 %v2797, %v2796
    %v2836 = vpack.c.b16 %v2799, %v2798
    %v2837 = vpack.c.b16 %v2801, %v2800
    %v2838 = vpack.c.b16 %v2803, %v2802
    %v2839 = vpack.c.b16 %v2805, %v2804
    %v2840 = vpack.c.b16 %v2807, %v2806
    %v2841 = vpack.c.b16 %v2809, %v2808
    %2874 = vmatpush.bf16.msra.mxu0 %v2817
    %2875 = vmatpush.bf16.msra.mxu0 %v2816
    %2876 = vmatpush.bf16.msra.mxu0 %v2815
    %2877 = vmatpush.bf16.msra.mxu0 %v2814
    %2878 = vmatpush.bf16.msra.mxu0 %v2813
    %2879 = vmatpush.bf16.msra.mxu0 %v2812
    %2880 = vmatpush.bf16.msra.mxu0 %v2811
    %2881 = vmatpush.bf16.msra.mxu0 %v2810
    %2882 = vmatmul.bf16.gmra.mxu0 %v2610
    %v2883 = vpop.f32.mrf.mxu0
    %v2884 = vadd.f32 %v2680, %v2883
    %v2885 = vpop.f32.mrf.mxu0
    %2886 = vdwg.mxu0
    %2887 = vmatpush.bf16.msra.mxu0 %v2825
    %2888 = vmatpush.bf16.msra.mxu0 %v2824
    %2889 = vmatpush.bf16.msra.mxu0 %v2823
    %2890 = vmatpush.bf16.msra.mxu0 %v2822
    %2891 = vmatpush.bf16.msra.mxu0 %v2821
    %2892 = vmatpush.bf16.msra.mxu0 %v2820
    %2893 = vmatpush.bf16.msra.mxu0 %v2819
    %2894 = vmatpush.bf16.msra.mxu0 %v2818
    %2895 = vmatmul.bf16.gmra.mxu0 %v2611
    %v2896 = vpop.f32.mrf.mxu0
    %v2897 = vadd.f32 %v2884, %v2896
    %v2898 = vpop.f32.mrf.mxu0
    %2899 = vdwg.mxu0
    %2900 = vmatpush.bf16.msra.mxu0 %v2833
    %2901 = vmatpush.bf16.msra.mxu0 %v2832
    %2902 = vmatpush.bf16.msra.mxu0 %v2831
    %2903 = vmatpush.bf16.msra.mxu0 %v2830
    %2904 = vmatpush.bf16.msra.mxu0 %v2829
    %2905 = vmatpush.bf16.msra.mxu0 %v2828
    %2906 = vmatpush.bf16.msra.mxu0 %v2827
    %2907 = vmatpush.bf16.msra.mxu0 %v2826
    %2908 = vmatmul.bf16.gmra.mxu0 %v2612
    %v2909 = vpop.f32.mrf.mxu0
    %v2910 = vadd.f32 %v2897, %v2909
    %v2911 = vpop.f32.mrf.mxu0
    %2912 = vdwg.mxu0
    %2913 = vmatpush.bf16.msra.mxu0 %v2841
    %2914 = vmatpush.bf16.msra.mxu0 %v2840
    %2915 = vmatpush.bf16.msra.mxu0 %v2839
    %2916 = vmatpush.bf16.msra.mxu0 %v2838
    %2917 = vmatpush.bf16.msra.mxu0 %v2837
    %2918 = vmatpush.bf16.msra.mxu0 %v2836
    %2919 = vmatpush.bf16.msra.mxu0 %v2835
    %2920 = vmatpush.bf16.msra.mxu0 %v2834
    %2921 = vmatmul.bf16.gmra.mxu0 %v2613
    %v2922 = vpop.f32.mrf.mxu0
    %v2923 = vadd.f32 %v2910, %v2922
    %v2924 = vpop.f32.mrf.mxu0
    %2925 = vdwg.mxu0
    %v2926 = vmax.f32 %v2923, 0.0
    %v2927 = vld [vmem:[%s1] sm:$0xf]
    %v2928 = vld [vmem:[%s8] sm:$0xf]
    %v2929 = vld [vmem:[%s8 + $0x4] sm:$0xf]
    %v2930 = vld [vmem:[%s8 + $0x8] sm:$0xf]
    %v2931 = vld [vmem:[%s8 + $0xc] sm:$0xf]
    %v2932 = vld [vmem:[%s8 + $0x10] sm:$0xf]
    %v2933 = vld [vmem:[%s8 + $0x14] sm:$0xf]
    %v2934 = vld [vmem:[%s8 + $0x18] sm:$0xf]
    %v2935 = vld [vmem:[%s8 + $0x1c] sm:$0xf]
    %v2936 = vld [vmem:[%s8 + $0x20] sm:$0xf]
    %v2937 = vld [vmem:[%s8 + $0x24] sm:$0xf]
    %v2938 = vld [vmem:[%s8 + $0x28] sm:$0xf]
    %v2939 = vld [vmem:[%s8 + $0x2c] sm:$0xf]
    %v2940 = vld [vmem:[%s8 + $0x30] sm:$0xf]
    %v2941 = vld [vmem:[%s8 + $0x34] sm:$0xf]
    %v2942 = vld [vmem:[%s8 + $0x38] sm:$0xf]
    %v2943 = vld [vmem:[%s8 + $0x3c] sm:$0xf]
    %v2944 = vld [vmem:[%s9] sm:$0x1]
    %v2946 = vperm.slane %v2944, 0
    %v2964 = vunpack.c.l.b16 %v2928
    %v2965 = vunpack.c.l.b16 %v2929
    %v2966 = vunpack.c.l.b16 %v2930
    %v2967 = vunpack.c.l.b16 %v2931
    %v2968 = vunpack.c.l.b16 %v2932
    %v2969 = vunpack.c.l.b16 %v2933
    %v2970 = vunpack.c.l.b16 %v2934
    %v2971 = vunpack.c.l.b16 %v2935
    %v2972 = vunpack.c.l.b16 %v2936
    %v2973 = vunpack.c.l.b16 %v2937
    %v2974 = vunpack.c.l.b16 %v2938
    %v2975 = vunpack.c.l.b16 %v2939
    %v2976 = vunpack.c.l.b16 %v2940
    %v2977 = vunpack.c.l.b16 %v2941
    %v2978 = vunpack.c.l.b16 %v2942
    %v2979 = vunpack.c.l.b16 %v2943
    %v2980 = vpack.c.b16 %v2965, %v2964
    %v2981 = vpack.c.b16 %v2967, %v2966
    %v2982 = vpack.c.b16 %v2969, %v2968
    %v2983 = vpack.c.b16 %v2971, %v2970
    %v2984 = vpack.c.b16 %v2973, %v2972
    %v2985 = vpack.c.b16 %v2975, %v2974
    %v2986 = vpack.c.b16 %v2977, %v2976
    %v2987 = vpack.c.b16 %v2979, %v2978
    %2996 = vmatpush.bf16.msra.mxu0 %v2987
    %2997 = vmatpush.bf16.msra.mxu0 %v2986
    %2998 = vmatpush.bf16.msra.mxu0 %v2985
    %2999 = vmatpush.bf16.msra.mxu0 %v2984
    %3000 = vmatpush.bf16.msra.mxu0 %v2983
    %3001 = vmatpush.bf16.msra.mxu0 %v2982
    %3002 = vmatpush.bf16.msra.mxu0 %v2981
    %3003 = vmatpush.bf16.msra.mxu0 %v2980
    %3004 = vmatmul.bf16.gmra.mxu0 %v2927
    %v3005 = vpop.f32.mrf.mxu0
    %v3006 = vadd.f32 %v2946, %v3005
    %v3007 = vpop.f32.mrf.mxu0
    %3008 = vdwg.mxu0
    %v3009 = vmax.f32 %v3006, 0.0
    %v3010 = vpack.c.bf16 %v3009, %v3009
    %v3011 = vld [vmem:[%s10] sm:$0xf]
    %v3012 = vld [vmem:[%s10 + $0x4] sm:$0xf]
    %v3013 = vld [vmem:[%s10 + $0x8] sm:$0xf]
    %v3014 = vld [vmem:[%s10 + $0xc] sm:$0xf]
    %v3015 = vld [vmem:[%s10 + $0x10] sm:$0xf]
    %v3016 = vld [vmem:[%s10 + $0x14] sm:$0xf]
    %v3017 = vld [vmem:[%s10 + $0x18] sm:$0xf]
    %v3018 = vld [vmem:[%s10 + $0x1c] sm:$0xf]
    %v3019 = vld [vmem:[%s10 + $0x20] sm:$0xf]
    %v3020 = vld [vmem:[%s10 + $0x24] sm:$0xf]
    %v3021 = vld [vmem:[%s10 + $0x28] sm:$0xf]
    %v3022 = vld [vmem:[%s10 + $0x2c] sm:$0xf]
    %v3023 = vld [vmem:[%s10 + $0x30] sm:$0xf]
    %v3024 = vld [vmem:[%s10 + $0x34] sm:$0xf]
    %v3025 = vld [vmem:[%s10 + $0x38] sm:$0xf]
    %v3026 = vld [vmem:[%s10 + $0x3c] sm:$0xf]
    %v3027 = vld [vmem:[%s11] sm:$0x1]
    %v3029 = vperm.slane %v3027, 0
    %v3047 = vunpack.c.l.b16 %v3011
    %v3048 = vunpack.c.l.b16 %v3012
    %v3049 = vunpack.c.l.b16 %v3013
    %v3050 = vunpack.c.l.b16 %v3014
    %v3051 = vunpack.c.l.b16 %v3015
    %v3052 = vunpack.c.l.b16 %v3016
    %v3053 = vunpack.c.l.b16 %v3017
    %v3054 = vunpack.c.l.b16 %v3018
    %v3055 = vunpack.c.l.b16 %v3019
    %v3056 = vunpack.c.l.b16 %v3020
    %v3057 = vunpack.c.l.b16 %v3021
    %v3058 = vunpack.c.l.b16 %v3022
    %v3059 = vunpack.c.l.b16 %v3023
    %v3060 = vunpack.c.l.b16 %v3024
    %v3061 = vunpack.c.l.b16 %v3025
    %v3062 = vunpack.c.l.b16 %v3026
    %v3063 = vpack.c.b16 %v3048, %v3047
    %v3064 = vpack.c.b16 %v3050, %v3049
    %v3065 = vpack.c.b16 %v3052, %v3051
    %v3066 = vpack.c.b16 %v3054, %v3053
    %v3067 = vpack.c.b16 %v3056, %v3055
    %v3068 = vpack.c.b16 %v3058, %v3057
    %v3069 = vpack.c.b16 %v3060, %v3059
    %v3070 = vpack.c.b16 %v3062, %v3061
    %3079 = vmatpush.bf16.msra.mxu0 %v3070
    %3080 = vmatpush.bf16.msra.mxu0 %v3069
    %3081 = vmatpush.bf16.msra.mxu0 %v3068
    %3082 = vmatpush.bf16.msra.mxu0 %v3067
    %3083 = vmatpush.bf16.msra.mxu0 %v3066
    %3084 = vmatpush.bf16.msra.mxu0 %v3065
    %3085 = vmatpush.bf16.msra.mxu0 %v3064
    %3086 = vmatpush.bf16.msra.mxu0 %v3063
    %3087 = vmatmul.bf16.gmra.mxu0 %v3010
    %v3088 = vpop.f32.mrf.mxu0
    %v3089 = vadd.f32 %v3029, %v3088
    %v3090 = vpop.f32.mrf.mxu0
    %3091 = vdwg.mxu0
    %v3092 = vmax.f32 %v3089, 0.0
    %v3093 = vpack.c.bf16 %v2926, %v2926
    %v3094 = vld [vmem:[%s12] sm:$0xff]
    %v3095 = vld [vmem:[%s12 + $0x8] sm:$0xff]
    %v3096 = vld [vmem:[%s12 + $0x10] sm:$0xff]
    %v3097 = vld [vmem:[%s12 + $0x18] sm:$0xff]
    %v3098 = vld [vmem:[%s12 + $0x20] sm:$0xff]
    %v3099 = vld [vmem:[%s12 + $0x28] sm:$0xff]
    %v3100 = vld [vmem:[%s12 + $0x30] sm:$0xff]
    %v3101 = vld [vmem:[%s12 + $0x38] sm:$0xff]
    %v3102 = vld [vmem:[%s12 + $0x40] sm:$0xff]
    %v3103 = vld [vmem:[%s12 + $0x48] sm:$0xff]
    %v3104 = vld [vmem:[%s12 + $0x50] sm:$0xff]
    %v3105 = vld [vmem:[%s12 + $0x58] sm:$0xff]
    %v3106 = vld [vmem:[%s12 + $0x60] sm:$0xff]
    %v3107 = vld [vmem:[%s12 + $0x68] sm:$0xff]
    %v3108 = vld [vmem:[%s12 + $0x70] sm:$0xff]
    %v3109 = vld [vmem:[%s12 + $0x78] sm:$0xff]
    %v3110 = vpack.c.bf16 %v3092, %v3092
    %v3111 = vld [vmem:[%s12 + $0x80] sm:$0xff]
    %v3112 = vld [vmem:[%s12 + $0x88] sm:$0xff]
    %v3113 = vld [vmem:[%s12 + $0x90] sm:$0xff]
    %v3114 = vld [vmem:[%s12 + $0x98] sm:$0xff]
    %v3115 = vld [vmem:[%s12 + $0xa0] sm:$0xff]
    %v3116 = vld [vmem:[%s12 + $0xa8] sm:$0xff]
    %v3117 = vld [vmem:[%s12 + $0xb0] sm:$0xff]
    %v3118 = vld [vmem:[%s12 + $0xb8] sm:$0xff]
    %v3119 = vld [vmem:[%s12 + $0xc0] sm:$0xff]
    %v3120 = vld [vmem:[%s12 + $0xc8] sm:$0xff]
    %v3121 = vld [vmem:[%s12 + $0xd0] sm:$0xff]
    %v3122 = vld [vmem:[%s12 + $0xd8] sm:$0xff]
    %v3123 = vld [vmem:[%s12 + $0xe0] sm:$0xff]
    %v3124 = vld [vmem:[%s12 + $0xe8] sm:$0xff]
    %v3125 = vld [vmem:[%s12 + $0xf0] sm:$0xff]
    %v3126 = vld [vmem:[%s12 + $0xf8] sm:$0xff]
    %v3143 = vunpack.c.l.b16 %v3111
    %v3144 = vunpack.c.h.b16 %v3111
    %v3145 = vunpack.c.l.b16 %v3112
    %v3146 = vunpack.c.h.b16 %v3112
    %v3147 = vunpack.c.l.b16 %v3113
    %v3148 = vunpack.c.h.b16 %v3113
    %v3149 = vunpack.c.l.b16 %v3114
    %v3150 = vunpack.c.h.b16 %v3114
    %v3151 = vunpack.c.l.b16 %v3115
    %v3152 = vunpack.c.h.b16 %v3115
    %v3153 = vunpack.c.l.b16 %v3116
    %v3154 = vunpack.c.h.b16 %v3116
    %v3155 = vunpack.c.l.b16 %v3117
    %v3156 = vunpack.c.h.b16 %v3117
    %v3157 = vunpack.c.l.b16 %v3118
    %v3158 = vunpack.c.h.b16 %v3118
    %v3159 = vunpack.c.l.b16 %v3119
    %v3160 = vunpack.c.h.b16 %v3119
    %v3161 = vunpack.c.l.b16 %v3120
    %v3162 = vunpack.c.h.b16 %v3120
    %v3163 = vunpack.c.l.b16 %v3121
    %v3164 = vunpack.c.h.b16 %v3121
    %v3165 = vunpack.c.l.b16 %v3122
    %v3166 = vunpack.c.h.b16 %v3122
    %v3167 = vunpack.c.l.b16 %v3123
    %v3168 = vunpack.c.h.b16 %v3123
    %v3169 = vunpack.c.l.b16 %v3124
    %v3170 = vunpack.c.h.b16 %v3124
    %v3171 = vunpack.c.l.b16 %v3125
    %v3172 = vunpack.c.h.b16 %v3125
    %v3173 = vunpack.c.l.b16 %v3126
    %v3174 = vunpack.c.h.b16 %v3126
    %v3175 = vpack.c.b16 %v3147, %v3143
    %v3176 = vpack.c.b16 %v3148, %v3144
    %v3177 = vpack.c.b16 %v3149, %v3145
    %v3178 = vpack.c.b16 %v3150, %v3146
    %v3179 = vpack.c.b16 %v3155, %v3151
    %v3180 = vpack.c.b16 %v3156, %v3152
    %v3181 = vpack.c.b16 %v3157, %v3153
    %v3182 = vpack.c.b16 %v3158, %v3154
    %v3183 = vpack.c.b16 %v3163, %v3159
    %v3184 = vpack.c.b16 %v3164, %v3160
    %v3185 = vpack.c.b16 %v3165, %v3161
    %v3186 = vpack.c.b16 %v3166, %v3162
    %v3187 = vpack.c.b16 %v3171, %v3167
    %v3188 = vpack.c.b16 %v3172, %v3168
    %v3189 = vpack.c.b16 %v3173, %v3169
    %v3190 = vpack.c.b16 %v3174, %v3170
    %vm3207 = vcmask 523264
    %v3209 = vsel %vm3207, %v3110, 0
    %3211 = vmatpush.bf16.msra.mxu0 0
    %3212 = vmatpush.bf16.msra.mxu0 0
    %3213 = vmatpush.bf16.msra.mxu0 0
    %3214 = vmatpush.bf16.msra.mxu0 0
    %3215 = vmatpush.bf16.msra.mxu0 %v3187
    %3216 = vmatpush.bf16.msra.mxu0 %v3183
    %3217 = vmatpush.bf16.msra.mxu0 %v3179
    %3218 = vmatpush.bf16.msra.mxu0 %v3175
    %3219 = vmatmul.bf16.gmra.mxu0 %v3209
    %v3220 = vpop.f32.mrf.mxu0
    %v3221 = vadd.f32 0.0, %v3220
    %v3222 = vpop.f32.mrf.mxu0
    %3223 = vdwg.mxu0
    %3224 = vmatpush.bf16.msra.mxu0 0
    %3225 = vmatpush.bf16.msra.mxu0 0
    %3226 = vmatpush.bf16.msra.mxu0 0
    %3227 = vmatpush.bf16.msra.mxu0 0
    %3228 = vmatpush.bf16.msra.mxu0 %v3188
    %3229 = vmatpush.bf16.msra.mxu0 %v3184
    %3230 = vmatpush.bf16.msra.mxu0 %v3180
    %3231 = vmatpush.bf16.msra.mxu0 %v3176
    %3232 = vmatmul.bf16.gmra.mxu0 %v3209
    %v3233 = vpop.f32.mrf.mxu0
    %v3234 = vadd.f32 0.0, %v3233
    %v3235 = vpop.f32.mrf.mxu0
    %3236 = vdwg.mxu0
    %3237 = vmatpush.bf16.msra.mxu0 0
    %3238 = vmatpush.bf16.msra.mxu0 0
    %3239 = vmatpush.bf16.msra.mxu0 0
    %3240 = vmatpush.bf16.msra.mxu0 0
    %3241 = vmatpush.bf16.msra.mxu0 %v3189
    %3242 = vmatpush.bf16.msra.mxu0 %v3185
    %3243 = vmatpush.bf16.msra.mxu0 %v3181
    %3244 = vmatpush.bf16.msra.mxu0 %v3177
    %3245 = vmatmul.bf16.gmra.mxu0 %v3209
    %v3246 = vpop.f32.mrf.mxu0
    %v3247 = vadd.f32 0.0, %v3246
    %v3248 = vpop.f32.mrf.mxu0
    %3249 = vdwg.mxu0
    %3250 = vmatpush.bf16.msra.mxu0 0
    %3251 = vmatpush.bf16.msra.mxu0 0
    %3252 = vmatpush.bf16.msra.mxu0 0
    %3253 = vmatpush.bf16.msra.mxu0 0
    %3254 = vmatpush.bf16.msra.mxu0 %v3190
    %3255 = vmatpush.bf16.msra.mxu0 %v3186
    %3256 = vmatpush.bf16.msra.mxu0 %v3182
    %3257 = vmatpush.bf16.msra.mxu0 %v3178
    %3258 = vmatmul.bf16.gmra.mxu0 %v3209
    %v3259 = vpop.f32.mrf.mxu0
    %v3260 = vadd.f32 0.0, %v3259
    %v3261 = vpop.f32.mrf.mxu0
    %3262 = vdwg.mxu0
    %v3279 = vunpack.c.l.b16 %v3094
    %v3280 = vunpack.c.h.b16 %v3094
    %v3281 = vunpack.c.l.b16 %v3095
    %v3282 = vunpack.c.h.b16 %v3095
    %v3283 = vunpack.c.l.b16 %v3096
    %v3284 = vunpack.c.h.b16 %v3096
    %v3285 = vunpack.c.l.b16 %v3097
    %v3286 = vunpack.c.h.b16 %v3097
    %v3287 = vunpack.c.l.b16 %v3098
    %v3288 = vunpack.c.h.b16 %v3098
    %v3289 = vunpack.c.l.b16 %v3099
    %v3290 = vunpack.c.h.b16 %v3099
    %v3291 = vunpack.c.l.b16 %v3100
    %v3292 = vunpack.c.h.b16 %v3100
    %v3293 = vunpack.c.l.b16 %v3101
    %v3294 = vunpack.c.h.b16 %v3101
    %v3295 = vunpack.c.l.b16 %v3102
    %v3296 = vunpack.c.h.b16 %v3102
    %v3297 = vunpack.c.l.b16 %v3103
    %v3298 = vunpack.c.h.b16 %v3103
    %v3299 = vunpack.c.l.b16 %v3104
    %v3300 = vunpack.c.h.b16 %v3104
    %v3301 = vunpack.c.l.b16 %v3105
    %v3302 = vunpack.c.h.b16 %v3105
    %v3303 = vunpack.c.l.b16 %v3106
    %v3304 = vunpack.c.h.b16 %v3106
    %v3305 = vunpack.c.l.b16 %v3107
    %v3306 = vunpack.c.h.b16 %v3107
    %v3307 = vunpack.c.l.b16 %v3108
    %v3308 = vunpack.c.h.b16 %v3108
    %v3309 = vunpack.c.l.b16 %v3109
    %v3310 = vunpack.c.h.b16 %v3109
    %v3311 = vpack.c.b16 %v3283, %v3279
    %v3312 = vpack.c.b16 %v3284, %v3280
    %v3313 = vpack.c.b16 %v3285, %v3281
    %v3314 = vpack.c.b16 %v3286, %v3282
    %v3315 = vpack.c.b16 %v3291, %v3287
    %v3316 = vpack.c.b16 %v3292, %v3288
    %v3317 = vpack.c.b16 %v3293, %v3289
    %v3318 = vpack.c.b16 %v3294, %v3290
    %v3319 = vpack.c.b16 %v3299, %v3295
    %v3320 = vpack.c.b16 %v3300, %v3296
    %v3321 = vpack.c.b16 %v3301, %v3297
    %v3322 = vpack.c.b16 %v3302, %v3298
    %v3323 = vpack.c.b16 %v3307, %v3303
    %v3324 = vpack.c.b16 %v3308, %v3304
    %v3325 = vpack.c.b16 %v3309, %v3305
    %v3326 = vpack.c.b16 %v3310, %v3306
    %v3344 = vsel %vm3207, %v3093, 0
    %3346 = vmatpush.bf16.msra.mxu0 0
    %3347 = vmatpush.bf16.msra.mxu0 0
    %3348 = vmatpush.bf16.msra.mxu0 0
    %3349 = vmatpush.bf16.msra.mxu0 0
    %3350 = vmatpush.bf16.msra.mxu0 %v3323
    %3351 = vmatpush.bf16.msra.mxu0 %v3319
    %3352 = vmatpush.bf16.msra.mxu0 %v3315
    %3353 = vmatpush.bf16.msra.mxu0 %v3311
    %3354 = vmatmul.bf16.gmra.mxu0 %v3344
    %v3355 = vpop.f32.mrf.mxu0
    %v3356 = vadd.f32 %v3221, %v3355
    %v3357 = vpop.f32.mrf.mxu0
    %3358 = vdwg.mxu0
    %3359 = vmatpush.bf16.msra.mxu0 0
    %3360 = vmatpush.bf16.msra.mxu0 0
    %3361 = vmatpush.bf16.msra.mxu0 0
    %3362 = vmatpush.bf16.msra.mxu0 0
    %3363 = vmatpush.bf16.msra.mxu0 %v3324
    %3364 = vmatpush.bf16.msra.mxu0 %v3320
    %3365 = vmatpush.bf16.msra.mxu0 %v3316
    %3366 = vmatpush.bf16.msra.mxu0 %v3312
    %3367 = vmatmul.bf16.gmra.mxu0 %v3344
    %v3368 = vpop.f32.mrf.mxu0
    %v3369 = vadd.f32 %v3234, %v3368
    %v3370 = vpop.f32.mrf.mxu0
    %3371 = vdwg.mxu0
    %3372 = vmatpush.bf16.msra.mxu0 0
    %3373 = vmatpush.bf16.msra.mxu0 0
    %3374 = vmatpush.bf16.msra.mxu0 0
    %3375 = vmatpush.bf16.msra.mxu0 0
    %3376 = vmatpush.bf16.msra.mxu0 %v3325
    %3377 = vmatpush.bf16.msra.mxu0 %v3321
    %3378 = vmatpush.bf16.msra.mxu0 %v3317
    %3379 = vmatpush.bf16.msra.mxu0 %v3313
    %3380 = vmatmul.bf16.gmra.mxu0 %v3344
    %v3381 = vpop.f32.mrf.mxu0
    %v3382 = vadd.f32 %v3247, %v3381
    %v3383 = vpop.f32.mrf.mxu0
    %3384 = vdwg.mxu0
    %3385 = vmatpush.bf16.msra.mxu0 0
    %3386 = vmatpush.bf16.msra.mxu0 0
    %3387 = vmatpush.bf16.msra.mxu0 0
    %3388 = vmatpush.bf16.msra.mxu0 0
    %3389 = vmatpush.bf16.msra.mxu0 %v3326
    %3390 = vmatpush.bf16.msra.mxu0 %v3322
    %3391 = vmatpush.bf16.msra.mxu0 %v3318
    %3392 = vmatpush.bf16.msra.mxu0 %v3314
    %3393 = vmatmul.bf16.gmra.mxu0 %v3344
    %v3394 = vpop.f32.mrf.mxu0
    %v3395 = vadd.f32 %v3260, %v3394
    %v3396 = vpop.f32.mrf.mxu0
    %3397 = vdwg.mxu0
    %v3398 = vld [vmem:[%s13] sm:$0xf]
    %v3400 = vperm.slane %v3398, 0
    %v3401 = vperm.slane %v3398, 1
    %v3402 = vperm.slane %v3398, 2
    %v3403 = vperm.slane %v3398, 3
    %v3408 = vadd.f32 %v3356, %v3400
    %v3409 = vadd.f32 %v3369, %v3401
    %v3410 = vadd.f32 %v3382, %v3402
    %v3411 = vadd.f32 %v3395, %v3403
    %v3412 = vmax.f32 %v3408, 0.0
    %v3413 = vmax.f32 %v3409, 0.0
    %v3414 = vmax.f32 %v3410, 0.0
    %v3415 = vmax.f32 %v3411, 0.0
    %v3416 = vpack.c.bf16 %v3412, %v3412
    %v3417 = vpack.c.bf16 %v3413, %v3413
    %v3418 = vpack.c.bf16 %v3414, %v3414
    %v3419 = vpack.c.bf16 %v3415, %v3415
    %v3420 = vld [vmem:[#allocation7] sm:$0xff]
    %v3421 = vld [vmem:[#allocation7 + $0x8] sm:$0xff]
    %v3422 = vld [vmem:[#allocation7 + $0x10] sm:$0xff]
    %v3423 = vld [vmem:[#allocation7 + $0x18] sm:$0xff]
    %v3424 = vld [vmem:[#allocation7 + $0x20] sm:$0xff]
    %v3425 = vld [vmem:[#allocation7 + $0x28] sm:$0xff]
    %v3426 = vld [vmem:[#allocation7 + $0x30] sm:$0xff]
    %v3427 = vld [vmem:[#allocation7 + $0x38] sm:$0xff]
    %v3428 = vld [vmem:[#allocation7 + $0x40] sm:$0xff]
    %v3429 = vld [vmem:[#allocation7 + $0x48] sm:$0xff]
    %v3430 = vld [vmem:[#allocation7 + $0x50] sm:$0xff]
    %v3431 = vld [vmem:[#allocation7 + $0x58] sm:$0xff]
    %v3432 = vld [vmem:[#allocation7 + $0x60] sm:$0xff]
    %v3433 = vld [vmem:[#allocation7 + $0x68] sm:$0xff]
    %v3434 = vld [vmem:[#allocation7 + $0x70] sm:$0xff]
    %v3435 = vld [vmem:[#allocation7 + $0x78] sm:$0xff]
    %v3436 = vld [vmem:[#allocation7 + $0x80] sm:$0xff]
    %v3437 = vld [vmem:[#allocation7 + $0x88] sm:$0xff]
    %v3438 = vld [vmem:[#allocation7 + $0x90] sm:$0xff]
    %v3439 = vld [vmem:[#allocation7 + $0x98] sm:$0xff]
    %v3440 = vld [vmem:[#allocation7 + $0xa0] sm:$0xff]
    %v3441 = vld [vmem:[#allocation7 + $0xa8] sm:$0xff]
    %v3442 = vld [vmem:[#allocation7 + $0xb0] sm:$0xff]
    %v3443 = vld [vmem:[#allocation7 + $0xb8] sm:$0xff]
    %v3444 = vld [vmem:[#allocation7 + $0xc0] sm:$0xff]
    %v3445 = vld [vmem:[#allocation7 + $0xc8] sm:$0xff]
    %v3446 = vld [vmem:[#allocation7 + $0xd0] sm:$0xff]
    %v3447 = vld [vmem:[#allocation7 + $0xd8] sm:$0xff]
    %v3448 = vld [vmem:[#allocation7 + $0xe0] sm:$0xff]
    %v3449 = vld [vmem:[#allocation7 + $0xe8] sm:$0xff]
    %v3450 = vld [vmem:[#allocation7 + $0xf0] sm:$0xff]
    %v3451 = vld [vmem:[#allocation7 + $0xf8] sm:$0xff]
    %v3452 = vld [vmem:[#allocation7 + $0x100] sm:$0xff]
    %v3453 = vld [vmem:[#allocation7 + $0x108] sm:$0xff]
    %v3454 = vld [vmem:[#allocation7 + $0x110] sm:$0xff]
    %v3455 = vld [vmem:[#allocation7 + $0x118] sm:$0xff]
    %v3456 = vld [vmem:[#allocation7 + $0x120] sm:$0xff]
    %v3457 = vld [vmem:[#allocation7 + $0x128] sm:$0xff]
    %v3458 = vld [vmem:[#allocation7 + $0x130] sm:$0xff]
    %v3459 = vld [vmem:[#allocation7 + $0x138] sm:$0xff]
    %v3460 = vld [vmem:[#allocation7 + $0x140] sm:$0xff]
    %v3461 = vld [vmem:[#allocation7 + $0x148] sm:$0xff]
    %v3462 = vld [vmem:[#allocation7 + $0x150] sm:$0xff]
    %v3463 = vld [vmem:[#allocation7 + $0x158] sm:$0xff]
    %v3464 = vld [vmem:[#allocation7 + $0x160] sm:$0xff]
    %v3465 = vld [vmem:[#allocation7 + $0x168] sm:$0xff]
    %v3466 = vld [vmem:[#allocation7 + $0x170] sm:$0xff]
    %v3467 = vld [vmem:[#allocation7 + $0x178] sm:$0xff]
    %v3468 = vld [vmem:[#allocation7 + $0x180] sm:$0xff]
    %v3469 = vld [vmem:[#allocation7 + $0x188] sm:$0xff]
    %v3470 = vld [vmem:[#allocation7 + $0x190] sm:$0xff]
    %v3471 = vld [vmem:[#allocation7 + $0x198] sm:$0xff]
    %v3472 = vld [vmem:[#allocation7 + $0x1a0] sm:$0xff]
    %v3473 = vld [vmem:[#allocation7 + $0x1a8] sm:$0xff]
    %v3474 = vld [vmem:[#allocation7 + $0x1b0] sm:$0xff]
    %v3475 = vld [vmem:[#allocation7 + $0x1b8] sm:$0xff]
    %v3476 = vld [vmem:[#allocation7 + $0x1c0] sm:$0xff]
    %v3477 = vld [vmem:[#allocation7 + $0x1c8] sm:$0xff]
    %v3478 = vld [vmem:[#allocation7 + $0x1d0] sm:$0xff]
    %v3479 = vld [vmem:[#allocation7 + $0x1d8] sm:$0xff]
    %v3480 = vld [vmem:[#allocation7 + $0x1e0] sm:$0xff]
    %v3481 = vld [vmem:[#allocation7 + $0x1e8] sm:$0xff]
    %v3482 = vld [vmem:[#allocation7 + $0x1f0] sm:$0xff]
    %v3483 = vld [vmem:[#allocation7 + $0x1f8] sm:$0xff]
    %v3484 = vld [vmem:[%s15] sm:$0x3]
    %v3486 = vperm.slane %v3484, 0
    %v3487 = vperm.slane %v3484, 1
    %v3554 = vunpack.c.l.b16 %v3420
    %v3555 = vunpack.c.h.b16 %v3420
    %v3556 = vunpack.c.l.b16 %v3421
    %v3557 = vunpack.c.h.b16 %v3421
    %v3558 = vunpack.c.l.b16 %v3422
    %v3559 = vunpack.c.h.b16 %v3422
    %v3560 = vunpack.c.l.b16 %v3423
    %v3561 = vunpack.c.h.b16 %v3423
    %v3562 = vunpack.c.l.b16 %v3424
    %v3563 = vunpack.c.h.b16 %v3424
    %v3564 = vunpack.c.l.b16 %v3425
    %v3565 = vunpack.c.h.b16 %v3425
    %v3566 = vunpack.c.l.b16 %v3426
    %v3567 = vunpack.c.h.b16 %v3426
    %v3568 = vunpack.c.l.b16 %v3427
    %v3569 = vunpack.c.h.b16 %v3427
    %v3570 = vunpack.c.l.b16 %v3428
    %v3571 = vunpack.c.h.b16 %v3428
    %v3572 = vunpack.c.l.b16 %v3429
    %v3573 = vunpack.c.h.b16 %v3429
    %v3574 = vunpack.c.l.b16 %v3430
    %v3575 = vunpack.c.h.b16 %v3430
    %v3576 = vunpack.c.l.b16 %v3431
    %v3577 = vunpack.c.h.b16 %v3431
    %v3578 = vunpack.c.l.b16 %v3432
    %v3579 = vunpack.c.h.b16 %v3432
    %v3580 = vunpack.c.l.b16 %v3433
    %v3581 = vunpack.c.h.b16 %v3433
    %v3582 = vunpack.c.l.b16 %v3434
    %v3583 = vunpack.c.h.b16 %v3434
    %v3584 = vunpack.c.l.b16 %v3435
    %v3585 = vunpack.c.h.b16 %v3435
    %v3586 = vunpack.c.l.b16 %v3436
    %v3587 = vunpack.c.h.b16 %v3436
    %v3588 = vunpack.c.l.b16 %v3437
    %v3589 = vunpack.c.h.b16 %v3437
    %v3590 = vunpack.c.l.b16 %v3438
    %v3591 = vunpack.c.h.b16 %v3438
    %v3592 = vunpack.c.l.b16 %v3439
    %v3593 = vunpack.c.h.b16 %v3439
    %v3594 = vunpack.c.l.b16 %v3440
    %v3595 = vunpack.c.h.b16 %v3440
    %v3596 = vunpack.c.l.b16 %v3441
    %v3597 = vunpack.c.h.b16 %v3441
    %v3598 = vunpack.c.l.b16 %v3442
    %v3599 = vunpack.c.h.b16 %v3442
    %v3600 = vunpack.c.l.b16 %v3443
    %v3601 = vunpack.c.h.b16 %v3443
    %v3602 = vunpack.c.l.b16 %v3444
    %v3603 = vunpack.c.h.b16 %v3444
    %v3604 = vunpack.c.l.b16 %v3445
    %v3605 = vunpack.c.h.b16 %v3445
    %v3606 = vunpack.c.l.b16 %v3446
    %v3607 = vunpack.c.h.b16 %v3446
    %v3608 = vunpack.c.l.b16 %v3447
    %v3609 = vunpack.c.h.b16 %v3447
    %v3610 = vunpack.c.l.b16 %v3448
    %v3611 = vunpack.c.h.b16 %v3448
    %v3612 = vunpack.c.l.b16 %v3449
    %v3613 = vunpack.c.h.b16 %v3449
    %v3614 = vunpack.c.l.b16 %v3450
    %v3615 = vunpack.c.h.b16 %v3450
    %v3616 = vunpack.c.l.b16 %v3451
    %v3617 = vunpack.c.h.b16 %v3451
    %v3618 = vunpack.c.l.b16 %v3452
    %v3619 = vunpack.c.h.b16 %v3452
    %v3620 = vunpack.c.l.b16 %v3453
    %v3621 = vunpack.c.h.b16 %v3453
    %v3622 = vunpack.c.l.b16 %v3454
    %v3623 = vunpack.c.h.b16 %v3454
    %v3624 = vunpack.c.l.b16 %v3455
    %v3625 = vunpack.c.h.b16 %v3455
    %v3626 = vunpack.c.l.b16 %v3456
    %v3627 = vunpack.c.h.b16 %v3456
    %v3628 = vunpack.c.l.b16 %v3457
    %v3629 = vunpack.c.h.b16 %v3457
    %v3630 = vunpack.c.l.b16 %v3458
    %v3631 = vunpack.c.h.b16 %v3458
    %v3632 = vunpack.c.l.b16 %v3459
    %v3633 = vunpack.c.h.b16 %v3459
    %v3634 = vunpack.c.l.b16 %v3460
    %v3635 = vunpack.c.h.b16 %v3460
    %v3636 = vunpack.c.l.b16 %v3461
    %v3637 = vunpack.c.h.b16 %v3461
    %v3638 = vunpack.c.l.b16 %v3462
    %v3639 = vunpack.c.h.b16 %v3462
    %v3640 = vunpack.c.l.b16 %v3463
    %v3641 = vunpack.c.h.b16 %v3463
    %v3642 = vunpack.c.l.b16 %v3464
    %v3643 = vunpack.c.h.b16 %v3464
    %v3644 = vunpack.c.l.b16 %v3465
    %v3645 = vunpack.c.h.b16 %v3465
    %v3646 = vunpack.c.l.b16 %v3466
    %v3647 = vunpack.c.h.b16 %v3466
    %v3648 = vunpack.c.l.b16 %v3467
    %v3649 = vunpack.c.h.b16 %v3467
    %v3650 = vunpack.c.l.b16 %v3468
    %v3651 = vunpack.c.h.b16 %v3468
    %v3652 = vunpack.c.l.b16 %v3469
    %v3653 = vunpack.c.h.b16 %v3469
    %v3654 = vunpack.c.l.b16 %v3470
    %v3655 = vunpack.c.h.b16 %v3470
    %v3656 = vunpack.c.l.b16 %v3471
    %v3657 = vunpack.c.h.b16 %v3471
    %v3658 = vunpack.c.l.b16 %v3472
    %v3659 = vunpack.c.h.b16 %v3472
    %v3660 = vunpack.c.l.b16 %v3473
    %v3661 = vunpack.c.h.b16 %v3473
    %v3662 = vunpack.c.l.b16 %v3474
    %v3663 = vunpack.c.h.b16 %v3474
    %v3664 = vunpack.c.l.b16 %v3475
    %v3665 = vunpack.c.h.b16 %v3475
    %v3666 = vunpack.c.l.b16 %v3476
    %v3667 = vunpack.c.h.b16 %v3476
    %v3668 = vunpack.c.l.b16 %v3477
    %v3669 = vunpack.c.h.b16 %v3477
    %v3670 = vunpack.c.l.b16 %v3478
    %v3671 = vunpack.c.h.b16 %v3478
    %v3672 = vunpack.c.l.b16 %v3479
    %v3673 = vunpack.c.h.b16 %v3479
    %v3674 = vunpack.c.l.b16 %v3480
    %v3675 = vunpack.c.h.b16 %v3480
    %v3676 = vunpack.c.l.b16 %v3481
    %v3677 = vunpack.c.h.b16 %v3481
    %v3678 = vunpack.c.l.b16 %v3482
    %v3679 = vunpack.c.h.b16 %v3482
    %v3680 = vunpack.c.l.b16 %v3483
    %v3681 = vunpack.c.h.b16 %v3483
    %v3682 = vpack.c.b16 %v3556, %v3554
    %v3683 = vpack.c.b16 %v3557, %v3555
    %v3684 = vpack.c.b16 %v3560, %v3558
    %v3685 = vpack.c.b16 %v3561, %v3559
    %v3686 = vpack.c.b16 %v3564, %v3562
    %v3687 = vpack.c.b16 %v3565, %v3563
    %v3688 = vpack.c.b16 %v3568, %v3566
    %v3689 = vpack.c.b16 %v3569, %v3567
    %v3690 = vpack.c.b16 %v3572, %v3570
    %v3691 = vpack.c.b16 %v3573, %v3571
    %v3692 = vpack.c.b16 %v3576, %v3574
    %v3693 = vpack.c.b16 %v3577, %v3575
    %v3694 = vpack.c.b16 %v3580, %v3578
    %v3695 = vpack.c.b16 %v3581, %v3579
    %v3696 = vpack.c.b16 %v3584, %v3582
    %v3697 = vpack.c.b16 %v3585, %v3583
    %v3698 = vpack.c.b16 %v3588, %v3586
    %v3699 = vpack.c.b16 %v3589, %v3587
    %v3700 = vpack.c.b16 %v3592, %v3590
    %v3701 = vpack.c.b16 %v3593, %v3591
    %v3702 = vpack.c.b16 %v3596, %v3594
    %v3703 = vpack.c.b16 %v3597, %v3595
    %v3704 = vpack.c.b16 %v3600, %v3598
    %v3705 = vpack.c.b16 %v3601, %v3599
    %v3706 = vpack.c.b16 %v3604, %v3602
    %v3707 = vpack.c.b16 %v3605, %v3603
    %v3708 = vpack.c.b16 %v3608, %v3606
    %v3709 = vpack.c.b16 %v3609, %v3607
    %v3710 = vpack.c.b16 %v3612, %v3610
    %v3711 = vpack.c.b16 %v3613, %v3611
    %v3712 = vpack.c.b16 %v3616, %v3614
    %v3713 = vpack.c.b16 %v3617, %v3615
    %v3714 = vpack.c.b16 %v3620, %v3618
    %v3715 = vpack.c.b16 %v3621, %v3619
    %v3716 = vpack.c.b16 %v3624, %v3622
    %v3717 = vpack.c.b16 %v3625, %v3623
    %v3718 = vpack.c.b16 %v3628, %v3626
    %v3719 = vpack.c.b16 %v3629, %v3627
    %v3720 = vpack.c.b16 %v3632, %v3630
    %v3721 = vpack.c.b16 %v3633, %v3631
    %v3722 = vpack.c.b16 %v3636, %v3634
    %v3723 = vpack.c.b16 %v3637, %v3635
    %v3724 = vpack.c.b16 %v3640, %v3638
    %v3725 = vpack.c.b16 %v3641, %v3639
    %v3726 = vpack.c.b16 %v3644, %v3642
    %v3727 = vpack.c.b16 %v3645, %v3643
    %v3728 = vpack.c.b16 %v3648, %v3646
    %v3729 = vpack.c.b16 %v3649, %v3647
    %v3730 = vpack.c.b16 %v3652, %v3650
    %v3731 = vpack.c.b16 %v3653, %v3651
    %v3732 = vpack.c.b16 %v3656, %v3654
    %v3733 = vpack.c.b16 %v3657, %v3655
    %v3734 = vpack.c.b16 %v3660, %v3658
    %v3735 = vpack.c.b16 %v3661, %v3659
    %v3736 = vpack.c.b16 %v3664, %v3662
    %v3737 = vpack.c.b16 %v3665, %v3663
    %v3738 = vpack.c.b16 %v3668, %v3666
    %v3739 = vpack.c.b16 %v3669, %v3667
    %v3740 = vpack.c.b16 %v3672, %v3670
    %v3741 = vpack.c.b16 %v3673, %v3671
    %v3742 = vpack.c.b16 %v3676, %v3674
    %v3743 = vpack.c.b16 %v3677, %v3675
    %v3744 = vpack.c.b16 %v3680, %v3678
    %v3745 = vpack.c.b16 %v3681, %v3679
    %3810 = vmatpush.bf16.msra.mxu0 %v3696
    %3811 = vmatpush.bf16.msra.mxu0 %v3694
    %3812 = vmatpush.bf16.msra.mxu0 %v3692
    %3813 = vmatpush.bf16.msra.mxu0 %v3690
    %3814 = vmatpush.bf16.msra.mxu0 %v3688
    %3815 = vmatpush.bf16.msra.mxu0 %v3686
    %3816 = vmatpush.bf16.msra.mxu0 %v3684
    %3817 = vmatpush.bf16.msra.mxu0 %v3682
    %3818 = vmatmul.bf16.gmra.mxu0 %v3416
    %v3819 = vpop.f32.mrf.mxu0
    %v3820 = vadd.f32 %v3486, %v3819
    %v3821 = vpop.f32.mrf.mxu0
    %3822 = vdwg.mxu0
    %3823 = vmatpush.bf16.msra.mxu0 %v3712
    %3824 = vmatpush.bf16.msra.mxu0 %v3710
    %3825 = vmatpush.bf16.msra.mxu0 %v3708
    %3826 = vmatpush.bf16.msra.mxu0 %v3706
    %3827 = vmatpush.bf16.msra.mxu0 %v3704
    %3828 = vmatpush.bf16.msra.mxu0 %v3702
    %3829 = vmatpush.bf16.msra.mxu0 %v3700
    %3830 = vmatpush.bf16.msra.mxu0 %v3698
    %3831 = vmatmul.bf16.gmra.mxu0 %v3417
    %v3832 = vpop.f32.mrf.mxu0
    %v3833 = vadd.f32 %v3820, %v3832
    %v3834 = vpop.f32.mrf.mxu0
    %3835 = vdwg.mxu0
    %3836 = vmatpush.bf16.msra.mxu0 %v3728
    %3837 = vmatpush.bf16.msra.mxu0 %v3726
    %3838 = vmatpush.bf16.msra.mxu0 %v3724
    %3839 = vmatpush.bf16.msra.mxu0 %v3722
    %3840 = vmatpush.bf16.msra.mxu0 %v3720
    %3841 = vmatpush.bf16.msra.mxu0 %v3718
    %3842 = vmatpush.bf16.msra.mxu0 %v3716
    %3843 = vmatpush.bf16.msra.mxu0 %v3714
    %3844 = vmatmul.bf16.gmra.mxu0 %v3418
    %v3845 = vpop.f32.mrf.mxu0
    %v3846 = vadd.f32 %v3833, %v3845
    %v3847 = vpop.f32.mrf.mxu0
    %3848 = vdwg.mxu0
    %3849 = vmatpush.bf16.msra.mxu0 %v3744
    %3850 = vmatpush.bf16.msra.mxu0 %v3742
    %3851 = vmatpush.bf16.msra.mxu0 %v3740
    %3852 = vmatpush.bf16.msra.mxu0 %v3738
    %3853 = vmatpush.bf16.msra.mxu0 %v3736
    %3854 = vmatpush.bf16.msra.mxu0 %v3734
    %3855 = vmatpush.bf16.msra.mxu0 %v3732
    %3856 = vmatpush.bf16.msra.mxu0 %v3730
    %3857 = vmatmul.bf16.gmra.mxu0 %v3419
    %v3858 = vpop.f32.mrf.mxu0
    %v3859 = vadd.f32 %v3846, %v3858
    %v3860 = vpop.f32.mrf.mxu0
    %3861 = vdwg.mxu0
    %3862 = vmatpush.bf16.msra.mxu0 %v3697
    %3863 = vmatpush.bf16.msra.mxu0 %v3695
    %3864 = vmatpush.bf16.msra.mxu0 %v3693
    %3865 = vmatpush.bf16.msra.mxu0 %v3691
    %3866 = vmatpush.bf16.msra.mxu0 %v3689
    %3867 = vmatpush.bf16.msra.mxu0 %v3687
    %3868 = vmatpush.bf16.msra.mxu0 %v3685
    %3869 = vmatpush.bf16.msra.mxu0 %v3683
    %3870 = vmatmul.bf16.gmra.mxu0 %v3416
    %v3871 = vpop.f32.mrf.mxu0
    %v3872 = vadd.f32 %v3487, %v3871
    %v3873 = vpop.f32.mrf.mxu0
    %3874 = vdwg.mxu0
    %3875 = vmatpush.bf16.msra.mxu0 %v3713
    %3876 = vmatpush.bf16.msra.mxu0 %v3711
    %3877 = vmatpush.bf16.msra.mxu0 %v3709
    %3878 = vmatpush.bf16.msra.mxu0 %v3707
    %3879 = vmatpush.bf16.msra.mxu0 %v3705
    %3880 = vmatpush.bf16.msra.mxu0 %v3703
    %3881 = vmatpush.bf16.msra.mxu0 %v3701
    %3882 = vmatpush.bf16.msra.mxu0 %v3699
    %3883 = vmatmul.bf16.gmra.mxu0 %v3417
    %v3884 = vpop.f32.mrf.mxu0
    %v3885 = vadd.f32 %v3872, %v3884
    %v3886 = vpop.f32.mrf.mxu0
    %3887 = vdwg.mxu0
    %3888 = vmatpush.bf16.msra.mxu0 %v3729
    %3889 = vmatpush.bf16.msra.mxu0 %v3727
    %3890 = vmatpush.bf16.msra.mxu0 %v3725
    %3891 = vmatpush.bf16.msra.mxu0 %v3723
    %3892 = vmatpush.bf16.msra.mxu0 %v3721
    %3893 = vmatpush.bf16.msra.mxu0 %v3719
    %3894 = vmatpush.bf16.msra.mxu0 %v3717
    %3895 = vmatpush.bf16.msra.mxu0 %v3715
    %3896 = vmatmul.bf16.gmra.mxu0 %v3418
    %v3897 = vpop.f32.mrf.mxu0
    %v3898 = vadd.f32 %v3885, %v3897
    %v3899 = vpop.f32.mrf.mxu0
    %3900 = vdwg.mxu0
    %3901 = vmatpush.bf16.msra.mxu0 %v3745
    %3902 = vmatpush.bf16.msra.mxu0 %v3743
    %3903 = vmatpush.bf16.msra.mxu0 %v3741
    %3904 = vmatpush.bf16.msra.mxu0 %v3739
    %3905 = vmatpush.bf16.msra.mxu0 %v3737
    %3906 = vmatpush.bf16.msra.mxu0 %v3735
    %3907 = vmatpush.bf16.msra.mxu0 %v3733
    %3908 = vmatpush.bf16.msra.mxu0 %v3731
    %3909 = vmatmul.bf16.gmra.mxu0 %v3419
    %v3910 = vpop.f32.mrf.mxu0
    %v3911 = vadd.f32 %v3898, %v3910
    %v3912 = vpop.f32.mrf.mxu0
    %3913 = vdwg.mxu0
    %v3914 = vmax.f32 %v3859, 0.0
    %v3915 = vmax.f32 %v3911, 0.0
    %v3916 = vpack.c.bf16 %v3914, %v3914
    %v3917 = vpack.c.bf16 %v3915, %v3915
    %v3918 = vld [vmem:[%s16] sm:$0xf]
    %v3919 = vld [vmem:[%s16 + $0x4] sm:$0xf]
    %v3920 = vld [vmem:[%s16 + $0x8] sm:$0xf]
    %v3921 = vld [vmem:[%s16 + $0xc] sm:$0xf]
    %v3922 = vld [vmem:[%s16 + $0x10] sm:$0xf]
    %v3923 = vld [vmem:[%s16 + $0x14] sm:$0xf]
    %v3924 = vld [vmem:[%s16 + $0x18] sm:$0xf]
    %v3925 = vld [vmem:[%s16 + $0x1c] sm:$0xf]
    %v3926 = vld [vmem:[%s16 + $0x20] sm:$0xf]
    %v3927 = vld [vmem:[%s16 + $0x24] sm:$0xf]
    %v3928 = vld [vmem:[%s16 + $0x28] sm:$0xf]
    %v3929 = vld [vmem:[%s16 + $0x2c] sm:$0xf]
    %v3930 = vld [vmem:[%s16 + $0x30] sm:$0xf]
    %v3931 = vld [vmem:[%s16 + $0x34] sm:$0xf]
    %v3932 = vld [vmem:[%s16 + $0x38] sm:$0xf]
    %v3933 = vld [vmem:[%s16 + $0x3c] sm:$0xf]
    %v3934 = vld [vmem:[%s16 + $0x40] sm:$0xf]
    %v3935 = vld [vmem:[%s16 + $0x44] sm:$0xf]
    %v3936 = vld [vmem:[%s16 + $0x48] sm:$0xf]
    %v3937 = vld [vmem:[%s16 + $0x4c] sm:$0xf]
    %v3938 = vld [vmem:[%s16 + $0x50] sm:$0xf]
    %v3939 = vld [vmem:[%s16 + $0x54] sm:$0xf]
    %v3940 = vld [vmem:[%s16 + $0x58] sm:$0xf]
    %v3941 = vld [vmem:[%s16 + $0x5c] sm:$0xf]
    %v3942 = vld [vmem:[%s16 + $0x60] sm:$0xf]
    %v3943 = vld [vmem:[%s16 + $0x64] sm:$0xf]
    %v3944 = vld [vmem:[%s16 + $0x68] sm:$0xf]
    %v3945 = vld [vmem:[%s16 + $0x6c] sm:$0xf]
    %v3946 = vld [vmem:[%s16 + $0x70] sm:$0xf]
    %v3947 = vld [vmem:[%s16 + $0x74] sm:$0xf]
    %v3948 = vld [vmem:[%s16 + $0x78] sm:$0xf]
    %v3949 = vld [vmem:[%s16 + $0x7c] sm:$0xf]
    %v3950 = vld [vmem:[%s17] sm:$0x1]
    %v3952 = vperm.slane %v3950, 0
    %v3986 = vunpack.c.l.b16 %v3918
    %v3987 = vunpack.c.l.b16 %v3919
    %v3988 = vunpack.c.l.b16 %v3920
    %v3989 = vunpack.c.l.b16 %v3921
    %v3990 = vunpack.c.l.b16 %v3922
    %v3991 = vunpack.c.l.b16 %v3923
    %v3992 = vunpack.c.l.b16 %v3924
    %v3993 = vunpack.c.l.b16 %v3925
    %v3994 = vunpack.c.l.b16 %v3926
    %v3995 = vunpack.c.l.b16 %v3927
    %v3996 = vunpack.c.l.b16 %v3928
    %v3997 = vunpack.c.l.b16 %v3929
    %v3998 = vunpack.c.l.b16 %v3930
    %v3999 = vunpack.c.l.b16 %v3931
    %v4000 = vunpack.c.l.b16 %v3932
    %v4001 = vunpack.c.l.b16 %v3933
    %v4002 = vunpack.c.l.b16 %v3934
    %v4003 = vunpack.c.l.b16 %v3935
    %v4004 = vunpack.c.l.b16 %v3936
    %v4005 = vunpack.c.l.b16 %v3937
    %v4006 = vunpack.c.l.b16 %v3938
    %v4007 = vunpack.c.l.b16 %v3939
    %v4008 = vunpack.c.l.b16 %v3940
    %v4009 = vunpack.c.l.b16 %v3941
    %v4010 = vunpack.c.l.b16 %v3942
    %v4011 = vunpack.c.l.b16 %v3943
    %v4012 = vunpack.c.l.b16 %v3944
    %v4013 = vunpack.c.l.b16 %v3945
    %v4014 = vunpack.c.l.b16 %v3946
    %v4015 = vunpack.c.l.b16 %v3947
    %v4016 = vunpack.c.l.b16 %v3948
    %v4017 = vunpack.c.l.b16 %v3949
    %v4018 = vpack.c.b16 %v3987, %v3986
    %v4019 = vpack.c.b16 %v3989, %v3988
    %v4020 = vpack.c.b16 %v3991, %v3990
    %v4021 = vpack.c.b16 %v3993, %v3992
    %v4022 = vpack.c.b16 %v3995, %v3994
    %v4023 = vpack.c.b16 %v3997, %v3996
    %v4024 = vpack.c.b16 %v3999, %v3998
    %v4025 = vpack.c.b16 %v4001, %v4000
    %v4026 = vpack.c.b16 %v4003, %v4002
    %v4027 = vpack.c.b16 %v4005, %v4004
    %v4028 = vpack.c.b16 %v4007, %v4006
    %v4029 = vpack.c.b16 %v4009, %v4008
    %v4030 = vpack.c.b16 %v4011, %v4010
    %v4031 = vpack.c.b16 %v4013, %v4012
    %v4032 = vpack.c.b16 %v4015, %v4014
    %v4033 = vpack.c.b16 %v4017, %v4016
    %4050 = vmatpush.bf16.msra.mxu0 %v4025
    %4051 = vmatpush.bf16.msra.mxu0 %v4024
    %4052 = vmatpush.bf16.msra.mxu0 %v4023
    %4053 = vmatpush.bf16.msra.mxu0 %v4022
    %4054 = vmatpush.bf16.msra.mxu0 %v4021
    %4055 = vmatpush.bf16.msra.mxu0 %v4020
    %4056 = vmatpush.bf16.msra.mxu0 %v4019
    %4057 = vmatpush.bf16.msra.mxu0 %v4018
    %4058 = vmatmul.bf16.gmra.mxu0 %v3916
    %v4059 = vpop.f32.mrf.mxu0
    %v4060 = vadd.f32 %v3952, %v4059
    %v4061 = vpop.f32.mrf.mxu0
    %4062 = vdwg.mxu0
    %4063 = vmatpush.bf16.msra.mxu0 %v4033
    %4064 = vmatpush.bf16.msra.mxu0 %v4032
    %4065 = vmatpush.bf16.msra.mxu0 %v4031
    %4066 = vmatpush.bf16.msra.mxu0 %v4030
    %4067 = vmatpush.bf16.msra.mxu0 %v4029
    %4068 = vmatpush.bf16.msra.mxu0 %v4028
    %4069 = vmatpush.bf16.msra.mxu0 %v4027
    %4070 = vmatpush.bf16.msra.mxu0 %v4026
    %4071 = vmatmul.bf16.gmra.mxu0 %v3917
    %v4072 = vpop.f32.mrf.mxu0
    %v4073 = vadd.f32 %v4060, %v4072
    %v4074 = vpop.f32.mrf.mxu0
    %4075 = vdwg.mxu0
    %v4076 = vmax.f32 %v4073, 0.0
    %v4077 = vpack.c.bf16 %v4076, %v4076
    %v4078 = vld [vmem:[%s18] sm:$0xf]
    %v4079 = vld [vmem:[%s18 + $0x4] sm:$0xf]
    %v4080 = vld [vmem:[%s18 + $0x8] sm:$0xf]
    %v4081 = vld [vmem:[%s18 + $0xc] sm:$0xf]
    %v4082 = vld [vmem:[%s18 + $0x10] sm:$0xf]
    %v4083 = vld [vmem:[%s18 + $0x14] sm:$0xf]
    %v4084 = vld [vmem:[%s18 + $0x18] sm:$0xf]
    %v4085 = vld [vmem:[%s18 + $0x1c] sm:$0xf]
    %v4086 = vld [vmem:[%s18 + $0x20] sm:$0xf]
    %v4087 = vld [vmem:[%s18 + $0x24] sm:$0xf]
    %v4088 = vld [vmem:[%s18 + $0x28] sm:$0xf]
    %v4089 = vld [vmem:[%s18 + $0x2c] sm:$0xf]
    %v4090 = vld [vmem:[%s18 + $0x30] sm:$0xf]
    %v4091 = vld [vmem:[%s18 + $0x34] sm:$0xf]
    %v4092 = vld [vmem:[%s18 + $0x38] sm:$0xf]
    %v4093 = vld [vmem:[%s18 + $0x3c] sm:$0xf]
    %v4094 = vld [vmem:[%s19] sm:$0x1]
    %v4096 = vperm.slane %v4094, 0
    %v4114 = vunpack.c.l.b16 %v4078
    %v4115 = vunpack.c.l.b16 %v4079
    %v4116 = vunpack.c.l.b16 %v4080
    %v4117 = vunpack.c.l.b16 %v4081
    %v4118 = vunpack.c.l.b16 %v4082
    %v4119 = vunpack.c.l.b16 %v4083
    %v4120 = vunpack.c.l.b16 %v4084
    %v4121 = vunpack.c.l.b16 %v4085
    %v4122 = vunpack.c.l.b16 %v4086
    %v4123 = vunpack.c.l.b16 %v4087
    %v4124 = vunpack.c.l.b16 %v4088
    %v4125 = vunpack.c.l.b16 %v4089
    %v4126 = vunpack.c.l.b16 %v4090
    %v4127 = vunpack.c.l.b16 %v4091
    %v4128 = vunpack.c.l.b16 %v4092
    %v4129 = vunpack.c.l.b16 %v4093
    %v4130 = vpack.c.b16 %v4115, %v4114
    %v4131 = vpack.c.b16 %v4117, %v4116
    %v4132 = vpack.c.b16 %v4119, %v4118
    %v4133 = vpack.c.b16 %v4121, %v4120
    %v4134 = vpack.c.b16 %v4123, %v4122
    %v4135 = vpack.c.b16 %v4125, %v4124
    %v4136 = vpack.c.b16 %v4127, %v4126
    %v4137 = vpack.c.b16 %v4129, %v4128
    %4146 = vmatpush.bf16.msra.mxu0 %v4137
    %4147 = vmatpush.bf16.msra.mxu0 %v4136
    %4148 = vmatpush.bf16.msra.mxu0 %v4135
    %4149 = vmatpush.bf16.msra.mxu0 %v4134
    %4150 = vmatpush.bf16.msra.mxu0 %v4133
    %4151 = vmatpush.bf16.msra.mxu0 %v4132
    %4152 = vmatpush.bf16.msra.mxu0 %v4131
    %4153 = vmatpush.bf16.msra.mxu0 %v4130
    %4154 = vmatmul.bf16.gmra.mxu0 %v4077
    %v4155 = vpop.f32.mrf.mxu0
    %v4156 = vadd.f32 %v4096, %v4155
    %v4157 = vpop.f32.mrf.mxu0
    %4158 = vdwg.mxu0
    %v4159 = vmax.f32 %v4156, 0.0
    %v4160 = vld [vmem:[%s20] sm:$0x1]
    %v4162 = vperm.slane %v4160, 0
    %v4164 = vmul.f32 %v4159, %v4162
    %v4165 = vsel %vm3207, %v4164, 0.0
    %4166 = vadd.xlane.f32.xlu0 %v4165
    %v4167 = vpop.xlane.xlu0 %4166
    %v4168 = vld [vmem:[#allocation2] sm:$0x1]
    %v4170 = vperm.slane %v4168, 0
    %v4172 = vadd.f32 %v4167, %v4170
    %v4173 = vxor.u32 %v4172, 2147483648
    %v4174 = vmul.f32 %v4173, 1.442695
    %v4175 = vpow.pop %v4174
    %v4176 = vadd.f32 %v4175, 1.0
    %v4177 = vrcp.pop %v4176
    %v4178 = vmul.f32 %v4176, %v4177
    %v4179 = vsub.f32 1.0, %v4178
    %v4180 = vmul.f32 %v4177, %v4179
    %v4181 = vadd.f32 %v4177, %v4180
    %vm4182 = vweird.f32 %v4176
    %vm4183 = vweird.f32 %v4177
    %vm4184 = vmor %vm4182, %vm4183
    %v4185 = vsel %vm4184, %v4177, %v4181
    %v4186 = vand.u32 2147483647, %v4176
    %vm4187 = vcmp.eq.f32.partialorder %v4186, 8.507059e+37
    %v4188 = vand.u32 %v4176, 2147483648
    %v4189 = vor.u32 1.1754944e-38, %v4188
    %v4190 = vsel %vm4187, %v4189, %v4185
    %v4191 = vmul.f32 1.0, %v4190
    %vm4192 = vcmask 7168
    %4193 = vst.msk [vmem:[%s22] sm:$0xff] %vm4192, %v4191
    // Predicated region
    $region102: #{inference_attack_forward.1} parent=1 // pred_check
      _
    $region103: #{inference_attack_forward.1} parent=1 // pred_check_branch
      %4195 = sbr.rel (0) target = $region105
    $region104: #{inference_attack_forward.1} parent=1 // pred_region
      _
    $region105: #{inference_attack_forward.1} parent=1 // pred_fallthru
      _
    // Predicated region
    $region106: #{inference_attack_forward.1} parent=1 // pred_check
      _
    $region107: #{inference_attack_forward.1} parent=1 // pred_check_branch
      %4197 = sbr.rel (0) target = $region109
    $region108: #{inference_attack_forward.1} parent=1 // pred_region
      _
    $region109: #{inference_attack_forward.1} parent=1 // pred_fallthru
      _
    %4198 = vsyncpa [#allocation4], 1
    %4199 = vsyncpa [#allocation6], 1

</llo_original>
